<compile_context>
chip_gen: v5e
topology: v5e:2x2
jax: 0.10.0
libtpu: 0.0.40
codegen_flags: <defaults>
</compile_context>

<pallas_src>
import functools

import jax
import jax.numpy as jnp
from jax.experimental import pallas as pl
from jax.experimental.pallas import tpu as pltpu


# ---------------------------------------------------------------------------
# Pallas kernel.
# ---------------------------------------------------------------------------
def _vqa_kernel(patches_ref, bow_ref,
                wconv_ref, bconv_ref, wproj_ref, bproj_ref,
                wq_ref, bq_ref, wfc_img_ref, wfc_word_ref, bfc_ref,
                out_ref, acc_ref, *, inv_hw):
    s = pl.program_id(1)                       # spatial (reduction) axis

    @pl.when(s == 0)
    def _():
        acc_ref[...] = jnp.zeros_like(acc_ref)

    # ---- image branch: conv tile (im2col matmul, bf16 on MXU) + bias + ReLU
    tb, tile_hw, kdim = patches_ref.shape
    p = patches_ref[...].reshape(tb * tile_hw, kdim)               # bf16, K = 9*C
    conv = jnp.dot(p, wconv_ref[...],
                   preferred_element_type=jnp.float32)             # (tb*thw, C1p) f32
    conv = jnp.maximum(conv + bconv_ref[...], 0.0)                 # fused bias + ReLU

    # single fused sublane reduction per tile -> (tb, C1p) partial GAP sums
    acc_ref[...] += conv.reshape(tb, tile_hw, -1).sum(axis=1)

    # ---- finalize: f32 heads + fused fc, once per batch block --------------
    @pl.when(s == pl.num_programs(1) - 1)
    def _():
        gap = acc_ref[...] * inv_hw                                # (tb, C1p) f32
        img_feat = jnp.dot(gap, wproj_ref[...],
                           preferred_element_type=jnp.float32) + bproj_ref[...]

        # question branch was pre-reduced in the wrapper: bow = clip(sum, 0, 1)
        word_feat = jnp.dot(bow_ref[...], wq_ref[...],
                            preferred_element_type=jnp.float32) + bq_ref[...]

        # fc over concat([img, word]) == split-weight matmuls summed (exact)
        out = (jnp.dot(img_feat, wfc_img_ref[...],
                       preferred_element_type=jnp.float32)
               + jnp.dot(word_feat, wfc_word_ref[...],
                         preferred_element_type=jnp.float32)
               + bfc_ref[...])
        out_ref[...] = out.astype(out_ref.dtype)


# ---------------------------------------------------------------------------
# Wrapper (glue: layout, im2col, padding, tiling, parameter plumbing).
# ---------------------------------------------------------------------------
def _pad_axis(x, axis, multiple):
    pad = (-x.shape[axis]) % multiple
    if pad == 0:
        return x
    widths = [(0, 0)] * x.ndim
    widths[axis] = (0, pad)
    return jnp.pad(x, widths)


def _size_bytes(a):
    return a.size * a.dtype.itemsize


def simple_baseline_net(image_nchw, question_encoding, params,
                        *, use_bf16=True, tile_hw=None):
    B, C, H, W = image_nchw.shape
    _, S, Q = question_encoding.shape
    C1 = params["wconv"].shape[-1]
    A = params["bfc"].shape[-1]
    HW = H * W

    f32 = jnp.float32
    mm_dtype = jnp.bfloat16 if use_bf16 else f32

    # NCHW -> NHWC, cast to matmul dtype BEFORE im2col (halves the 9x blow-up),
    # then build 3x3 "same" patches. K stays at 9*C (NO lane padding): Mosaic
    # pads the matmul K internally at no HBM cost.
    x = jnp.transpose(image_nchw, (0, 2, 3, 1)).astype(mm_dtype)
    xp = jnp.pad(x, ((0, 0), (1, 1), (1, 1), (0, 0)))
    cols = [xp[:, kh:kh + H, kw:kw + W, :] for kh in range(3) for kw in range(3)]
    patches = jnp.stack(cols, axis=3).reshape(B, HW, 9 * C)
    K = 9 * C

    # Conv weight in matmul dtype; only its OUTPUT channels are padded to 128
    # (lane-dense conv output / accumulator). Padded channels are exact zeros.
    wconv = params["wconv"].reshape(K, C1)
    wconv = _pad_axis(wconv, 1, 128).astype(mm_dtype)              # (K, C1p)
    C1p = wconv.shape[1]
    bconv = _pad_axis(params["bconv"].reshape(1, C1), 1, 128).astype(f32)

    # Heads stay f32 (small matmuls; keeps numerics close to the reference).
    wproj = _pad_axis(params["wproj"], 0, 128).astype(f32)         # (C1p, 1024)
    bproj = params["bproj"].reshape(1, 1024).astype(f32)

    # Question branch pre-reduced in the wrapper: (B, S, Q) -> (B, Q).
    bow = jnp.clip(jnp.sum(question_encoding.astype(f32), axis=1), 0.0, 1.0)
    wq = params["wq"].astype(f32)                                  # (Q, 1024)
    bq = params["bq"].reshape(1, 1024).astype(f32)

    # fc over concat == split-weight matmuls; answer dim padded to 128 so the
    # output store is lane-dense (zero-padded cols sliced off afterwards).
    wfc_img = _pad_axis(params["wfc"][:1024], 1, 128).astype(f32)  # (1024, Ap)
    wfc_word = _pad_axis(params["wfc"][1024:], 1, 128).astype(f32)
    Ap = wfc_img.shape[1]
    bfc = _pad_axis(params["bfc"].reshape(1, A), 1, 128).astype(f32)

    # ------------------------------------------------------------------ VMEM
    vmem_cap = 64 * 1024 * 1024
    try:
        vmem_cap = int(pltpu.get_tpu_info().vmem_capacity_bytes)
    except Exception:
        pass
    # Leave headroom for Mosaic's internal scratch: 48 MiB on 64 MiB chips
    # (v7x), capped at 112 MiB on 128 MiB chips (v5e/v6e).
    vmem_limit = int(min(max(vmem_cap - 16 * 1024 * 1024, 32 * 1024 * 1024),
                         112 * 1024 * 1024))

    # Batch blocking: sublane-aligned batch blocks when possible so the
    # parallel grid axis can be sharded across TensorCores (v7x megacore).
    tb = 8 if (B % 8 == 0) else B
    nb = B // tb

    weight_bytes = sum(_size_bytes(a) for a in
                       (wconv, bconv, wproj, bproj, wq, bq,
                        wfc_img, wfc_word, bfc))

    def _vmem_bytes(t_hw, const_bufs):
        streamed = 2 * tb * t_hw * K * patches.dtype.itemsize      # double-buffered
        small = 2 * (tb * bow.shape[1] * 4 + tb * Ap * 4) + tb * C1p * 4
        return const_bufs * weight_bytes + streamed + small

    if tile_hw is None:
        budget = int(0.6 * vmem_limit)
        cands = [d for d in range(8, HW + 1, 8) if HW % d == 0]
        if cands:
            fitting = [d for d in cands if _vmem_bytes(d, 2) <= budget]
            tile_hw = max(fitting) if fitting else min(cands)
        else:
            # HW has no multiple-of-8 divisor: full-extent block is the only
            # legal choice for the second-to-last block dim.
            tile_hw = HW
    ns = HW // tile_hw

    kernel = functools.partial(_vqa_kernel, inv_hw=1.0 / float(HW))

    def _call(single_buffer_consts):
        def const_spec(shape):
            if single_buffer_consts:
                return pl.BlockSpec(shape, lambda b, s: (0, 0),
                                    pipeline_mode=pl.Buffered(buffer_count=1))
            return pl.BlockSpec(shape, lambda b, s: (0, 0))

        grid_spec = pltpu.PrefetchScalarGridSpec(
            num_scalar_prefetch=0,
            grid=(nb, ns),
            in_specs=[
                pl.BlockSpec((tb, tile_hw, K), lambda b, s: (b, s, 0)),  # streamed
                pl.BlockSpec((tb, bow.shape[1]), lambda b, s: (b, 0)),   # bow
                const_spec((K, C1p)),            # wconv
                const_spec((1, C1p)),            # bconv
                const_spec((C1p, 1024)),         # wproj
                const_spec((1, 1024)),           # bproj
                const_spec((wq.shape[0], 1024)),  # wq
                const_spec((1, 1024)),           # bq
                const_spec((1024, Ap)),          # wfc_img
                const_spec((1024, Ap)),          # wfc_word
                const_spec((1, Ap)),             # bfc
            ],
            out_specs=pl.BlockSpec((tb, Ap), lambda b, s: (b, 0)),       # lane-dense
            scratch_shapes=[pltpu.VMEM((tb, C1p), jnp.float32)],         # GAP acc
        )
        return pl.pallas_call(
            kernel,
            out_shape=jax.ShapeDtypeStruct((B, Ap), jnp.float32),
            grid_spec=grid_spec,
            compiler_params=pltpu.CompilerParams(
                dimension_semantics=("parallel", "arbitrary"),
                vmem_limit_bytes=vmem_limit,
            ),
        )(patches, bow, wconv, bconv, wproj, bproj, wq, bq,
          wfc_img, wfc_word, bfc)

    try:
        out_padded = _call(True)        # single-buffered constant weights
    except Exception:
        out_padded = _call(False)       # fallback: default double buffering

    return out_padded[:, :A]


# ---------------------------------------------------------------------------
# Pure-JAX f32 reference (mirrors the PyTorch forward semantics).
# ---------------------------------------------------------------------------
def reference_forward(image_nchw, question_encoding, params):
    B, C, H, W = image_nchw.shape
    C1 = params["wconv"].shape[-1]
    x = jnp.transpose(image_nchw, (0, 2, 3, 1)).astype(jnp.float32)
    xp = jnp.pad(x, ((0, 0), (1, 1), (1, 1), (0, 0)))
    acc = jnp.zeros((B, H, W, C1), jnp.float32)
    for kh in range(3):
        for kw in range(3):
            acc = acc + jnp.einsum("bhwc,co->bhwo",
                                   xp[:, kh:kh + H, kw:kw + W, :],
                                   params["wconv"][kh, kw])
    conv = jnp.maximum(acc + params["bconv"], 0.0)
    gap = conv.mean(axis=(1, 2))                                  # (B, C1)
    img_feat = gap @ params["wproj"] + params["bproj"]            # (B, 1024)
    bow = jnp.clip(jnp.sum(question_encoding.astype(jnp.float32), axis=1), 0.0, 1.0)
    word_feat = bow @ params["wq"] + params["bq"]                 # (B, 1024)
    new_feat = jnp.concatenate([img_feat, word_feat], axis=1)     # (B, 2048)
    return new_feat @ params["wfc"] + params["bfc"]               # (B, A)


# ---------------------------------------------------------------------------
# Deterministic parameter init + example run.
# ---------------------------------------------------------------------------
def init_params(key, c_in, c1, question_encoding_len, answer_encoding_len):
    ks = jax.random.split(key, 8)
    f32 = jnp.float32
    return {
        # backbone stand-in
        "wconv": (0.1 * jax.random.normal(ks[0], (3, 3, c_in, c1))).astype(f32),
        "bconv": (0.01 * jax.random.normal(ks[1], (c1,))).astype(f32),
        "wproj": (0.1 * jax.random.normal(ks[2], (c1, 1024))).astype(f32),
        "bproj": (0.01 * jax.random.normal(ks[3], (1024,))).astype(f32),
        # word_embedding: Linear(question_encoding_len, 1024)
        "wq": (0.05 * jax.random.normal(ks[4], (question_encoding_len, 1024))).astype(f32),
        "bq": (0.01 * jax.random.normal(ks[5], (1024,))).astype(f32),
        # fc: Linear(2048, answer_encoding_len)
        "wfc": (0.02 * jax.random.normal(ks[6], (2048, answer_encoding_len))).astype(f32),
        "bfc": (0.01 * jax.random.normal(ks[7], (answer_encoding_len,))).astype(f32),
    }


if __name__ == "__main__":
    B, C, H, W = 2, 3, 16, 16        # image (NCHW, like the PyTorch module)
    S, Q = 8, 32                     # question: (batch, seq, question_encoding_len)
    A = 16                           # answer_encoding_len
    C1 = 8                           # stand-in backbone channels

    key = jax.random.PRNGKey(0)
    k_img, k_q, k_p = jax.random.split(key, 3)
    image = jax.random.normal(k_img, (B, C, H, W), dtype=jnp.float32)
    question = jax.random.uniform(k_q, (B, S, Q), dtype=jnp.float32)
    params = init_params(k_p, C, C1, Q, A)

    out = simple_baseline_net(image, question, params)   # bf16 conv, f32 heads/accum
    out = jax.block_until_ready(out)

    ref = reference_forward(image, question, params)
    assert out.shape == (B, A) and out.dtype == jnp.float32
    assert jnp.allclose(out, ref, atol=2e-2, rtol=2e-2), "mismatch vs reference"

    print("KERNEL_OK")
</pallas_src>

<mosaic_0001>
module attributes {stable_mosaic.version = 11 : i64} {
  func.func @_vqa_kernel(%arg0: i32, %arg1: i32, %arg2: memref<2x256x27xbf16, #tpu.memory_space<vmem>>, %arg3: memref<2x32xf32, #tpu.memory_space<vmem>>, %arg4: memref<27x128xbf16, #tpu.memory_space<vmem>>, %arg5: memref<1x128xf32, #tpu.memory_space<vmem>>, %arg6: memref<128x1024xf32, #tpu.memory_space<vmem>>, %arg7: memref<1x1024xf32, #tpu.memory_space<vmem>>, %arg8: memref<32x1024xf32, #tpu.memory_space<vmem>>, %arg9: memref<1x1024xf32, #tpu.memory_space<vmem>>, %arg10: memref<1024x128xf32, #tpu.memory_space<vmem>>, %arg11: memref<1024x128xf32, #tpu.memory_space<vmem>>, %arg12: memref<1x128xf32, #tpu.memory_space<vmem>>, %arg13: memref<2x128xf32, #tpu.memory_space<vmem>>, %arg14: memref<2x128xf32, #tpu.memory_space<vmem>>) attributes {dimension_semantics = [#tpu.dimension_semantics<parallel>, #tpu.dimension_semantics<arbitrary>], iteration_bounds = array<i64: 1, 1>, scalar_prefetch = 0 : i64, scratch_operands = 1 : i64, tpu.core_type = #tpu.core_type<tc>, window_params = [{transform_indices = @transform_0, window_bounds = array<i64: 2, 256, 27>}, {transform_indices = @transform_1, window_bounds = array<i64: 2, 32>}, {pipeline_mode = #tpu.pipeline_mode<synchronous>, transform_indices = @transform_2, window_bounds = array<i64: 27, 128>}, {pipeline_mode = #tpu.pipeline_mode<synchronous>, transform_indices = @transform_3, window_bounds = array<i64: 1, 128>}, {pipeline_mode = #tpu.pipeline_mode<synchronous>, transform_indices = @transform_4, window_bounds = array<i64: 128, 1024>}, {pipeline_mode = #tpu.pipeline_mode<synchronous>, transform_indices = @transform_5, window_bounds = array<i64: 1, 1024>}, {pipeline_mode = #tpu.pipeline_mode<synchronous>, transform_indices = @transform_6, window_bounds = array<i64: 32, 1024>}, {pipeline_mode = #tpu.pipeline_mode<synchronous>, transform_indices = @transform_7, window_bounds = array<i64: 1, 1024>}, {pipeline_mode = #tpu.pipeline_mode<synchronous>, transform_indices = @transform_8, window_bounds = array<i64: 1024, 128>}, {pipeline_mode = #tpu.pipeline_mode<synchronous>, transform_indices = @transform_9, window_bounds = array<i64: 1024, 128>}, {pipeline_mode = #tpu.pipeline_mode<synchronous>, transform_indices = @transform_10, window_bounds = array<i64: 1, 128>}, {transform_indices = @transform_11, window_bounds = array<i64: 2, 128>}]} {
    %c0_i32 = arith.constant 0 : i32
    %0 = arith.cmpi eq, %arg1, %c0_i32 : i32
    %1 = arith.extui %0 : i1 to i32
    %c0_i32_0 = arith.constant 0 : i32
    %2 = arith.cmpi ne, %1, %c0_i32_0 : i32
    scf.if %2 {
      %cst_15 = arith.constant 0.000000e+00 : f32
      %20 = vector.broadcast %cst_15 : f32 to vector<2x128xf32>
      %c0_16 = arith.constant 0 : index
      %c0_17 = arith.constant 0 : index
      %21 = vector.load %arg14[%c0_16, %c0_17] : memref<2x128xf32, #tpu.memory_space<vmem>>, vector<2x128xf32>
      tpu.vector_store %arg14[%c0_16, %c0_17], %20 {strides = array<i32>} : memref<2x128xf32, #tpu.memory_space<vmem>>, vector<2x128xf32>,
    } else {
    }
    %c0 = arith.constant 0 : index
    %c0_1 = arith.constant 0 : index
    %c0_2 = arith.constant 0 : index
    %3 = vector.load %arg2[%c0, %c0_1, %c0_2] : memref<2x256x27xbf16, #tpu.memory_space<vmem>>, vector<2x256x27xbf16>
    %4 = vector.shape_cast %3 : vector<2x256x27xbf16> to vector<512x27xbf16>
    %c0_3 = arith.constant 0 : index
    %c0_4 = arith.constant 0 : index
    %5 = vector.load %arg4[%c0_3, %c0_4] : memref<27x128xbf16, #tpu.memory_space<vmem>>, vector<27x128xbf16>
    %cst = arith.constant dense<0.000000e+00> : vector<512x128xf32>
    %6 = tpu.matmul %4, %5, %cst {dimension_numbers = #tpu.dot_dimension_numbers<[1], [0], [0], [1], [0, 0, 1, 1], [], []>} : vector<512x27xbf16>, vector<27x128xbf16>, vector<512x128xf32> -> vector<512x128xf32>
    %c0_5 = arith.constant 0 : index
    %c0_6 = arith.constant 0 : index
    %7 = vector.load %arg5[%c0_5, %c0_6] : memref<1x128xf32, #tpu.memory_space<vmem>>, vector<1x128xf32>
    %8 = vector.broadcast %7 : vector<1x128xf32> to vector<512x128xf32>
    %9 = arith.addf %6, %8 : vector<512x128xf32>
    %cst_7 = arith.constant 0.000000e+00 : f32
    %10 = vector.broadcast %cst_7 : f32 to vector<512x128xf32>
    %11 = arith.maximumf %9, %10 : vector<512x128xf32>
    %c0_8 = arith.constant 0 : index
    %c0_9 = arith.constant 0 : index
    %12 = vector.load %arg14[%c0_8, %c0_9] : memref<2x128xf32, #tpu.memory_space<vmem>>, vector<2x128xf32>
    %13 = vector.shape_cast %11 : vector<512x128xf32> to vector<2x256x128xf32>
    %cst_10 = arith.constant dense<0.000000e+00> : vector<2x128xf32>
    %14 = vector.multi_reduction <add>, %13, %cst_10 [1] : vector<2x256x128xf32> to vector<2x128xf32>
    %15 = arith.addf %12, %14 : vector<2x128xf32>
    %c0_11 = arith.constant 0 : index
    %c0_12 = arith.constant 0 : index
    %16 = vector.load %arg14[%c0_11, %c0_12] : memref<2x128xf32, #tpu.memory_space<vmem>>, vector<2x128xf32>
    tpu.vector_store %arg14[%c0_11, %c0_12], %15 {strides = array<i32>} : memref<2x128xf32, #tpu.memory_space<vmem>>, vector<2x128xf32>,
    %c0_i32_13 = arith.constant 0 : i32
    %17 = arith.cmpi eq, %arg1, %c0_i32_13 : i32
    %18 = arith.extui %17 : i1 to i32
    %c0_i32_14 = arith.constant 0 : i32
    %19 = arith.cmpi ne, %18, %c0_i32_14 : i32
    scf.if %19 {
      %c0_15 = arith.constant 0 : index
      %c0_16 = arith.constant 0 : index
      %20 = vector.load %arg14[%c0_15, %c0_16] : memref<2x128xf32, #tpu.memory_space<vmem>>, vector<2x128xf32>
      %cst_17 = arith.constant 3.906250e-03 : f32
      %21 = vector.broadcast %cst_17 : f32 to vector<2x128xf32>
      %22 = arith.mulf %20, %21 : vector<2x128xf32>
      %c0_18 = arith.constant 0 : index
      %c0_19 = arith.constant 0 : index
      %23 = vector.load %arg6[%c0_18, %c0_19] : memref<128x1024xf32, #tpu.memory_space<vmem>>, vector<128x1024xf32>
      %cst_20 = arith.constant dense<0.000000e+00> : vector<2x1024xf32>
      %24 = tpu.matmul %22, %23, %cst_20 {dimension_numbers = #tpu.dot_dimension_numbers<[1], [0], [0], [1], [0, 0, 1, 1], [], []>} : vector<2x128xf32>, vector<128x1024xf32>, vector<2x1024xf32> -> vector<2x1024xf32>
      %c0_21 = arith.constant 0 : index
      %c0_22 = arith.constant 0 : index
      %25 = vector.load %arg7[%c0_21, %c0_22] : memref<1x1024xf32, #tpu.memory_space<vmem>>, vector<1x1024xf32>
      %26 = vector.broadcast %25 : vector<1x1024xf32> to vector<2x1024xf32>
      %27 = arith.addf %24, %26 : vector<2x1024xf32>
      %c0_23 = arith.constant 0 : index
      %c0_24 = arith.constant 0 : index
      %28 = vector.load %arg3[%c0_23, %c0_24] : memref<2x32xf32, #tpu.memory_space<vmem>>, vector<2x32xf32>
      %c0_25 = arith.constant 0 : index
      %c0_26 = arith.constant 0 : index
      %29 = vector.load %arg8[%c0_25, %c0_26] : memref<32x1024xf32, #tpu.memory_space<vmem>>, vector<32x1024xf32>
      %cst_27 = arith.constant dense<0.000000e+00> : vector<2x1024xf32>
      %30 = tpu.matmul %28, %29, %cst_27 {dimension_numbers = #tpu.dot_dimension_numbers<[1], [0], [0], [1], [0, 0, 1, 1], [], []>} : vector<2x32xf32>, vector<32x1024xf32>, vector<2x1024xf32> -> vector<2x1024xf32>
      %c0_28 = arith.constant 0 : index
      %c0_29 = arith.constant 0 : index
      %31 = vector.load %arg9[%c0_28, %c0_29] : memref<1x1024xf32, #tpu.memory_space<vmem>>, vector<1x1024xf32>
      %32 = vector.broadcast %31 : vector<1x1024xf32> to vector<2x1024xf32>
      %33 = arith.addf %30, %32 : vector<2x1024xf32>
      %c0_30 = arith.constant 0 : index
      %c0_31 = arith.constant 0 : index
      %34 = vector.load %arg10[%c0_30, %c0_31] : memref<1024x128xf32, #tpu.memory_space<vmem>>, vector<1024x128xf32>
      %cst_32 = arith.constant dense<0.000000e+00> : vector<2x128xf32>
      %35 = tpu.matmul %27, %34, %cst_32 {dimension_numbers = #tpu.dot_dimension_numbers<[1], [0], [0], [1], [0, 0, 1, 1], [], []>} : vector<2x1024xf32>, vector<1024x128xf32>, vector<2x128xf32> -> vector<2x128xf32>
      %c0_33 = arith.constant 0 : index
      %c0_34 = arith.constant 0 : index
      %36 = vector.load %arg11[%c0_33, %c0_34] : memref<1024x128xf32, #tpu.memory_space<vmem>>, vector<1024x128xf32>
      %cst_35 = arith.constant dense<0.000000e+00> : vector<2x128xf32>
      %37 = tpu.matmul %33, %36, %cst_35 {dimension_numbers = #tpu.dot_dimension_numbers<[1], [0], [0], [1], [0, 0, 1, 1], [], []>} : vector<2x1024xf32>, vector<1024x128xf32>, vector<2x128xf32> -> vector<2x128xf32>
      %38 = arith.addf %35, %37 : vector<2x128xf32>
      %c0_36 = arith.constant 0 : index
      %c0_37 = arith.constant 0 : index
      %39 = vector.load %arg12[%c0_36, %c0_37] : memref<1x128xf32, #tpu.memory_space<vmem>>, vector<1x128xf32>
      %40 = vector.broadcast %39 : vector<1x128xf32> to vector<2x128xf32>
      %41 = arith.addf %38, %40 : vector<2x128xf32>
      %c0_38 = arith.constant 0 : index
      %c0_39 = arith.constant 0 : index
      %42 = vector.load %arg13[%c0_38, %c0_39] : memref<2x128xf32, #tpu.memory_space<vmem>>, vector<2x128xf32>
      tpu.vector_store %arg13[%c0_38, %c0_39], %41 {strides = array<i32>} : memref<2x128xf32, #tpu.memory_space<vmem>>, vector<2x128xf32>,
    } else {
    }
    return
  }
  func.func @transform_0(%arg0: i32, %arg1: i32) -> (i32, i32, i32) {
    %c0_i32 = arith.constant 0 : i32
    %c0_i32_0 = arith.constant 0 : i32
    return %arg0, %arg1, %c0_i32 : i32, i32, i32
  }
  func.func @transform_1(%arg0: i32, %arg1: i32) -> (i32, i32) {
    %c0_i32 = arith.constant 0 : i32
    %c0_i32_0 = arith.constant 0 : i32
    return %arg0, %c0_i32 : i32, i32
  }
  func.func @transform_2(%arg0: i32, %arg1: i32) -> (i32, i32) {
    %c0_i32 = arith.constant 0 : i32
    %c0_i32_0 = arith.constant 0 : i32
    %c0_i32_1 = arith.constant 0 : i32
    return %c0_i32, %c0_i32_0 : i32, i32
  }
  func.func @transform_3(%arg0: i32, %arg1: i32) -> (i32, i32) {
    %c0_i32 = arith.constant 0 : i32
    %c0_i32_0 = arith.constant 0 : i32
    %c0_i32_1 = arith.constant 0 : i32
    return %c0_i32, %c0_i32_0 : i32, i32
  }
  func.func @transform_4(%arg0: i32, %arg1: i32) -> (i32, i32) {
    %c0_i32 = arith.constant 0 : i32
    %c0_i32_0 = arith.constant 0 : i32
    %c0_i32_1 = arith.constant 0 : i32
    return %c0_i32, %c0_i32_0 : i32, i32
  }
  func.func @transform_5(%arg0: i32, %arg1: i32) -> (i32, i32) {
    %c0_i32 = arith.constant 0 : i32
    %c0_i32_0 = arith.constant 0 : i32
    %c0_i32_1 = arith.constant 0 : i32
    return %c0_i32, %c0_i32_0 : i32, i32
  }
  func.func @transform_6(%arg0: i32, %arg1: i32) -> (i32, i32) {
    %c0_i32 = arith.constant 0 : i32
    %c0_i32_0 = arith.constant 0 : i32
    %c0_i32_1 = arith.constant 0 : i32
    return %c0_i32, %c0_i32_0 : i32, i32
  }
  func.func @transform_7(%arg0: i32, %arg1: i32) -> (i32, i32) {
    %c0_i32 = arith.constant 0 : i32
    %c0_i32_0 = arith.constant 0 : i32
    %c0_i32_1 = arith.constant 0 : i32
    return %c0_i32, %c0_i32_0 : i32, i32
  }
  func.func @transform_8(%arg0: i32, %arg1: i32) -> (i32, i32) {
    %c0_i32 = arith.constant 0 : i32
    %c0_i32_0 = arith.constant 0 : i32
    %c0_i32_1 = arith.constant 0 : i32
    return %c0_i32, %c0_i32_0 : i32, i32
  }
  func.func @transform_9(%arg0: i32, %arg1: i32) -> (i32, i32) {
    %c0_i32 = arith.constant 0 : i32
    %c0_i32_0 = arith.constant 0 : i32
    %c0_i32_1 = arith.constant 0 : i32
    return %c0_i32, %c0_i32_0 : i32, i32
  }
  func.func @transform_10(%arg0: i32, %arg1: i32) -> (i32, i32) {
    %c0_i32 = arith.constant 0 : i32
    %c0_i32_0 = arith.constant 0 : i32
    %c0_i32_1 = arith.constant 0 : i32
    return %c0_i32, %c0_i32_0 : i32, i32
  }
  func.func @transform_11(%arg0: i32, %arg1: i32) -> (i32, i32) {
    %c0_i32 = arith.constant 0 : i32
    %c0_i32_0 = arith.constant 0 : i32
    return %arg0, %c0_i32 : i32, i32
  }
}

module attributes {stable_mosaic.version = 11 : i64} {
  func.func @_vqa_kernel(%arg0: i32, %arg1: i32, %arg2: memref<2x256x27xbf16, #tpu.memory_space<vmem>>, %arg3: memref<2x32xf32, #tpu.memory_space<vmem>>, %arg4: memref<27x128xbf16, #tpu.memory_space<vmem>>, %arg5: memref<1x128xf32, #tpu.memory_space<vmem>>, %arg6: memref<128x1024xf32, #tpu.memory_space<vmem>>, %arg7: memref<1x1024xf32, #tpu.memory_space<vmem>>, %arg8: memref<32x1024xf32, #tpu.memory_space<vmem>>, %arg9: memref<1x1024xf32, #tpu.memory_space<vmem>>, %arg10: memref<1024x128xf32, #tpu.memory_space<vmem>>, %arg11: memref<1024x128xf32, #tpu.memory_space<vmem>>, %arg12: memref<1x128xf32, #tpu.memory_space<vmem>>, %arg13: memref<2x128xf32, #tpu.memory_space<vmem>>, %arg14: memref<2x128xf32, #tpu.memory_space<vmem>>) attributes {dimension_semantics = [#tpu.dimension_semantics<parallel>, #tpu.dimension_semantics<arbitrary>], iteration_bounds = array<i64: 1, 1>, scalar_prefetch = 0 : i64, scratch_operands = 1 : i64, tpu.core_type = #tpu.core_type<tc>, window_params = [{transform_indices = @transform_0, window_bounds = array<i64: 2, 256, 27>}, {transform_indices = @transform_1, window_bounds = array<i64: 2, 32>}, {pipeline_mode = #tpu.pipeline_mode<synchronous>, transform_indices = @transform_2, window_bounds = array<i64: 27, 128>}, {pipeline_mode = #tpu.pipeline_mode<synchronous>, transform_indices = @transform_3, window_bounds = array<i64: 1, 128>}, {pipeline_mode = #tpu.pipeline_mode<synchronous>, transform_indices = @transform_4, window_bounds = array<i64: 128, 1024>}, {pipeline_mode = #tpu.pipeline_mode<synchronous>, transform_indices = @transform_5, window_bounds = array<i64: 1, 1024>}, {pipeline_mode = #tpu.pipeline_mode<synchronous>, transform_indices = @transform_6, window_bounds = array<i64: 32, 1024>}, {pipeline_mode = #tpu.pipeline_mode<synchronous>, transform_indices = @transform_7, window_bounds = array<i64: 1, 1024>}, {pipeline_mode = #tpu.pipeline_mode<synchronous>, transform_indices = @transform_8, window_bounds = array<i64: 1024, 128>}, {pipeline_mode = #tpu.pipeline_mode<synchronous>, transform_indices = @transform_9, window_bounds = array<i64: 1024, 128>}, {pipeline_mode = #tpu.pipeline_mode<synchronous>, transform_indices = @transform_10, window_bounds = array<i64: 1, 128>}, {transform_indices = @transform_11, window_bounds = array<i64: 2, 128>}]} {
    %c0_i32 = arith.constant 0 : i32
    %0 = arith.cmpi eq, %arg1, %c0_i32 : i32
    %1 = arith.extui %0 : i1 to i32
    %c0_i32_0 = arith.constant 0 : i32
    %2 = arith.cmpi ne, %1, %c0_i32_0 : i32
    scf.if %2 {
      %cst_15 = arith.constant 0.000000e+00 : f32
      %20 = vector.broadcast %cst_15 : f32 to vector<2x128xf32>
      %c0_16 = arith.constant 0 : index
      %c0_17 = arith.constant 0 : index
      %21 = vector.load %arg14[%c0_16, %c0_17] : memref<2x128xf32, #tpu.memory_space<vmem>>, vector<2x128xf32>
      tpu.vector_store %arg14[%c0_16, %c0_17], %20 {strides = array<i32>} : memref<2x128xf32, #tpu.memory_space<vmem>>, vector<2x128xf32>,
    } else {
    }
    %c0 = arith.constant 0 : index
    %c0_1 = arith.constant 0 : index
    %c0_2 = arith.constant 0 : index
    %3 = vector.load %arg2[%c0, %c0_1, %c0_2] : memref<2x256x27xbf16, #tpu.memory_space<vmem>>, vector<2x256x27xbf16>
    %4 = vector.shape_cast %3 : vector<2x256x27xbf16> to vector<512x27xbf16>
    %c0_3 = arith.constant 0 : index
    %c0_4 = arith.constant 0 : index
    %5 = vector.load %arg4[%c0_3, %c0_4] : memref<27x128xbf16, #tpu.memory_space<vmem>>, vector<27x128xbf16>
    %cst = arith.constant dense<0.000000e+00> : vector<512x128xf32>
    %6 = tpu.matmul %4, %5, %cst {dimension_numbers = #tpu.dot_dimension_numbers<[1], [0], [0], [1], [0, 0, 1, 1], [], []>} : vector<512x27xbf16>, vector<27x128xbf16>, vector<512x128xf32> -> vector<512x128xf32>
    %c0_5 = arith.constant 0 : index
    %c0_6 = arith.constant 0 : index
    %7 = vector.load %arg5[%c0_5, %c0_6] : memref<1x128xf32, #tpu.memory_space<vmem>>, vector<1x128xf32>
    %8 = vector.broadcast %7 : vector<1x128xf32> to vector<512x128xf32>
    %9 = arith.addf %6, %8 : vector<512x128xf32>
    %cst_7 = arith.constant 0.000000e+00 : f32
    %10 = vector.broadcast %cst_7 : f32 to vector<512x128xf32>
    %11 = arith.maximumf %9, %10 : vector<512x128xf32>
    %c0_8 = arith.constant 0 : index
    %c0_9 = arith.constant 0 : index
    %12 = vector.load %arg14[%c0_8, %c0_9] : memref<2x128xf32, #tpu.memory_space<vmem>>, vector<2x128xf32>
    %13 = vector.shape_cast %11 : vector<512x128xf32> to vector<2x256x128xf32>
    %cst_10 = arith.constant dense<0.000000e+00> : vector<2x128xf32>
    %14 = vector.multi_reduction <add>, %13, %cst_10 [1] : vector<2x256x128xf32> to vector<2x128xf32>
    %15 = arith.addf %12, %14 : vector<2x128xf32>
    %c0_11 = arith.constant 0 : index
    %c0_12 = arith.constant 0 : index
    %16 = vector.load %arg14[%c0_11, %c0_12] : memref<2x128xf32, #tpu.memory_space<vmem>>, vector<2x128xf32>
    tpu.vector_store %arg14[%c0_11, %c0_12], %15 {strides = array<i32>} : memref<2x128xf32, #tpu.memory_space<vmem>>, vector<2x128xf32>,
    %c0_i32_13 = arith.constant 0 : i32
    %17 = arith.cmpi eq, %arg1, %c0_i32_13 : i32
    %18 = arith.extui %17 : i1 to i32
    %c0_i32_14 = arith.constant 0 : i32
    %19 = arith.cmpi ne, %18, %c0_i32_14 : i32
    scf.if %19 {
      %c0_15 = arith.constant 0 : index
      %c0_16 = arith.constant 0 : index
      %20 = vector.load %arg14[%c0_15, %c0_16] : memref<2x128xf32, #tpu.memory_space<vmem>>, vector<2x128xf32>
      %cst_17 = arith.constant 3.906250e-03 : f32
      %21 = vector.broadcast %cst_17 : f32 to vector<2x128xf32>
      %22 = arith.mulf %20, %21 : vector<2x128xf32>
      %c0_18 = arith.constant 0 : index
      %c0_19 = arith.constant 0 : index
      %23 = vector.load %arg6[%c0_18, %c0_19] : memref<128x1024xf32, #tpu.memory_space<vmem>>, vector<128x1024xf32>
      %cst_20 = arith.constant dense<0.000000e+00> : vector<2x1024xf32>
      %24 = tpu.matmul %22, %23, %cst_20 {dimension_numbers = #tpu.dot_dimension_numbers<[1], [0], [0], [1], [0, 0, 1, 1], [], []>} : vector<2x128xf32>, vector<128x1024xf32>, vector<2x1024xf32> -> vector<2x1024xf32>
      %c0_21 = arith.constant 0 : index
      %c0_22 = arith.constant 0 : index
      %25 = vector.load %arg7[%c0_21, %c0_22] : memref<1x1024xf32, #tpu.memory_space<vmem>>, vector<1x1024xf32>
      %26 = vector.broadcast %25 : vector<1x1024xf32> to vector<2x1024xf32>
      %27 = arith.addf %24, %26 : vector<2x1024xf32>
      %c0_23 = arith.constant 0 : index
      %c0_24 = arith.constant 0 : index
      %28 = vector.load %arg3[%c0_23, %c0_24] : memref<2x32xf32, #tpu.memory_space<vmem>>, vector<2x32xf32>
      %c0_25 = arith.constant 0 : index
      %c0_26 = arith.constant 0 : index
      %29 = vector.load %arg8[%c0_25, %c0_26] : memref<32x1024xf32, #tpu.memory_space<vmem>>, vector<32x1024xf32>
      %cst_27 = arith.constant dense<0.000000e+00> : vector<2x1024xf32>
      %30 = tpu.matmul %28, %29, %cst_27 {dimension_numbers = #tpu.dot_dimension_numbers<[1], [0], [0], [1], [0, 0, 1, 1], [], []>} : vector<2x32xf32>, vector<32x1024xf32>, vector<2x1024xf32> -> vector<2x1024xf32>
      %c0_28 = arith.constant 0 : index
      %c0_29 = arith.constant 0 : index
      %31 = vector.load %arg9[%c0_28, %c0_29] : memref<1x1024xf32, #tpu.memory_space<vmem>>, vector<1x1024xf32>
      %32 = vector.broadcast %31 : vector<1x1024xf32> to vector<2x1024xf32>
      %33 = arith.addf %30, %32 : vector<2x1024xf32>
      %c0_30 = arith.constant 0 : index
      %c0_31 = arith.constant 0 : index
      %34 = vector.load %arg10[%c0_30, %c0_31] : memref<1024x128xf32, #tpu.memory_space<vmem>>, vector<1024x128xf32>
      %cst_32 = arith.constant dense<0.000000e+00> : vector<2x128xf32>
      %35 = tpu.matmul %27, %34, %cst_32 {dimension_numbers = #tpu.dot_dimension_numbers<[1], [0], [0], [1], [0, 0, 1, 1], [], []>} : vector<2x1024xf32>, vector<1024x128xf32>, vector<2x128xf32> -> vector<2x128xf32>
      %c0_33 = arith.constant 0 : index
      %c0_34 = arith.constant 0 : index
      %36 = vector.load %arg11[%c0_33, %c0_34] : memref<1024x128xf32, #tpu.memory_space<vmem>>, vector<1024x128xf32>
      %cst_35 = arith.constant dense<0.000000e+00> : vector<2x128xf32>
      %37 = tpu.matmul %33, %36, %cst_35 {dimension_numbers = #tpu.dot_dimension_numbers<[1], [0], [0], [1], [0, 0, 1, 1], [], []>} : vector<2x1024xf32>, vector<1024x128xf32>, vector<2x128xf32> -> vector<2x128xf32>
      %38 = arith.addf %35, %37 : vector<2x128xf32>
      %c0_36 = arith.constant 0 : index
      %c0_37 = arith.constant 0 : index
      %39 = vector.load %arg12[%c0_36, %c0_37] : memref<1x128xf32, #tpu.memory_space<vmem>>, vector<1x128xf32>
      %40 = vector.broadcast %39 : vector<1x128xf32> to vector<2x128xf32>
      %41 = arith.addf %38, %40 : vector<2x128xf32>
      %c0_38 = arith.constant 0 : index
      %c0_39 = arith.constant 0 : index
      %42 = vector.load %arg13[%c0_38, %c0_39] : memref<2x128xf32, #tpu.memory_space<vmem>>, vector<2x128xf32>
      tpu.vector_store %arg13[%c0_38, %c0_39], %41 {strides = array<i32>} : memref<2x128xf32, #tpu.memory_space<vmem>>, vector<2x128xf32>,
    } else {
    }
    return
  }
  func.func @transform_0(%arg0: i32, %arg1: i32) -> (i32, i32, i32) {
    %c0_i32 = arith.constant 0 : i32
    %c0_i32_0 = arith.constant 0 : i32
    return %arg0, %arg1, %c0_i32 : i32, i32, i32
  }
  func.func @transform_1(%arg0: i32, %arg1: i32) -> (i32, i32) {
    %c0_i32 = arith.constant 0 : i32
    %c0_i32_0 = arith.constant 0 : i32
    return %arg0, %c0_i32 : i32, i32
  }
  func.func @transform_2(%arg0: i32, %arg1: i32) -> (i32, i32) {
    %c0_i32 = arith.constant 0 : i32
    %c0_i32_0 = arith.constant 0 : i32
    %c0_i32_1 = arith.constant 0 : i32
    return %c0_i32, %c0_i32_0 : i32, i32
  }
  func.func @transform_3(%arg0: i32, %arg1: i32) -> (i32, i32) {
    %c0_i32 = arith.constant 0 : i32
    %c0_i32_0 = arith.constant 0 : i32
    %c0_i32_1 = arith.constant 0 : i32
    return %c0_i32, %c0_i32_0 : i32, i32
  }
  func.func @transform_4(%arg0: i32, %arg1: i32) -> (i32, i32) {
    %c0_i32 = arith.constant 0 : i32
    %c0_i32_0 = arith.constant 0 : i32
    %c0_i32_1 = arith.constant 0 : i32
    return %c0_i32, %c0_i32_0 : i32, i32
  }
  func.func @transform_5(%arg0: i32, %arg1: i32) -> (i32, i32) {
    %c0_i32 = arith.constant 0 : i32
    %c0_i32_0 = arith.constant 0 : i32
    %c0_i32_1 = arith.constant 0 : i32
    return %c0_i32, %c0_i32_0 : i32, i32
  }
  func.func @transform_6(%arg0: i32, %arg1: i32) -> (i32, i32) {
    %c0_i32 = arith.constant 0 : i32
    %c0_i32_0 = arith.constant 0 : i32
    %c0_i32_1 = arith.constant 0 : i32
    return %c0_i32, %c0_i32_0 : i32, i32
  }
  func.func @transform_7(%arg0: i32, %arg1: i32) -> (i32, i32) {
    %c0_i32 = arith.constant 0 : i32
    %c0_i32_0 = arith.constant 0 : i32
    %c0_i32_1 = arith.constant 0 : i32
    return %c0_i32, %c0_i32_0 : i32, i32
  }
  func.func @transform_8(%arg0: i32, %arg1: i32) -> (i32, i32) {
    %c0_i32 = arith.constant 0 : i32
    %c0_i32_0 = arith.constant 0 : i32
    %c0_i32_1 = arith.constant 0 : i32
    return %c0_i32, %c0_i32_0 : i32, i32
  }
  func.func @transform_9(%arg0: i32, %arg1: i32) -> (i32, i32) {
    %c0_i32 = arith.constant 0 : i32
    %c0_i32_0 = arith.constant 0 : i32
    %c0_i32_1 = arith.constant 0 : i32
    return %c0_i32, %c0_i32_0 : i32, i32
  }
  func.func @transform_10(%arg0: i32, %arg1: i32) -> (i32, i32) {
    %c0_i32 = arith.constant 0 : i32
    %c0_i32_0 = arith.constant 0 : i32
    %c0_i32_1 = arith.constant 0 : i32
    return %c0_i32, %c0_i32_0 : i32, i32
  }
  func.func @transform_11(%arg0: i32, %arg1: i32) -> (i32, i32) {
    %c0_i32 = arith.constant 0 : i32
    %c0_i32_0 = arith.constant 0 : i32
    return %arg0, %c0_i32 : i32, i32
  }
}

</mosaic_0001>

<llo_original>
// kernel: tpu_custom_call.1
$region0: #{tpu_custom_call.1}
  #allocation0 [shape = 'u32[]', space=smem, size = 0x4, offset = 0x4, fixed_abs, tag = 'smem constant byte address 0x4 - core index']
  #allocation1 [shape = 'u32[72,128]{1,0:T(1,128)}', space=vmem, size = 0x9000, scoped, tag = 'internal scratch']
  #allocation2 [shape = 'f32[2,128]{1,0:T(2,128)}', space=vmem, size = 0x400, scoped, tag = 'scratch operand']
  %s0 = inlined_call_operand.vmem [shape: bf16[2,256,27], index: 0, kind: input, shape index: {}]
  %s1 = inlined_call_operand.vmem [shape: f32[2,32], index: 1, kind: input, shape index: {}]
  %s2 = inlined_call_operand.vmem [shape: bf16[27,128], index: 2, kind: input, shape index: {}]
  %s3 = inlined_call_operand.vmem [shape: f32[1,128], index: 3, kind: input, shape index: {}]
  %s4 = inlined_call_operand.hbm [shape: f32[128,1024], index: 4, kind: input, shape index: {}]
  %s5 = inlined_call_operand.vmem [shape: f32[1,1024], index: 5, kind: input, shape index: {}]
  %s6 = inlined_call_operand.vmem [shape: f32[32,1024], index: 6, kind: input, shape index: {}]
  %s7 = inlined_call_operand.vmem [shape: f32[1,1024], index: 7, kind: input, shape index: {}]
  %s8 = inlined_call_operand.hbm [shape: f32[1024,128], index: 8, kind: input, shape index: {}]
  %s9 = inlined_call_operand.hbm [shape: f32[1024,128], index: 9, kind: input, shape index: {}]
  %s10 = inlined_call_operand.vmem [shape: f32[1,128], index: 10, kind: input, shape index: {}]
  %s11 = inlined_call_operand.hbm [shape: f32[2,128], index: 11, kind: output, shape index: {}]
  %s12 = sld [smem:[#allocation0]]
  $region74: #{tpu_custom_call.1} parent=0
    _
  %s14 = ssub.s32 1, %s12
  %s15 = scalar_select 0, %s14, %s12
  $region1: #{tpu_custom_call.1} parent=0
    #allocation3 [shape = 'u8[524288]{0}', space=vmem, size = 0x80000, scoped, tag = 'input window, operand 4, single buffered']
    #allocation4 [shape = 's32[1]{0}', space=sflag, size = 0x4, scoped, tag = 'scoped memory for tpu_custom_call.1']
    #allocation5 [shape = 's32[1]{0}', space=sflag, size = 0x4, scoped, tag = 'scoped memory for tpu_custom_call.1']
    #allocation6 [shape = 'u8[524288]{0}', space=vmem, size = 0x80000, scoped, tag = 'input window, operand 8, single buffered']
    #allocation7 [shape = 's32[1]{0}', space=sflag, size = 0x4, scoped, tag = 'scoped memory for tpu_custom_call.1']
    #allocation8 [shape = 'u8[524288]{0}', space=vmem, size = 0x80000, scoped, tag = 'input window, operand 9, single buffered']
    #allocation9 [shape = 'u8[1024]{0}', space=vmem, size = 0x400, scoped, tag = 'output window, operand 0, single buffered']
    %16 = vsyncpa [#allocation4], 0
    %17 = vsyncpa [#allocation7], 0
    %18 = vsyncpa [#allocation5], 0
    // Predicated region
    $region2: #{tpu_custom_call.1} parent=1 // pred_check
      _
    $region3: #{tpu_custom_call.1} parent=1 // pred_check_branch
      %20 = sbr.rel (0) target = $region5
    $region4: #{tpu_custom_call.1} parent=1 // pred_region
      _
    $region5: #{tpu_custom_call.1} parent=1 // pred_fallthru
      _
    // Predicated region
    $region6: #{tpu_custom_call.1} parent=1 // pred_check
      _
    $region7: #{tpu_custom_call.1} parent=1 // pred_check_branch
      %22 = sbr.rel (0) target = $region9
    $region8: #{tpu_custom_call.1} parent=1 // pred_region
      _
    $region9: #{tpu_custom_call.1} parent=1 // pred_fallthru
      _
    // Predicated region
    $region10: #{tpu_custom_call.1} parent=1 // pred_check
      _
    $region11: #{tpu_custom_call.1} parent=1 // pred_check_branch
      %24 = sbr.rel (0) target = $region13
    $region12: #{tpu_custom_call.1} parent=1 // pred_region
      _
    $region13: #{tpu_custom_call.1} parent=1 // pred_fallthru
      _
    // Predicated region
    $region14: #{tpu_custom_call.1} parent=1 // pred_check
      _
    $region15: #{tpu_custom_call.1} parent=1 // pred_check_branch
      %26 = sbr.rel (0) target = $region17
    $region16: #{tpu_custom_call.1} parent=1 // pred_region
      _
    $region17: #{tpu_custom_call.1} parent=1 // pred_fallthru
      _
    // Predicated region
    $region18: #{tpu_custom_call.1} parent=1 // pred_check
      _
    $region19: #{tpu_custom_call.1} parent=1 // pred_check_branch
      %28 = sbr.rel (0) target = $region21
    $region20: #{tpu_custom_call.1} parent=1 // pred_region
      %30 = vsyncadd [#allocation4], 0
      %s31 = sshll.u32 %s4, 4
      %s32 = int_to_ptr.hbm [resolvable:$true] %s31
      %s33 = sshll.u32 [#allocation3], 4
      %s34 = int_to_ptr.vmem [resolvable:$true] %s33
      %39 = dma.hbm_to_vmem [thread:$0]  %s32, 16384, %s34, [#allocation4], 1024, 1024, 64
    $region21: #{tpu_custom_call.1} parent=1 // pred_fallthru
      _
    // Predicated region
    $region22: #{tpu_custom_call.1} parent=1 // pred_check
      _
    $region23: #{tpu_custom_call.1} parent=1 // pred_check_branch
      %41 = sbr.rel (0) target = $region25
    $region24: #{tpu_custom_call.1} parent=1 // pred_region
      _
    $region25: #{tpu_custom_call.1} parent=1 // pred_fallthru
      _
    // Predicated region
    $region26: #{tpu_custom_call.1} parent=1 // pred_check
      _
    $region27: #{tpu_custom_call.1} parent=1 // pred_check_branch
      %43 = sbr.rel (0) target = $region29
    $region28: #{tpu_custom_call.1} parent=1 // pred_region
      _
    $region29: #{tpu_custom_call.1} parent=1 // pred_fallthru
      _
    // Predicated region
    $region30: #{tpu_custom_call.1} parent=1 // pred_check
      _
    $region31: #{tpu_custom_call.1} parent=1 // pred_check_branch
      %45 = sbr.rel (0) target = $region33
    $region32: #{tpu_custom_call.1} parent=1 // pred_region
      _
    $region33: #{tpu_custom_call.1} parent=1 // pred_fallthru
      _
    // Predicated region
    $region34: #{tpu_custom_call.1} parent=1 // pred_check
      _
    $region35: #{tpu_custom_call.1} parent=1 // pred_check_branch
      %47 = sbr.rel (0) target = $region37
    $region36: #{tpu_custom_call.1} parent=1 // pred_region
      %49 = vsyncadd [#allocation7], 0
      %s50 = sshll.u32 %s8, 4
      %s51 = int_to_ptr.hbm [resolvable:$true] %s50
      %s52 = sshll.u32 [#allocation6], 4
      %s53 = int_to_ptr.vmem [resolvable:$true] %s52
      %58 = dma.hbm_to_vmem [thread:$0]  %s51, 16384, %s53, [#allocation7], 128, 128, 8
    $region37: #{tpu_custom_call.1} parent=1 // pred_fallthru
      _
    // Predicated region
    $region38: #{tpu_custom_call.1} parent=1 // pred_check
      _
    $region39: #{tpu_custom_call.1} parent=1 // pred_check_branch
      %60 = sbr.rel (0) target = $region41
    $region40: #{tpu_custom_call.1} parent=1 // pred_region
      %62 = vsyncadd [#allocation7], 0
      %s63 = sshll.u32 %s9, 4
      %s64 = int_to_ptr.hbm [resolvable:$true] %s63
      %s65 = sshll.u32 [#allocation8], 4
      %s66 = int_to_ptr.vmem [resolvable:$true] %s65
      %71 = dma.hbm_to_vmem [thread:$0]  %s64, 16384, %s66, [#allocation7], 128, 128, 8
    $region41: #{tpu_custom_call.1} parent=1 // pred_fallthru
      _
    // Predicated region
    $region42: #{tpu_custom_call.1} parent=1 // pred_check
      _
    $region43: #{tpu_custom_call.1} parent=1 // pred_check_branch
      %73 = sbr.rel (0) target = $region45
    $region44: #{tpu_custom_call.1} parent=1 // pred_region
      _
    $region45: #{tpu_custom_call.1} parent=1 // pred_fallthru
      _
    // Predicated region
    $region46: #{tpu_custom_call.1} parent=1 // pred_check
      _
    $region47: #{tpu_custom_call.1} parent=1 // pred_check_branch
      %75 = sbr.rel (0) target = $region49
    $region48: #{tpu_custom_call.1} parent=1 // pred_region
      %77 = dma.done [#allocation4], 16384
    $region49: #{tpu_custom_call.1} parent=1 // pred_fallthru
      _
    // Predicated region
    $region50: #{tpu_custom_call.1} parent=1 // pred_check
      _
    $region51: #{tpu_custom_call.1} parent=1 // pred_check_branch
      %79 = sbr.rel (0) target = $region53
    $region52: #{tpu_custom_call.1} parent=1 // pred_region
      %81 = dma.done [#allocation7], 16384
    $region53: #{tpu_custom_call.1} parent=1 // pred_fallthru
      _
    // Predicated region
    $region54: #{tpu_custom_call.1} parent=1 // pred_check
      _
    $region55: #{tpu_custom_call.1} parent=1 // pred_check_branch
      %83 = sbr.rel (0) target = $region57
    $region56: #{tpu_custom_call.1} parent=1 // pred_region
      %85 = dma.done [#allocation7], 16384
    $region57: #{tpu_custom_call.1} parent=1 // pred_fallthru
      _
    %p87 = scmp.eq.s32.totalorder 0, 0
    // Predicated region
    $region58: #{tpu_custom_call.1} parent=1 // pred_check
      %p88 = pneg %p87
    $region59: #{tpu_custom_call.1} parent=1 // pred_check_branch
      %90 = sbr.rel (%p88) target = $region61
    $region60: #{tpu_custom_call.1} parent=1 // pred_region
      %91 = vst [vmem:[#allocation2] sm:$0x3] 0.0
    $region61: #{tpu_custom_call.1} parent=1 // pred_fallthru
      _
    %v92 = vld [vmem:[%s0] sm:$0xf]
    %v93 = vld [vmem:[%s0 + $0x4] sm:$0xf]
    %v94 = vld [vmem:[%s0 + $0x8] sm:$0xf]
    %v95 = vld [vmem:[%s0 + $0xc] sm:$0xf]
    %v96 = vld [vmem:[%s0 + $0x10] sm:$0xf]
    %v97 = vld [vmem:[%s0 + $0x14] sm:$0xf]
    %v98 = vld [vmem:[%s0 + $0x18] sm:$0xf]
    %v99 = vld [vmem:[%s0 + $0x1c] sm:$0xf]
    %v100 = vld [vmem:[%s0 + $0x20] sm:$0xf]
    %v101 = vld [vmem:[%s0 + $0x24] sm:$0xf]
    %v102 = vld [vmem:[%s0 + $0x28] sm:$0xf]
    %v103 = vld [vmem:[%s0 + $0x2c] sm:$0xf]
    %v104 = vld [vmem:[%s0 + $0x30] sm:$0xf]
    %v105 = vld [vmem:[%s0 + $0x34] sm:$0xf]
    %v106 = vld [vmem:[%s0 + $0x38] sm:$0xf]
    %v107 = vld [vmem:[%s0 + $0x3c] sm:$0xf]
    %v108 = vld [vmem:[%s0 + $0x40] sm:$0xf]
    %v109 = vld [vmem:[%s0 + $0x44] sm:$0xf]
    %v110 = vld [vmem:[%s0 + $0x48] sm:$0xf]
    %v111 = vld [vmem:[%s0 + $0x4c] sm:$0xf]
    %v112 = vld [vmem:[%s0 + $0x50] sm:$0xf]
    %v113 = vld [vmem:[%s0 + $0x54] sm:$0xf]
    %v114 = vld [vmem:[%s0 + $0x58] sm:$0xf]
    %v115 = vld [vmem:[%s0 + $0x5c] sm:$0xf]
    %v116 = vld [vmem:[%s0 + $0x60] sm:$0xf]
    %v117 = vld [vmem:[%s0 + $0x64] sm:$0xf]
    %v118 = vld [vmem:[%s0 + $0x68] sm:$0xf]
    %v119 = vld [vmem:[%s0 + $0x6c] sm:$0xf]
    %v120 = vld [vmem:[%s0 + $0x70] sm:$0xf]
    %v121 = vld [vmem:[%s0 + $0x74] sm:$0xf]
    %v122 = vld [vmem:[%s0 + $0x78] sm:$0xf]
    %v123 = vld [vmem:[%s0 + $0x7c] sm:$0xf]
    %v124 = vld [vmem:[%s0 + $0x80] sm:$0xf]
    %v125 = vld [vmem:[%s0 + $0x84] sm:$0xf]
    %v126 = vld [vmem:[%s0 + $0x88] sm:$0xf]
    %v127 = vld [vmem:[%s0 + $0x8c] sm:$0xf]
    %v128 = vld [vmem:[%s0 + $0x90] sm:$0xf]
    %v129 = vld [vmem:[%s0 + $0x94] sm:$0xf]
    %v130 = vld [vmem:[%s0 + $0x98] sm:$0xf]
    %v131 = vld [vmem:[%s0 + $0x9c] sm:$0xf]
    %v132 = vld [vmem:[%s0 + $0xa0] sm:$0xf]
    %v133 = vld [vmem:[%s0 + $0xa4] sm:$0xf]
    %v134 = vld [vmem:[%s0 + $0xa8] sm:$0xf]
    %v135 = vld [vmem:[%s0 + $0xac] sm:$0xf]
    %v136 = vld [vmem:[%s0 + $0xb0] sm:$0xf]
    %v137 = vld [vmem:[%s0 + $0xb4] sm:$0xf]
    %v138 = vld [vmem:[%s0 + $0xb8] sm:$0xf]
    %v139 = vld [vmem:[%s0 + $0xbc] sm:$0xf]
    %v140 = vld [vmem:[%s0 + $0xc0] sm:$0xf]
    %v141 = vld [vmem:[%s0 + $0xc4] sm:$0xf]
    %v142 = vld [vmem:[%s0 + $0xc8] sm:$0xf]
    %v143 = vld [vmem:[%s0 + $0xcc] sm:$0xf]
    %v144 = vld [vmem:[%s0 + $0xd0] sm:$0xf]
    %v145 = vld [vmem:[%s0 + $0xd4] sm:$0xf]
    %v146 = vld [vmem:[%s0 + $0xd8] sm:$0xf]
    %v147 = vld [vmem:[%s0 + $0xdc] sm:$0xf]
    %v148 = vld [vmem:[%s0 + $0xe0] sm:$0xf]
    %v149 = vld [vmem:[%s0 + $0xe4] sm:$0xf]
    %v150 = vld [vmem:[%s0 + $0xe8] sm:$0xf]
    %v151 = vld [vmem:[%s0 + $0xec] sm:$0xf]
    %v152 = vld [vmem:[%s0 + $0xf0] sm:$0xf]
    %v153 = vld [vmem:[%s0 + $0xf4] sm:$0xf]
    %v154 = vld [vmem:[%s0 + $0xf8] sm:$0xf]
    %v155 = vld [vmem:[%s0 + $0xfc] sm:$0xf]
    %v156 = vld [vmem:[%s2] sm:$0xf]
    %v157 = vld [vmem:[%s2 + $0x4] sm:$0xf]
    %v158 = vld [vmem:[%s2 + $0x8] sm:$0xf]
    %v159 = vld [vmem:[%s2 + $0xc] sm:$0x3]
    %v160 = vld [vmem:[%s3] sm:$0x1]
    %v162 = vperm.slane %v160, 0
    %v228 = vunpack.c.l.b16 %v92
    %v229 = vunpack.c.l.b16 %v93
    %v230 = vunpack.c.l.b16 %v94
    %v231 = vunpack.c.l.b16 %v95
    %v232 = vunpack.c.l.b16 %v96
    %v233 = vunpack.c.l.b16 %v97
    %v234 = vunpack.c.l.b16 %v98
    %v235 = vunpack.c.l.b16 %v99
    %v236 = vunpack.c.l.b16 %v100
    %v237 = vunpack.c.l.b16 %v101
    %v238 = vunpack.c.l.b16 %v102
    %v239 = vunpack.c.l.b16 %v103
    %v240 = vunpack.c.l.b16 %v104
    %v241 = vunpack.c.l.b16 %v105
    %v242 = vunpack.c.l.b16 %v106
    %v243 = vunpack.c.l.b16 %v107
    %v244 = vunpack.c.l.b16 %v108
    %v245 = vunpack.c.l.b16 %v109
    %v246 = vunpack.c.l.b16 %v110
    %v247 = vunpack.c.l.b16 %v111
    %v248 = vunpack.c.l.b16 %v112
    %v249 = vunpack.c.l.b16 %v113
    %v250 = vunpack.c.l.b16 %v114
    %v251 = vunpack.c.l.b16 %v115
    %v252 = vunpack.c.l.b16 %v116
    %v253 = vunpack.c.l.b16 %v117
    %v254 = vunpack.c.l.b16 %v118
    %v255 = vunpack.c.l.b16 %v119
    %v256 = vunpack.c.l.b16 %v120
    %v257 = vunpack.c.l.b16 %v121
    %v258 = vunpack.c.l.b16 %v122
    %v259 = vunpack.c.l.b16 %v123
    %v260 = vunpack.c.l.b16 %v124
    %v261 = vunpack.c.l.b16 %v125
    %v262 = vunpack.c.l.b16 %v126
    %v263 = vunpack.c.l.b16 %v127
    %v264 = vunpack.c.l.b16 %v128
    %v265 = vunpack.c.l.b16 %v129
    %v266 = vunpack.c.l.b16 %v130
    %v267 = vunpack.c.l.b16 %v131
    %v268 = vunpack.c.l.b16 %v132
    %v269 = vunpack.c.l.b16 %v133
    %v270 = vunpack.c.l.b16 %v134
    %v271 = vunpack.c.l.b16 %v135
    %v272 = vunpack.c.l.b16 %v136
    %v273 = vunpack.c.l.b16 %v137
    %v274 = vunpack.c.l.b16 %v138
    %v275 = vunpack.c.l.b16 %v139
    %v276 = vunpack.c.l.b16 %v140
    %v277 = vunpack.c.l.b16 %v141
    %v278 = vunpack.c.l.b16 %v142
    %v279 = vunpack.c.l.b16 %v143
    %v280 = vunpack.c.l.b16 %v144
    %v281 = vunpack.c.l.b16 %v145
    %v282 = vunpack.c.l.b16 %v146
    %v283 = vunpack.c.l.b16 %v147
    %v284 = vunpack.c.l.b16 %v148
    %v285 = vunpack.c.l.b16 %v149
    %v286 = vunpack.c.l.b16 %v150
    %v287 = vunpack.c.l.b16 %v151
    %v288 = vunpack.c.l.b16 %v152
    %v289 = vunpack.c.l.b16 %v153
    %v290 = vunpack.c.l.b16 %v154
    %v291 = vunpack.c.l.b16 %v155
    %v292 = vpack.c.b16 %v229, %v228
    %v293 = vpack.c.b16 %v231, %v230
    %v294 = vpack.c.b16 %v233, %v232
    %v295 = vpack.c.b16 %v235, %v234
    %v296 = vpack.c.b16 %v237, %v236
    %v297 = vpack.c.b16 %v239, %v238
    %v298 = vpack.c.b16 %v241, %v240
    %v299 = vpack.c.b16 %v243, %v242
    %v300 = vpack.c.b16 %v245, %v244
    %v301 = vpack.c.b16 %v247, %v246
    %v302 = vpack.c.b16 %v249, %v248
    %v303 = vpack.c.b16 %v251, %v250
    %v304 = vpack.c.b16 %v253, %v252
    %v305 = vpack.c.b16 %v255, %v254
    %v306 = vpack.c.b16 %v257, %v256
    %v307 = vpack.c.b16 %v259, %v258
    %v308 = vpack.c.b16 %v261, %v260
    %v309 = vpack.c.b16 %v263, %v262
    %v310 = vpack.c.b16 %v265, %v264
    %v311 = vpack.c.b16 %v267, %v266
    %v312 = vpack.c.b16 %v269, %v268
    %v313 = vpack.c.b16 %v271, %v270
    %v314 = vpack.c.b16 %v273, %v272
    %v315 = vpack.c.b16 %v275, %v274
    %v316 = vpack.c.b16 %v277, %v276
    %v317 = vpack.c.b16 %v279, %v278
    %v318 = vpack.c.b16 %v281, %v280
    %v319 = vpack.c.b16 %v283, %v282
    %v320 = vpack.c.b16 %v285, %v284
    %v321 = vpack.c.b16 %v287, %v286
    %v322 = vpack.c.b16 %v289, %v288
    %v323 = vpack.c.b16 %v291, %v290
    %v328 = vunpack.c.l.b16 %v156
    %v329 = vunpack.c.l.b16 %v157
    %v330 = vunpack.c.l.b16 %v158
    %v331 = vunpack.c.l.b16 %v159
    %v332 = vpack.c.b16 %v329, %v328
    %v333 = vpack.c.b16 %v331, %v330
    %vm335 = vcmask 220160
    %v337 = vsel %vm335, %v292, 0
    %v340 = vsel %vm335, %v293, 0
    %v343 = vsel %vm335, %v294, 0
    %v346 = vsel %vm335, %v295, 0
    %v349 = vsel %vm335, %v296, 0
    %v352 = vsel %vm335, %v297, 0
    %v355 = vsel %vm335, %v298, 0
    %v358 = vsel %vm335, %v299, 0
    %v361 = vsel %vm335, %v300, 0
    %v364 = vsel %vm335, %v301, 0
    %v367 = vsel %vm335, %v302, 0
    %v370 = vsel %vm335, %v303, 0
    %v373 = vsel %vm335, %v304, 0
    %v376 = vsel %vm335, %v305, 0
    %v379 = vsel %vm335, %v306, 0
    %v382 = vsel %vm335, %v307, 0
    %v385 = vsel %vm335, %v308, 0
    %v388 = vsel %vm335, %v309, 0
    %v391 = vsel %vm335, %v310, 0
    %v394 = vsel %vm335, %v311, 0
    %v397 = vsel %vm335, %v312, 0
    %v400 = vsel %vm335, %v313, 0
    %v403 = vsel %vm335, %v314, 0
    %v406 = vsel %vm335, %v315, 0
    %v409 = vsel %vm335, %v316, 0
    %v412 = vsel %vm335, %v317, 0
    %v415 = vsel %vm335, %v318, 0
    %v418 = vsel %vm335, %v319, 0
    %v421 = vsel %vm335, %v320, 0
    %v424 = vsel %vm335, %v321, 0
    %v427 = vsel %vm335, %v322, 0
    %v430 = vsel %vm335, %v323, 0
    %vm432 = vcmask 1044480
    %vm433 = vcmask 1045504
    %v434 = vsel %vm432, 4294967295, 65535
    %v435 = vsel %vm433, %v434, 0
    %v437 = vand.u32 %v333, %v435
    %439 = vmatpush.bf16.msra.mxu0 0
    %440 = vmatpush.bf16.msra.mxu0 0
    %441 = vmatpush.bf16.msra.mxu0 0
    %442 = vmatpush.bf16.msra.mxu0 0
    %443 = vmatpush.bf16.msra.mxu0 0
    %444 = vmatpush.bf16.msra.mxu0 0
    %445 = vmatpush.bf16.msra.mxu0 %v437
    %446 = vmatpush.bf16.msra.mxu0 %v332
    %447 = vmatmul.bf16.gmra.mxu0 %v337
    %v448 = vpop.f32.mrf.mxu0
    %v449 = vadd.f32 %v162, %v448
    %v450 = vpop.f32.mrf.mxu0
    %v451 = vadd.f32 %v162, %v450
    %452 = vmatmul.bf16.gmra.mxu0 %v340
    %v453 = vpop.f32.mrf.mxu0
    %v454 = vadd.f32 %v162, %v453
    %v455 = vpop.f32.mrf.mxu0
    %v456 = vadd.f32 %v162, %v455
    %457 = vmatmul.bf16.gmra.mxu0 %v343
    %v458 = vpop.f32.mrf.mxu0
    %v459 = vadd.f32 %v162, %v458
    %v460 = vpop.f32.mrf.mxu0
    %v461 = vadd.f32 %v162, %v460
    %462 = vmatmul.bf16.gmra.mxu0 %v346
    %v463 = vpop.f32.mrf.mxu0
    %v464 = vadd.f32 %v162, %v463
    %v465 = vpop.f32.mrf.mxu0
    %v466 = vadd.f32 %v162, %v465
    %467 = vmatmul.bf16.gmra.mxu0 %v349
    %v468 = vpop.f32.mrf.mxu0
    %v469 = vadd.f32 %v162, %v468
    %v470 = vpop.f32.mrf.mxu0
    %v471 = vadd.f32 %v162, %v470
    %472 = vmatmul.bf16.gmra.mxu0 %v352
    %v473 = vpop.f32.mrf.mxu0
    %v474 = vadd.f32 %v162, %v473
    %v475 = vpop.f32.mrf.mxu0
    %v476 = vadd.f32 %v162, %v475
    %477 = vmatmul.bf16.gmra.mxu0 %v355
    %v478 = vpop.f32.mrf.mxu0
    %v479 = vadd.f32 %v162, %v478
    %v480 = vpop.f32.mrf.mxu0
    %v481 = vadd.f32 %v162, %v480
    %482 = vmatmul.bf16.gmra.mxu0 %v358
    %v483 = vpop.f32.mrf.mxu0
    %v484 = vadd.f32 %v162, %v483
    %v485 = vpop.f32.mrf.mxu0
    %v486 = vadd.f32 %v162, %v485
    %487 = vmatmul.bf16.gmra.mxu0 %v361
    %v488 = vpop.f32.mrf.mxu0
    %v489 = vadd.f32 %v162, %v488
    %v490 = vpop.f32.mrf.mxu0
    %v491 = vadd.f32 %v162, %v490
    %492 = vmatmul.bf16.gmra.mxu0 %v364
    %v493 = vpop.f32.mrf.mxu0
    %v494 = vadd.f32 %v162, %v493
    %v495 = vpop.f32.mrf.mxu0
    %v496 = vadd.f32 %v162, %v495
    %497 = vmatmul.bf16.gmra.mxu0 %v367
    %v498 = vpop.f32.mrf.mxu0
    %v499 = vadd.f32 %v162, %v498
    %v500 = vpop.f32.mrf.mxu0
    %v501 = vadd.f32 %v162, %v500
    %502 = vmatmul.bf16.gmra.mxu0 %v370
    %v503 = vpop.f32.mrf.mxu0
    %v504 = vadd.f32 %v162, %v503
    %v505 = vpop.f32.mrf.mxu0
    %v506 = vadd.f32 %v162, %v505
    %507 = vmatmul.bf16.gmra.mxu0 %v373
    %v508 = vpop.f32.mrf.mxu0
    %v509 = vadd.f32 %v162, %v508
    %v510 = vpop.f32.mrf.mxu0
    %v511 = vadd.f32 %v162, %v510
    %512 = vmatmul.bf16.gmra.mxu0 %v376
    %v513 = vpop.f32.mrf.mxu0
    %v514 = vadd.f32 %v162, %v513
    %v515 = vpop.f32.mrf.mxu0
    %v516 = vadd.f32 %v162, %v515
    %517 = vmatmul.bf16.gmra.mxu0 %v379
    %v518 = vpop.f32.mrf.mxu0
    %v519 = vadd.f32 %v162, %v518
    %v520 = vpop.f32.mrf.mxu0
    %v521 = vadd.f32 %v162, %v520
    %522 = vmatmul.bf16.gmra.mxu0 %v382
    %v523 = vpop.f32.mrf.mxu0
    %v524 = vadd.f32 %v162, %v523
    %v525 = vpop.f32.mrf.mxu0
    %v526 = vadd.f32 %v162, %v525
    %527 = vmatmul.bf16.gmra.mxu0 %v385
    %v528 = vpop.f32.mrf.mxu0
    %v529 = vadd.f32 %v162, %v528
    %v530 = vpop.f32.mrf.mxu0
    %v531 = vadd.f32 %v162, %v530
    %532 = vmatmul.bf16.gmra.mxu0 %v388
    %v533 = vpop.f32.mrf.mxu0
    %v534 = vadd.f32 %v162, %v533
    %v535 = vpop.f32.mrf.mxu0
    %v536 = vadd.f32 %v162, %v535
    %537 = vmatmul.bf16.gmra.mxu0 %v391
    %v538 = vpop.f32.mrf.mxu0
    %v539 = vadd.f32 %v162, %v538
    %v540 = vpop.f32.mrf.mxu0
    %v541 = vadd.f32 %v162, %v540
    %542 = vmatmul.bf16.gmra.mxu0 %v394
    %v543 = vpop.f32.mrf.mxu0
    %v544 = vadd.f32 %v162, %v543
    %v545 = vpop.f32.mrf.mxu0
    %v546 = vadd.f32 %v162, %v545
    %547 = vmatmul.bf16.gmra.mxu0 %v397
    %v548 = vpop.f32.mrf.mxu0
    %v549 = vadd.f32 %v162, %v548
    %v550 = vpop.f32.mrf.mxu0
    %v551 = vadd.f32 %v162, %v550
    %552 = vmatmul.bf16.gmra.mxu0 %v400
    %v553 = vpop.f32.mrf.mxu0
    %v554 = vadd.f32 %v162, %v553
    %v555 = vpop.f32.mrf.mxu0
    %v556 = vadd.f32 %v162, %v555
    %557 = vmatmul.bf16.gmra.mxu0 %v403
    %v558 = vpop.f32.mrf.mxu0
    %v559 = vadd.f32 %v162, %v558
    %v560 = vpop.f32.mrf.mxu0
    %v561 = vadd.f32 %v162, %v560
    %562 = vmatmul.bf16.gmra.mxu0 %v406
    %v563 = vpop.f32.mrf.mxu0
    %v564 = vadd.f32 %v162, %v563
    %v565 = vpop.f32.mrf.mxu0
    %v566 = vadd.f32 %v162, %v565
    %567 = vmatmul.bf16.gmra.mxu0 %v409
    %v568 = vpop.f32.mrf.mxu0
    %v569 = vadd.f32 %v162, %v568
    %v570 = vpop.f32.mrf.mxu0
    %v571 = vadd.f32 %v162, %v570
    %572 = vmatmul.bf16.gmra.mxu0 %v412
    %v573 = vpop.f32.mrf.mxu0
    %v574 = vadd.f32 %v162, %v573
    %v575 = vpop.f32.mrf.mxu0
    %v576 = vadd.f32 %v162, %v575
    %577 = vmatmul.bf16.gmra.mxu0 %v415
    %v578 = vpop.f32.mrf.mxu0
    %v579 = vadd.f32 %v162, %v578
    %v580 = vpop.f32.mrf.mxu0
    %v581 = vadd.f32 %v162, %v580
    %582 = vmatmul.bf16.gmra.mxu0 %v418
    %v583 = vpop.f32.mrf.mxu0
    %v584 = vadd.f32 %v162, %v583
    %v585 = vpop.f32.mrf.mxu0
    %v586 = vadd.f32 %v162, %v585
    %587 = vmatmul.bf16.gmra.mxu0 %v421
    %v588 = vpop.f32.mrf.mxu0
    %v589 = vadd.f32 %v162, %v588
    %v590 = vpop.f32.mrf.mxu0
    %v591 = vadd.f32 %v162, %v590
    %592 = vmatmul.bf16.gmra.mxu0 %v424
    %v593 = vpop.f32.mrf.mxu0
    %v594 = vadd.f32 %v162, %v593
    %v595 = vpop.f32.mrf.mxu0
    %v596 = vadd.f32 %v162, %v595
    %597 = vmatmul.bf16.gmra.mxu0 %v427
    %v598 = vpop.f32.mrf.mxu0
    %v599 = vadd.f32 %v162, %v598
    %v600 = vpop.f32.mrf.mxu0
    %v601 = vadd.f32 %v162, %v600
    %602 = vmatmul.bf16.gmra.mxu0 %v430
    %v603 = vpop.f32.mrf.mxu0
    %v604 = vadd.f32 %v162, %v603
    %v605 = vpop.f32.mrf.mxu0
    %v606 = vadd.f32 %v162, %v605
    %607 = vdwg.mxu0
    %v608 = vmax.f32 %v449, 0.0
    %v609 = vmax.f32 %v451, 0.0
    %v610 = vmax.f32 %v454, 0.0
    %v611 = vmax.f32 %v456, 0.0
    %v612 = vmax.f32 %v459, 0.0
    %v613 = vmax.f32 %v461, 0.0
    %v614 = vmax.f32 %v464, 0.0
    %v615 = vmax.f32 %v466, 0.0
    %v616 = vmax.f32 %v469, 0.0
    %v617 = vmax.f32 %v471, 0.0
    %v618 = vmax.f32 %v474, 0.0
    %v619 = vmax.f32 %v476, 0.0
    %v620 = vmax.f32 %v479, 0.0
    %v621 = vmax.f32 %v481, 0.0
    %v622 = vmax.f32 %v484, 0.0
    %v623 = vmax.f32 %v486, 0.0
    %v624 = vmax.f32 %v489, 0.0
    %v625 = vmax.f32 %v491, 0.0
    %v626 = vmax.f32 %v494, 0.0
    %v627 = vmax.f32 %v496, 0.0
    %v628 = vmax.f32 %v499, 0.0
    %v629 = vmax.f32 %v501, 0.0
    %v630 = vmax.f32 %v504, 0.0
    %v631 = vmax.f32 %v506, 0.0
    %v632 = vmax.f32 %v509, 0.0
    %v633 = vmax.f32 %v511, 0.0
    %v634 = vmax.f32 %v514, 0.0
    %v635 = vmax.f32 %v516, 0.0
    %v636 = vmax.f32 %v519, 0.0
    %v637 = vmax.f32 %v521, 0.0
    %v638 = vmax.f32 %v524, 0.0
    %v639 = vmax.f32 %v526, 0.0
    %v640 = vmax.f32 %v529, 0.0
    %v641 = vmax.f32 %v531, 0.0
    %v642 = vmax.f32 %v534, 0.0
    %v643 = vmax.f32 %v536, 0.0
    %v644 = vmax.f32 %v539, 0.0
    %v645 = vmax.f32 %v541, 0.0
    %v646 = vmax.f32 %v544, 0.0
    %v647 = vmax.f32 %v546, 0.0
    %v648 = vmax.f32 %v549, 0.0
    %v649 = vmax.f32 %v551, 0.0
    %v650 = vmax.f32 %v554, 0.0
    %v651 = vmax.f32 %v556, 0.0
    %v652 = vmax.f32 %v559, 0.0
    %v653 = vmax.f32 %v561, 0.0
    %v654 = vmax.f32 %v564, 0.0
    %v655 = vmax.f32 %v566, 0.0
    %v656 = vmax.f32 %v569, 0.0
    %v657 = vmax.f32 %v571, 0.0
    %v658 = vmax.f32 %v574, 0.0
    %v659 = vmax.f32 %v576, 0.0
    %v660 = vmax.f32 %v579, 0.0
    %v661 = vmax.f32 %v581, 0.0
    %v662 = vmax.f32 %v584, 0.0
    %v663 = vmax.f32 %v586, 0.0
    %v664 = vmax.f32 %v589, 0.0
    %v665 = vmax.f32 %v591, 0.0
    %v666 = vmax.f32 %v594, 0.0
    %v667 = vmax.f32 %v596, 0.0
    %v668 = vmax.f32 %v599, 0.0
    %v669 = vmax.f32 %v601, 0.0
    %v670 = vmax.f32 %v604, 0.0
    %v671 = vmax.f32 %v606, 0.0
    %v672 = vld [vmem:[#allocation2] sm:$0x3]
    %v673 = vadd.f32 %v608, %v609
    %v674 = vadd.f32 %v673, %v610
    %v675 = vadd.f32 %v674, %v611
    %v676 = vadd.f32 %v675, %v612
    %v677 = vadd.f32 %v676, %v613
    %v678 = vadd.f32 %v677, %v614
    %v679 = vadd.f32 %v678, %v615
    %v680 = vadd.f32 %v679, %v616
    %v681 = vadd.f32 %v680, %v617
    %v682 = vadd.f32 %v681, %v618
    %v683 = vadd.f32 %v682, %v619
    %v684 = vadd.f32 %v683, %v620
    %v685 = vadd.f32 %v684, %v621
    %v686 = vadd.f32 %v685, %v622
    %v687 = vadd.f32 %v686, %v623
    %v688 = vadd.f32 %v687, %v624
    %v689 = vadd.f32 %v688, %v625
    %v690 = vadd.f32 %v689, %v626
    %v691 = vadd.f32 %v690, %v627
    %v692 = vadd.f32 %v691, %v628
    %v693 = vadd.f32 %v692, %v629
    %v694 = vadd.f32 %v693, %v630
    %v695 = vadd.f32 %v694, %v631
    %v696 = vadd.f32 %v695, %v632
    %v697 = vadd.f32 %v696, %v633
    %v698 = vadd.f32 %v697, %v634
    %v699 = vadd.f32 %v698, %v635
    %v700 = vadd.f32 %v699, %v636
    %v701 = vadd.f32 %v700, %v637
    %v702 = vadd.f32 %v701, %v638
    %v703 = vadd.f32 %v702, %v639
    %v704 = vrot.slane %v703, 4
    %v705 = vadd.f32 %v703, %v704
    %v706 = vrot.slane %v705, 2
    %v707 = vadd.f32 %v705, %v706
    %v708 = vrot.slane %v707, 1
    %v709 = vadd.f32 %v707, %v708
    %v710 = vadd.f32 %v640, %v641
    %v711 = vadd.f32 %v710, %v642
    %v712 = vadd.f32 %v711, %v643
    %v713 = vadd.f32 %v712, %v644
    %v714 = vadd.f32 %v713, %v645
    %v715 = vadd.f32 %v714, %v646
    %v716 = vadd.f32 %v715, %v647
    %v717 = vadd.f32 %v716, %v648
    %v718 = vadd.f32 %v717, %v649
    %v719 = vadd.f32 %v718, %v650
    %v720 = vadd.f32 %v719, %v651
    %v721 = vadd.f32 %v720, %v652
    %v722 = vadd.f32 %v721, %v653
    %v723 = vadd.f32 %v722, %v654
    %v724 = vadd.f32 %v723, %v655
    %v725 = vadd.f32 %v724, %v656
    %v726 = vadd.f32 %v725, %v657
    %v727 = vadd.f32 %v726, %v658
    %v728 = vadd.f32 %v727, %v659
    %v729 = vadd.f32 %v728, %v660
    %v730 = vadd.f32 %v729, %v661
    %v731 = vadd.f32 %v730, %v662
    %v732 = vadd.f32 %v731, %v663
    %v733 = vadd.f32 %v732, %v664
    %v734 = vadd.f32 %v733, %v665
    %v735 = vadd.f32 %v734, %v666
    %v736 = vadd.f32 %v735, %v667
    %v737 = vadd.f32 %v736, %v668
    %v738 = vadd.f32 %v737, %v669
    %v739 = vadd.f32 %v738, %v670
    %v740 = vadd.f32 %v739, %v671
    %v741 = vrot.slane %v740, 4
    %v742 = vadd.f32 %v740, %v741
    %v743 = vrot.slane %v742, 2
    %v744 = vadd.f32 %v742, %v743
    %v745 = vrot.slane %v744, 1
    %v746 = vadd.f32 %v744, %v745
    %vm749 = vcmask 1041409
    %v750 = vsel %vm749, %v746, %v709
    %v752 = vadd.f32 %v672, %v750
    %753 = vst [vmem:[#allocation2] sm:$0x3] %v752
    // Predicated region
    $region62: #{tpu_custom_call.1} parent=1 // pred_check
      %p754 = pneg %p87
    $region63: #{tpu_custom_call.1} parent=1 // pred_check_branch
      %756 = sbr.rel (%p754) target = $region65
    $region64: #{tpu_custom_call.1} parent=1 // pred_region
      %v757 = vld [vmem:[#allocation2] sm:$0x3]
      %v758 = vmul.f32 %v757, 0.00390625
      %v759 = vld [vmem:[#allocation3] sm:$0xff]
      %v760 = vld [vmem:[#allocation3 + $0x8] sm:$0xff]
      %v761 = vld [vmem:[#allocation3 + $0x10] sm:$0xff]
      %v762 = vld [vmem:[#allocation3 + $0x18] sm:$0xff]
      %v763 = vld [vmem:[#allocation3 + $0x20] sm:$0xff]
      %v764 = vld [vmem:[#allocation3 + $0x28] sm:$0xff]
      %v765 = vld [vmem:[#allocation3 + $0x30] sm:$0xff]
      %v766 = vld [vmem:[#allocation3 + $0x38] sm:$0xff]
      %v767 = vld [vmem:[#allocation3 + $0x40] sm:$0xff]
      %v768 = vld [vmem:[#allocation3 + $0x48] sm:$0xff]
      %v769 = vld [vmem:[#allocation3 + $0x50] sm:$0xff]
      %v770 = vld [vmem:[#allocation3 + $0x58] sm:$0xff]
      %v771 = vld [vmem:[#allocation3 + $0x60] sm:$0xff]
      %v772 = vld [vmem:[#allocation3 + $0x68] sm:$0xff]
      %v773 = vld [vmem:[#allocation3 + $0x70] sm:$0xff]
      %v774 = vld [vmem:[#allocation3 + $0x78] sm:$0xff]
      %v775 = vld [vmem:[#allocation3 + $0x80] sm:$0xff]
      %v776 = vld [vmem:[#allocation3 + $0x88] sm:$0xff]
      %v777 = vld [vmem:[#allocation3 + $0x90] sm:$0xff]
      %v778 = vld [vmem:[#allocation3 + $0x98] sm:$0xff]
      %v779 = vld [vmem:[#allocation3 + $0xa0] sm:$0xff]
      %v780 = vld [vmem:[#allocation3 + $0xa8] sm:$0xff]
      %v781 = vld [vmem:[#allocation3 + $0xb0] sm:$0xff]
      %v782 = vld [vmem:[#allocation3 + $0xb8] sm:$0xff]
      %v783 = vld [vmem:[#allocation3 + $0xc0] sm:$0xff]
      %v784 = vld [vmem:[#allocation3 + $0xc8] sm:$0xff]
      %v785 = vld [vmem:[#allocation3 + $0xd0] sm:$0xff]
      %v786 = vld [vmem:[#allocation3 + $0xd8] sm:$0xff]
      %v787 = vld [vmem:[#allocation3 + $0xe0] sm:$0xff]
      %v788 = vld [vmem:[#allocation3 + $0xe8] sm:$0xff]
      %v789 = vld [vmem:[#allocation3 + $0xf0] sm:$0xff]
      %v790 = vld [vmem:[#allocation3 + $0xf8] sm:$0xff]
      %v791 = vld [vmem:[#allocation3 + $0x100] sm:$0xff]
      %v792 = vld [vmem:[#allocation3 + $0x108] sm:$0xff]
      %v793 = vld [vmem:[#allocation3 + $0x110] sm:$0xff]
      %v794 = vld [vmem:[#allocation3 + $0x118] sm:$0xff]
      %v795 = vld [vmem:[#allocation3 + $0x120] sm:$0xff]
      %v796 = vld [vmem:[#allocation3 + $0x128] sm:$0xff]
      %v797 = vld [vmem:[#allocation3 + $0x130] sm:$0xff]
      %v798 = vld [vmem:[#allocation3 + $0x138] sm:$0xff]
      %v799 = vld [vmem:[#allocation3 + $0x140] sm:$0xff]
      %v800 = vld [vmem:[#allocation3 + $0x148] sm:$0xff]
      %v801 = vld [vmem:[#allocation3 + $0x150] sm:$0xff]
      %v802 = vld [vmem:[#allocation3 + $0x158] sm:$0xff]
      %v803 = vld [vmem:[#allocation3 + $0x160] sm:$0xff]
      %v804 = vld [vmem:[#allocation3 + $0x168] sm:$0xff]
      %v805 = vld [vmem:[#allocation3 + $0x170] sm:$0xff]
      %v806 = vld [vmem:[#allocation3 + $0x178] sm:$0xff]
      %v807 = vld [vmem:[#allocation3 + $0x180] sm:$0xff]
      %v808 = vld [vmem:[#allocation3 + $0x188] sm:$0xff]
      %v809 = vld [vmem:[#allocation3 + $0x190] sm:$0xff]
      %v810 = vld [vmem:[#allocation3 + $0x198] sm:$0xff]
      %v811 = vld [vmem:[#allocation3 + $0x1a0] sm:$0xff]
      %v812 = vld [vmem:[#allocation3 + $0x1a8] sm:$0xff]
      %v813 = vld [vmem:[#allocation3 + $0x1b0] sm:$0xff]
      %v814 = vld [vmem:[#allocation3 + $0x1b8] sm:$0xff]
      %v815 = vld [vmem:[#allocation3 + $0x1c0] sm:$0xff]
      %v816 = vld [vmem:[#allocation3 + $0x1c8] sm:$0xff]
      %v817 = vld [vmem:[#allocation3 + $0x1d0] sm:$0xff]
      %v818 = vld [vmem:[#allocation3 + $0x1d8] sm:$0xff]
      %v819 = vld [vmem:[#allocation3 + $0x1e0] sm:$0xff]
      %v820 = vld [vmem:[#allocation3 + $0x1e8] sm:$0xff]
      %v821 = vld [vmem:[#allocation3 + $0x1f0] sm:$0xff]
      %v822 = vld [vmem:[#allocation3 + $0x1f8] sm:$0xff]
      %v823 = vld [vmem:[#allocation3 + $0x200] sm:$0xff]
      %v824 = vld [vmem:[#allocation3 + $0x208] sm:$0xff]
      %v825 = vld [vmem:[#allocation3 + $0x210] sm:$0xff]
      %v826 = vld [vmem:[#allocation3 + $0x218] sm:$0xff]
      %v827 = vld [vmem:[#allocation3 + $0x220] sm:$0xff]
      %v828 = vld [vmem:[#allocation3 + $0x228] sm:$0xff]
      %v829 = vld [vmem:[#allocation3 + $0x230] sm:$0xff]
      %v830 = vld [vmem:[#allocation3 + $0x238] sm:$0xff]
      %v831 = vld [vmem:[#allocation3 + $0x240] sm:$0xff]
      %v832 = vld [vmem:[#allocation3 + $0x248] sm:$0xff]
      %v833 = vld [vmem:[#allocation3 + $0x250] sm:$0xff]
      %v834 = vld [vmem:[#allocation3 + $0x258] sm:$0xff]
      %v835 = vld [vmem:[#allocation3 + $0x260] sm:$0xff]
      %v836 = vld [vmem:[#allocation3 + $0x268] sm:$0xff]
      %v837 = vld [vmem:[#allocation3 + $0x270] sm:$0xff]
      %v838 = vld [vmem:[#allocation3 + $0x278] sm:$0xff]
      %v839 = vld [vmem:[#allocation3 + $0x280] sm:$0xff]
      %v840 = vld [vmem:[#allocation3 + $0x288] sm:$0xff]
      %v841 = vld [vmem:[#allocation3 + $0x290] sm:$0xff]
      %v842 = vld [vmem:[#allocation3 + $0x298] sm:$0xff]
      %v843 = vld [vmem:[#allocation3 + $0x2a0] sm:$0xff]
      %v844 = vld [vmem:[#allocation3 + $0x2a8] sm:$0xff]
      %v845 = vld [vmem:[#allocation3 + $0x2b0] sm:$0xff]
      %v846 = vld [vmem:[#allocation3 + $0x2b8] sm:$0xff]
      %v847 = vld [vmem:[#allocation3 + $0x2c0] sm:$0xff]
      %v848 = vld [vmem:[#allocation3 + $0x2c8] sm:$0xff]
      %v849 = vld [vmem:[#allocation3 + $0x2d0] sm:$0xff]
      %v850 = vld [vmem:[#allocation3 + $0x2d8] sm:$0xff]
      %v851 = vld [vmem:[#allocation3 + $0x2e0] sm:$0xff]
      %v852 = vld [vmem:[#allocation3 + $0x2e8] sm:$0xff]
      %v853 = vld [vmem:[#allocation3 + $0x2f0] sm:$0xff]
      %v854 = vld [vmem:[#allocation3 + $0x2f8] sm:$0xff]
      %v855 = vld [vmem:[#allocation3 + $0x300] sm:$0xff]
      %v856 = vld [vmem:[#allocation3 + $0x308] sm:$0xff]
      %v857 = vld [vmem:[#allocation3 + $0x310] sm:$0xff]
      %v858 = vld [vmem:[#allocation3 + $0x318] sm:$0xff]
      %v859 = vld [vmem:[#allocation3 + $0x320] sm:$0xff]
      %v860 = vld [vmem:[#allocation3 + $0x328] sm:$0xff]
      %v861 = vld [vmem:[#allocation3 + $0x330] sm:$0xff]
      %v862 = vld [vmem:[#allocation3 + $0x338] sm:$0xff]
      %v863 = vld [vmem:[#allocation3 + $0x340] sm:$0xff]
      %v864 = vld [vmem:[#allocation3 + $0x348] sm:$0xff]
      %v865 = vld [vmem:[#allocation3 + $0x350] sm:$0xff]
      %v866 = vld [vmem:[#allocation3 + $0x358] sm:$0xff]
      %v867 = vld [vmem:[#allocation3 + $0x360] sm:$0xff]
      %v868 = vld [vmem:[#allocation3 + $0x368] sm:$0xff]
      %v869 = vld [vmem:[#allocation3 + $0x370] sm:$0xff]
      %v870 = vld [vmem:[#allocation3 + $0x378] sm:$0xff]
      %v871 = vld [vmem:[#allocation3 + $0x380] sm:$0xff]
      %v872 = vld [vmem:[#allocation3 + $0x388] sm:$0xff]
      %v873 = vld [vmem:[#allocation3 + $0x390] sm:$0xff]
      %v874 = vld [vmem:[#allocation3 + $0x398] sm:$0xff]
      %v875 = vld [vmem:[#allocation3 + $0x3a0] sm:$0xff]
      %v876 = vld [vmem:[#allocation3 + $0x3a8] sm:$0xff]
      %v877 = vld [vmem:[#allocation3 + $0x3b0] sm:$0xff]
      %v878 = vld [vmem:[#allocation3 + $0x3b8] sm:$0xff]
      %v879 = vld [vmem:[#allocation3 + $0x3c0] sm:$0xff]
      %v880 = vld [vmem:[#allocation3 + $0x3c8] sm:$0xff]
      %v881 = vld [vmem:[#allocation3 + $0x3d0] sm:$0xff]
      %v882 = vld [vmem:[#allocation3 + $0x3d8] sm:$0xff]
      %v883 = vld [vmem:[#allocation3 + $0x3e0] sm:$0xff]
      %v884 = vld [vmem:[#allocation3 + $0x3e8] sm:$0xff]
      %v885 = vld [vmem:[#allocation3 + $0x3f0] sm:$0xff]
      %v886 = vld [vmem:[#allocation3 + $0x3f8] sm:$0xff]
      %v887 = vld [vmem:[%s5] sm:$0xff]
      %v889 = vperm.slane %v887, 0
      %v890 = vperm.slane %v887, 1
      %v891 = vperm.slane %v887, 2
      %v892 = vperm.slane %v887, 3
      %v893 = vperm.slane %v887, 4
      %v894 = vperm.slane %v887, 5
      %v895 = vperm.slane %v887, 6
      %v896 = vperm.slane %v887, 7
      %905 = vmatpush.msra.mxu0 %v879
      %906 = vmatpush.msra.mxu0 %v871
      %907 = vmatpush.msra.mxu0 %v863
      %908 = vmatpush.msra.mxu0 %v855
      %909 = vmatpush.msra.mxu0 %v847
      %910 = vmatpush.msra.mxu0 %v839
      %911 = vmatpush.msra.mxu0 %v831
      %912 = vmatpush.msra.mxu0 %v823
      %913 = vmatpush.msra.mxu0 %v815
      %914 = vmatpush.msra.mxu0 %v807
      %915 = vmatpush.msra.mxu0 %v799
      %916 = vmatpush.msra.mxu0 %v791
      %917 = vmatpush.msra.mxu0 %v783
      %918 = vmatpush.msra.mxu0 %v775
      %919 = vmatpush.msra.mxu0 %v767
      %920 = vmatpush.msra.mxu0 %v759
      %921 = vmatmul.f32.gmra.mxu0 %v758
      %v922 = vpop.f32.mrf.mxu0
      %v923 = vadd.f32 %v889, %v922
      %924 = vdwg.mxu0
      %925 = vmatpush.msra.mxu0 %v880
      %926 = vmatpush.msra.mxu0 %v872
      %927 = vmatpush.msra.mxu0 %v864
      %928 = vmatpush.msra.mxu0 %v856
      %929 = vmatpush.msra.mxu0 %v848
      %930 = vmatpush.msra.mxu0 %v840
      %931 = vmatpush.msra.mxu0 %v832
      %932 = vmatpush.msra.mxu0 %v824
      %933 = vmatpush.msra.mxu0 %v816
      %934 = vmatpush.msra.mxu0 %v808
      %935 = vmatpush.msra.mxu0 %v800
      %936 = vmatpush.msra.mxu0 %v792
      %937 = vmatpush.msra.mxu0 %v784
      %938 = vmatpush.msra.mxu0 %v776
      %939 = vmatpush.msra.mxu0 %v768
      %940 = vmatpush.msra.mxu0 %v760
      %941 = vmatmul.f32.gmra.mxu0 %v758
      %v942 = vpop.f32.mrf.mxu0
      %v943 = vadd.f32 %v890, %v942
      %944 = vdwg.mxu0
      %945 = vmatpush.msra.mxu0 %v881
      %946 = vmatpush.msra.mxu0 %v873
      %947 = vmatpush.msra.mxu0 %v865
      %948 = vmatpush.msra.mxu0 %v857
      %949 = vmatpush.msra.mxu0 %v849
      %950 = vmatpush.msra.mxu0 %v841
      %951 = vmatpush.msra.mxu0 %v833
      %952 = vmatpush.msra.mxu0 %v825
      %953 = vmatpush.msra.mxu0 %v817
      %954 = vmatpush.msra.mxu0 %v809
      %955 = vmatpush.msra.mxu0 %v801
      %956 = vmatpush.msra.mxu0 %v793
      %957 = vmatpush.msra.mxu0 %v785
      %958 = vmatpush.msra.mxu0 %v777
      %959 = vmatpush.msra.mxu0 %v769
      %960 = vmatpush.msra.mxu0 %v761
      %961 = vmatmul.f32.gmra.mxu0 %v758
      %v962 = vpop.f32.mrf.mxu0
      %v963 = vadd.f32 %v891, %v962
      %964 = vdwg.mxu0
      %965 = vmatpush.msra.mxu0 %v882
      %966 = vmatpush.msra.mxu0 %v874
      %967 = vmatpush.msra.mxu0 %v866
      %968 = vmatpush.msra.mxu0 %v858
      %969 = vmatpush.msra.mxu0 %v850
      %970 = vmatpush.msra.mxu0 %v842
      %971 = vmatpush.msra.mxu0 %v834
      %972 = vmatpush.msra.mxu0 %v826
      %973 = vmatpush.msra.mxu0 %v818
      %974 = vmatpush.msra.mxu0 %v810
      %975 = vmatpush.msra.mxu0 %v802
      %976 = vmatpush.msra.mxu0 %v794
      %977 = vmatpush.msra.mxu0 %v786
      %978 = vmatpush.msra.mxu0 %v778
      %979 = vmatpush.msra.mxu0 %v770
      %980 = vmatpush.msra.mxu0 %v762
      %981 = vmatmul.f32.gmra.mxu0 %v758
      %v982 = vpop.f32.mrf.mxu0
      %v983 = vadd.f32 %v892, %v982
      %984 = vdwg.mxu0
      %985 = vmatpush.msra.mxu0 %v883
      %986 = vmatpush.msra.mxu0 %v875
      %987 = vmatpush.msra.mxu0 %v867
      %988 = vmatpush.msra.mxu0 %v859
      %989 = vmatpush.msra.mxu0 %v851
      %990 = vmatpush.msra.mxu0 %v843
      %991 = vmatpush.msra.mxu0 %v835
      %992 = vmatpush.msra.mxu0 %v827
      %993 = vmatpush.msra.mxu0 %v819
      %994 = vmatpush.msra.mxu0 %v811
      %995 = vmatpush.msra.mxu0 %v803
      %996 = vmatpush.msra.mxu0 %v795
      %997 = vmatpush.msra.mxu0 %v787
      %998 = vmatpush.msra.mxu0 %v779
      %999 = vmatpush.msra.mxu0 %v771
      %1000 = vmatpush.msra.mxu0 %v763
      %1001 = vmatmul.f32.gmra.mxu0 %v758
      %v1002 = vpop.f32.mrf.mxu0
      %v1003 = vadd.f32 %v893, %v1002
      %1004 = vdwg.mxu0
      %1005 = vmatpush.msra.mxu0 %v884
      %1006 = vmatpush.msra.mxu0 %v876
      %1007 = vmatpush.msra.mxu0 %v868
      %1008 = vmatpush.msra.mxu0 %v860
      %1009 = vmatpush.msra.mxu0 %v852
      %1010 = vmatpush.msra.mxu0 %v844
      %1011 = vmatpush.msra.mxu0 %v836
      %1012 = vmatpush.msra.mxu0 %v828
      %1013 = vmatpush.msra.mxu0 %v820
      %1014 = vmatpush.msra.mxu0 %v812
      %1015 = vmatpush.msra.mxu0 %v804
      %1016 = vmatpush.msra.mxu0 %v796
      %1017 = vmatpush.msra.mxu0 %v788
      %1018 = vmatpush.msra.mxu0 %v780
      %1019 = vmatpush.msra.mxu0 %v772
      %1020 = vmatpush.msra.mxu0 %v764
      %1021 = vmatmul.f32.gmra.mxu0 %v758
      %v1022 = vpop.f32.mrf.mxu0
      %v1023 = vadd.f32 %v894, %v1022
      %1024 = vdwg.mxu0
      %1025 = vmatpush.msra.mxu0 %v885
      %1026 = vmatpush.msra.mxu0 %v877
      %1027 = vmatpush.msra.mxu0 %v869
      %1028 = vmatpush.msra.mxu0 %v861
      %1029 = vmatpush.msra.mxu0 %v853
      %1030 = vmatpush.msra.mxu0 %v845
      %1031 = vmatpush.msra.mxu0 %v837
      %1032 = vmatpush.msra.mxu0 %v829
      %1033 = vmatpush.msra.mxu0 %v821
      %1034 = vmatpush.msra.mxu0 %v813
      %1035 = vmatpush.msra.mxu0 %v805
      %1036 = vmatpush.msra.mxu0 %v797
      %1037 = vmatpush.msra.mxu0 %v789
      %1038 = vmatpush.msra.mxu0 %v781
      %1039 = vmatpush.msra.mxu0 %v773
      %1040 = vmatpush.msra.mxu0 %v765
      %1041 = vmatmul.f32.gmra.mxu0 %v758
      %v1042 = vpop.f32.mrf.mxu0
      %v1043 = vadd.f32 %v895, %v1042
      %1044 = vdwg.mxu0
      %1045 = vmatpush.msra.mxu0 %v886
      %1046 = vmatpush.msra.mxu0 %v878
      %1047 = vmatpush.msra.mxu0 %v870
      %1048 = vmatpush.msra.mxu0 %v862
      %1049 = vmatpush.msra.mxu0 %v854
      %1050 = vmatpush.msra.mxu0 %v846
      %1051 = vmatpush.msra.mxu0 %v838
      %1052 = vmatpush.msra.mxu0 %v830
      %1053 = vmatpush.msra.mxu0 %v822
      %1054 = vmatpush.msra.mxu0 %v814
      %1055 = vmatpush.msra.mxu0 %v806
      %1056 = vmatpush.msra.mxu0 %v798
      %1057 = vmatpush.msra.mxu0 %v790
      %1058 = vmatpush.msra.mxu0 %v782
      %1059 = vmatpush.msra.mxu0 %v774
      %1060 = vmatpush.msra.mxu0 %v766
      %1061 = vmatmul.f32.gmra.mxu0 %v758
      %v1062 = vpop.f32.mrf.mxu0
      %v1063 = vadd.f32 %v896, %v1062
      %1064 = vdwg.mxu0
      %v1065 = vld [vmem:[%s1] sm:$0x3]
      %v1066 = vld [vmem:[%s6] sm:$0xff]
      %v1067 = vld [vmem:[%s6 + $0x8] sm:$0xff]
      %v1068 = vld [vmem:[%s6 + $0x10] sm:$0xff]
      %v1069 = vld [vmem:[%s6 + $0x18] sm:$0xff]
      %v1070 = vld [vmem:[%s6 + $0x20] sm:$0xff]
      %v1071 = vld [vmem:[%s6 + $0x28] sm:$0xff]
      %v1072 = vld [vmem:[%s6 + $0x30] sm:$0xff]
      %v1073 = vld [vmem:[%s6 + $0x38] sm:$0xff]
      %v1074 = vld [vmem:[%s6 + $0x40] sm:$0xff]
      %v1075 = vld [vmem:[%s6 + $0x48] sm:$0xff]
      %v1076 = vld [vmem:[%s6 + $0x50] sm:$0xff]
      %v1077 = vld [vmem:[%s6 + $0x58] sm:$0xff]
      %v1078 = vld [vmem:[%s6 + $0x60] sm:$0xff]
      %v1079 = vld [vmem:[%s6 + $0x68] sm:$0xff]
      %v1080 = vld [vmem:[%s6 + $0x70] sm:$0xff]
      %v1081 = vld [vmem:[%s6 + $0x78] sm:$0xff]
      %v1082 = vld [vmem:[%s6 + $0x80] sm:$0xff]
      %v1083 = vld [vmem:[%s6 + $0x88] sm:$0xff]
      %v1084 = vld [vmem:[%s6 + $0x90] sm:$0xff]
      %v1085 = vld [vmem:[%s6 + $0x98] sm:$0xff]
      %v1086 = vld [vmem:[%s6 + $0xa0] sm:$0xff]
      %v1087 = vld [vmem:[%s6 + $0xa8] sm:$0xff]
      %v1088 = vld [vmem:[%s6 + $0xb0] sm:$0xff]
      %v1089 = vld [vmem:[%s6 + $0xb8] sm:$0xff]
      %v1090 = vld [vmem:[%s6 + $0xc0] sm:$0xff]
      %v1091 = vld [vmem:[%s6 + $0xc8] sm:$0xff]
      %v1092 = vld [vmem:[%s6 + $0xd0] sm:$0xff]
      %v1093 = vld [vmem:[%s6 + $0xd8] sm:$0xff]
      %v1094 = vld [vmem:[%s6 + $0xe0] sm:$0xff]
      %v1095 = vld [vmem:[%s6 + $0xe8] sm:$0xff]
      %v1096 = vld [vmem:[%s6 + $0xf0] sm:$0xff]
      %v1097 = vld [vmem:[%s6 + $0xf8] sm:$0xff]
      %v1098 = vld [vmem:[%s7] sm:$0xff]
      %v1100 = vperm.slane %v1098, 0
      %v1101 = vperm.slane %v1098, 1
      %v1102 = vperm.slane %v1098, 2
      %v1103 = vperm.slane %v1098, 3
      %v1104 = vperm.slane %v1098, 4
      %v1105 = vperm.slane %v1098, 5
      %v1106 = vperm.slane %v1098, 6
      %v1107 = vperm.slane %v1098, 7
      %vm1116 = vcmask 261120
      %v1118 = vsel %vm1116, %v1065, 0
      %1120 = vmatpush.msra.mxu0 0.0
      %1121 = vmatpush.msra.mxu0 0.0
      %1122 = vmatpush.msra.mxu0 0.0
      %1123 = vmatpush.msra.mxu0 0.0
      %1124 = vmatpush.msra.mxu0 0.0
      %1125 = vmatpush.msra.mxu0 0.0
      %1126 = vmatpush.msra.mxu0 0.0
      %1127 = vmatpush.msra.mxu0 0.0
      %1128 = vmatpush.msra.mxu0 0.0
      %1129 = vmatpush.msra.mxu0 0.0
      %1130 = vmatpush.msra.mxu0 0.0
      %1131 = vmatpush.msra.mxu0 0.0
      %1132 = vmatpush.msra.mxu0 %v1090
      %1133 = vmatpush.msra.mxu0 %v1082
      %1134 = vmatpush.msra.mxu0 %v1074
      %1135 = vmatpush.msra.mxu0 %v1066
      %1136 = vmatmul.f32.gmra.mxu0 %v1118
      %v1137 = vpop.f32.mrf.mxu0
      %v1138 = vadd.f32 %v1100, %v1137
      %1139 = vdwg.mxu0
      %1140 = vmatpush.msra.mxu0 0.0
      %1141 = vmatpush.msra.mxu0 0.0
      %1142 = vmatpush.msra.mxu0 0.0
      %1143 = vmatpush.msra.mxu0 0.0
      %1144 = vmatpush.msra.mxu0 0.0
      %1145 = vmatpush.msra.mxu0 0.0
      %1146 = vmatpush.msra.mxu0 0.0
      %1147 = vmatpush.msra.mxu0 0.0
      %1148 = vmatpush.msra.mxu0 0.0
      %1149 = vmatpush.msra.mxu0 0.0
      %1150 = vmatpush.msra.mxu0 0.0
      %1151 = vmatpush.msra.mxu0 0.0
      %1152 = vmatpush.msra.mxu0 %v1091
      %1153 = vmatpush.msra.mxu0 %v1083
      %1154 = vmatpush.msra.mxu0 %v1075
      %1155 = vmatpush.msra.mxu0 %v1067
      %1156 = vmatmul.f32.gmra.mxu0 %v1118
      %v1157 = vpop.f32.mrf.mxu0
      %v1158 = vadd.f32 %v1101, %v1157
      %1159 = vdwg.mxu0
      %1160 = vmatpush.msra.mxu0 0.0
      %1161 = vmatpush.msra.mxu0 0.0
      %1162 = vmatpush.msra.mxu0 0.0
      %1163 = vmatpush.msra.mxu0 0.0
      %1164 = vmatpush.msra.mxu0 0.0
      %1165 = vmatpush.msra.mxu0 0.0
      %1166 = vmatpush.msra.mxu0 0.0
      %1167 = vmatpush.msra.mxu0 0.0
      %1168 = vmatpush.msra.mxu0 0.0
      %1169 = vmatpush.msra.mxu0 0.0
      %1170 = vmatpush.msra.mxu0 0.0
      %1171 = vmatpush.msra.mxu0 0.0
      %1172 = vmatpush.msra.mxu0 %v1092
      %1173 = vmatpush.msra.mxu0 %v1084
      %1174 = vmatpush.msra.mxu0 %v1076
      %1175 = vmatpush.msra.mxu0 %v1068
      %1176 = vmatmul.f32.gmra.mxu0 %v1118
      %v1177 = vpop.f32.mrf.mxu0
      %v1178 = vadd.f32 %v1102, %v1177
      %1179 = vdwg.mxu0
      %1180 = vmatpush.msra.mxu0 0.0
      %1181 = vmatpush.msra.mxu0 0.0
      %1182 = vmatpush.msra.mxu0 0.0
      %1183 = vmatpush.msra.mxu0 0.0
      %1184 = vmatpush.msra.mxu0 0.0
      %1185 = vmatpush.msra.mxu0 0.0
      %1186 = vmatpush.msra.mxu0 0.0
      %1187 = vmatpush.msra.mxu0 0.0
      %1188 = vmatpush.msra.mxu0 0.0
      %1189 = vmatpush.msra.mxu0 0.0
      %1190 = vmatpush.msra.mxu0 0.0
      %1191 = vmatpush.msra.mxu0 0.0
      %1192 = vmatpush.msra.mxu0 %v1093
      %1193 = vmatpush.msra.mxu0 %v1085
      %1194 = vmatpush.msra.mxu0 %v1077
      %1195 = vmatpush.msra.mxu0 %v1069
      %1196 = vmatmul.f32.gmra.mxu0 %v1118
      %v1197 = vpop.f32.mrf.mxu0
      %v1198 = vadd.f32 %v1103, %v1197
      %1199 = vdwg.mxu0
      %1200 = vmatpush.msra.mxu0 0.0
      %1201 = vmatpush.msra.mxu0 0.0
      %1202 = vmatpush.msra.mxu0 0.0
      %1203 = vmatpush.msra.mxu0 0.0
      %1204 = vmatpush.msra.mxu0 0.0
      %1205 = vmatpush.msra.mxu0 0.0
      %1206 = vmatpush.msra.mxu0 0.0
      %1207 = vmatpush.msra.mxu0 0.0
      %1208 = vmatpush.msra.mxu0 0.0
      %1209 = vmatpush.msra.mxu0 0.0
      %1210 = vmatpush.msra.mxu0 0.0
      %1211 = vmatpush.msra.mxu0 0.0
      %1212 = vmatpush.msra.mxu0 %v1094
      %1213 = vmatpush.msra.mxu0 %v1086
      %1214 = vmatpush.msra.mxu0 %v1078
      %1215 = vmatpush.msra.mxu0 %v1070
      %1216 = vmatmul.f32.gmra.mxu0 %v1118
      %v1217 = vpop.f32.mrf.mxu0
      %v1218 = vadd.f32 %v1104, %v1217
      %1219 = vdwg.mxu0
      %1220 = vmatpush.msra.mxu0 0.0
      %1221 = vmatpush.msra.mxu0 0.0
      %1222 = vmatpush.msra.mxu0 0.0
      %1223 = vmatpush.msra.mxu0 0.0
      %1224 = vmatpush.msra.mxu0 0.0
      %1225 = vmatpush.msra.mxu0 0.0
      %1226 = vmatpush.msra.mxu0 0.0
      %1227 = vmatpush.msra.mxu0 0.0
      %1228 = vmatpush.msra.mxu0 0.0
      %1229 = vmatpush.msra.mxu0 0.0
      %1230 = vmatpush.msra.mxu0 0.0
      %1231 = vmatpush.msra.mxu0 0.0
      %1232 = vmatpush.msra.mxu0 %v1095
      %1233 = vmatpush.msra.mxu0 %v1087
      %1234 = vmatpush.msra.mxu0 %v1079
      %1235 = vmatpush.msra.mxu0 %v1071
      %1236 = vmatmul.f32.gmra.mxu0 %v1118
      %v1237 = vpop.f32.mrf.mxu0
      %v1238 = vadd.f32 %v1105, %v1237
      %1239 = vdwg.mxu0
      %1240 = vmatpush.msra.mxu0 0.0
      %1241 = vmatpush.msra.mxu0 0.0
      %1242 = vmatpush.msra.mxu0 0.0
      %1243 = vmatpush.msra.mxu0 0.0
      %1244 = vmatpush.msra.mxu0 0.0
      %1245 = vmatpush.msra.mxu0 0.0
      %1246 = vmatpush.msra.mxu0 0.0
      %1247 = vmatpush.msra.mxu0 0.0
      %1248 = vmatpush.msra.mxu0 0.0
      %1249 = vmatpush.msra.mxu0 0.0
      %1250 = vmatpush.msra.mxu0 0.0
      %1251 = vmatpush.msra.mxu0 0.0
      %1252 = vmatpush.msra.mxu0 %v1096
      %1253 = vmatpush.msra.mxu0 %v1088
      %1254 = vmatpush.msra.mxu0 %v1080
      %1255 = vmatpush.msra.mxu0 %v1072
      %1256 = vmatmul.f32.gmra.mxu0 %v1118
      %v1257 = vpop.f32.mrf.mxu0
      %v1258 = vadd.f32 %v1106, %v1257
      %1259 = vdwg.mxu0
      %1260 = vmatpush.msra.mxu0 0.0
      %1261 = vmatpush.msra.mxu0 0.0
      %1262 = vmatpush.msra.mxu0 0.0
      %1263 = vmatpush.msra.mxu0 0.0
      %1264 = vmatpush.msra.mxu0 0.0
      %1265 = vmatpush.msra.mxu0 0.0
      %1266 = vmatpush.msra.mxu0 0.0
      %1267 = vmatpush.msra.mxu0 0.0
      %1268 = vmatpush.msra.mxu0 0.0
      %1269 = vmatpush.msra.mxu0 0.0
      %1270 = vmatpush.msra.mxu0 0.0
      %1271 = vmatpush.msra.mxu0 0.0
      %1272 = vmatpush.msra.mxu0 %v1097
      %1273 = vmatpush.msra.mxu0 %v1089
      %1274 = vmatpush.msra.mxu0 %v1081
      %1275 = vmatpush.msra.mxu0 %v1073
      %1276 = vmatmul.f32.gmra.mxu0 %v1118
      %v1277 = vpop.f32.mrf.mxu0
      %v1278 = vadd.f32 %v1107, %v1277
      %1279 = vdwg.mxu0
      %v1280 = vld [vmem:[#allocation6] sm:$0xff]
      %v1281 = vld [vmem:[#allocation6 + $0x8] sm:$0xff]
      %v1282 = vld [vmem:[#allocation6 + $0x10] sm:$0xff]
      %v1283 = vld [vmem:[#allocation6 + $0x18] sm:$0xff]
      %v1284 = vld [vmem:[#allocation6 + $0x20] sm:$0xff]
      %v1285 = vld [vmem:[#allocation6 + $0x28] sm:$0xff]
      %v1286 = vld [vmem:[#allocation6 + $0x30] sm:$0xff]
      %v1287 = vld [vmem:[#allocation6 + $0x38] sm:$0xff]
      %v1288 = vld [vmem:[#allocation6 + $0x40] sm:$0xff]
      %v1289 = vld [vmem:[#allocation6 + $0x48] sm:$0xff]
      %v1290 = vld [vmem:[#allocation6 + $0x50] sm:$0xff]
      %v1291 = vld [vmem:[#allocation6 + $0x58] sm:$0xff]
      %v1292 = vld [vmem:[#allocation6 + $0x60] sm:$0xff]
      %v1293 = vld [vmem:[#allocation6 + $0x68] sm:$0xff]
      %v1294 = vld [vmem:[#allocation6 + $0x70] sm:$0xff]
      %v1295 = vld [vmem:[#allocation6 + $0x78] sm:$0xff]
      %v1296 = vld [vmem:[#allocation6 + $0x80] sm:$0xff]
      %v1297 = vld [vmem:[#allocation6 + $0x88] sm:$0xff]
      %v1298 = vld [vmem:[#allocation6 + $0x90] sm:$0xff]
      %v1299 = vld [vmem:[#allocation6 + $0x98] sm:$0xff]
      %v1300 = vld [vmem:[#allocation6 + $0xa0] sm:$0xff]
      %v1301 = vld [vmem:[#allocation6 + $0xa8] sm:$0xff]
      %v1302 = vld [vmem:[#allocation6 + $0xb0] sm:$0xff]
      %v1303 = vld [vmem:[#allocation6 + $0xb8] sm:$0xff]
      %v1304 = vld [vmem:[#allocation6 + $0xc0] sm:$0xff]
      %v1305 = vld [vmem:[#allocation6 + $0xc8] sm:$0xff]
      %v1306 = vld [vmem:[#allocation6 + $0xd0] sm:$0xff]
      %v1307 = vld [vmem:[#allocation6 + $0xd8] sm:$0xff]
      %v1308 = vld [vmem:[#allocation6 + $0xe0] sm:$0xff]
      %v1309 = vld [vmem:[#allocation6 + $0xe8] sm:$0xff]
      %v1310 = vld [vmem:[#allocation6 + $0xf0] sm:$0xff]
      %v1311 = vld [vmem:[#allocation6 + $0xf8] sm:$0xff]
      %v1312 = vld [vmem:[#allocation6 + $0x100] sm:$0xff]
      %v1313 = vld [vmem:[#allocation6 + $0x108] sm:$0xff]
      %v1314 = vld [vmem:[#allocation6 + $0x110] sm:$0xff]
      %v1315 = vld [vmem:[#allocation6 + $0x118] sm:$0xff]
      %v1316 = vld [vmem:[#allocation6 + $0x120] sm:$0xff]
      %v1317 = vld [vmem:[#allocation6 + $0x128] sm:$0xff]
      %v1318 = vld [vmem:[#allocation6 + $0x130] sm:$0xff]
      %v1319 = vld [vmem:[#allocation6 + $0x138] sm:$0xff]
      %v1320 = vld [vmem:[#allocation6 + $0x140] sm:$0xff]
      %v1321 = vld [vmem:[#allocation6 + $0x148] sm:$0xff]
      %v1322 = vld [vmem:[#allocation6 + $0x150] sm:$0xff]
      %v1323 = vld [vmem:[#allocation6 + $0x158] sm:$0xff]
      %v1324 = vld [vmem:[#allocation6 + $0x160] sm:$0xff]
      %v1325 = vld [vmem:[#allocation6 + $0x168] sm:$0xff]
      %v1326 = vld [vmem:[#allocation6 + $0x170] sm:$0xff]
      %v1327 = vld [vmem:[#allocation6 + $0x178] sm:$0xff]
      %v1328 = vld [vmem:[#allocation6 + $0x180] sm:$0xff]
      %v1329 = vld [vmem:[#allocation6 + $0x188] sm:$0xff]
      %v1330 = vld [vmem:[#allocation6 + $0x190] sm:$0xff]
      %v1331 = vld [vmem:[#allocation6 + $0x198] sm:$0xff]
      %v1332 = vld [vmem:[#allocation6 + $0x1a0] sm:$0xff]
      %v1333 = vld [vmem:[#allocation6 + $0x1a8] sm:$0xff]
      %v1334 = vld [vmem:[#allocation6 + $0x1b0] sm:$0xff]
      %v1335 = vld [vmem:[#allocation6 + $0x1b8] sm:$0xff]
      %v1336 = vld [vmem:[#allocation6 + $0x1c0] sm:$0xff]
      %v1337 = vld [vmem:[#allocation6 + $0x1c8] sm:$0xff]
      %v1338 = vld [vmem:[#allocation6 + $0x1d0] sm:$0xff]
      %v1339 = vld [vmem:[#allocation6 + $0x1d8] sm:$0xff]
      %v1340 = vld [vmem:[#allocation6 + $0x1e0] sm:$0xff]
      %v1341 = vld [vmem:[#allocation6 + $0x1e8] sm:$0xff]
      %v1342 = vld [vmem:[#allocation6 + $0x1f0] sm:$0xff]
      %v1343 = vld [vmem:[#allocation6 + $0x1f8] sm:$0xff]
      %v1344 = vld [vmem:[#allocation6 + $0x200] sm:$0xff]
      %v1345 = vld [vmem:[#allocation6 + $0x208] sm:$0xff]
      %v1346 = vld [vmem:[#allocation6 + $0x210] sm:$0xff]
      %v1347 = vld [vmem:[#allocation6 + $0x218] sm:$0xff]
      %v1348 = vld [vmem:[#allocation6 + $0x220] sm:$0xff]
      %v1349 = vld [vmem:[#allocation6 + $0x228] sm:$0xff]
      %v1350 = vld [vmem:[#allocation6 + $0x230] sm:$0xff]
      %v1351 = vld [vmem:[#allocation6 + $0x238] sm:$0xff]
      %v1352 = vld [vmem:[#allocation6 + $0x240] sm:$0xff]
      %v1353 = vld [vmem:[#allocation6 + $0x248] sm:$0xff]
      %v1354 = vld [vmem:[#allocation6 + $0x250] sm:$0xff]
      %v1355 = vld [vmem:[#allocation6 + $0x258] sm:$0xff]
      %v1356 = vld [vmem:[#allocation6 + $0x260] sm:$0xff]
      %v1357 = vld [vmem:[#allocation6 + $0x268] sm:$0xff]
      %v1358 = vld [vmem:[#allocation6 + $0x270] sm:$0xff]
      %v1359 = vld [vmem:[#allocation6 + $0x278] sm:$0xff]
      %v1360 = vld [vmem:[#allocation6 + $0x280] sm:$0xff]
      %v1361 = vld [vmem:[#allocation6 + $0x288] sm:$0xff]
      %v1362 = vld [vmem:[#allocation6 + $0x290] sm:$0xff]
      %v1363 = vld [vmem:[#allocation6 + $0x298] sm:$0xff]
      %v1364 = vld [vmem:[#allocation6 + $0x2a0] sm:$0xff]
      %v1365 = vld [vmem:[#allocation6 + $0x2a8] sm:$0xff]
      %v1366 = vld [vmem:[#allocation6 + $0x2b0] sm:$0xff]
      %v1367 = vld [vmem:[#allocation6 + $0x2b8] sm:$0xff]
      %v1368 = vld [vmem:[#allocation6 + $0x2c0] sm:$0xff]
      %v1369 = vld [vmem:[#allocation6 + $0x2c8] sm:$0xff]
      %v1370 = vld [vmem:[#allocation6 + $0x2d0] sm:$0xff]
      %v1371 = vld [vmem:[#allocation6 + $0x2d8] sm:$0xff]
      %v1372 = vld [vmem:[#allocation6 + $0x2e0] sm:$0xff]
      %v1373 = vld [vmem:[#allocation6 + $0x2e8] sm:$0xff]
      %v1374 = vld [vmem:[#allocation6 + $0x2f0] sm:$0xff]
      %v1375 = vld [vmem:[#allocation6 + $0x2f8] sm:$0xff]
      %v1376 = vld [vmem:[#allocation6 + $0x300] sm:$0xff]
      %v1377 = vld [vmem:[#allocation6 + $0x308] sm:$0xff]
      %v1378 = vld [vmem:[#allocation6 + $0x310] sm:$0xff]
      %v1379 = vld [vmem:[#allocation6 + $0x318] sm:$0xff]
      %v1380 = vld [vmem:[#allocation6 + $0x320] sm:$0xff]
      %v1381 = vld [vmem:[#allocation6 + $0x328] sm:$0xff]
      %v1382 = vld [vmem:[#allocation6 + $0x330] sm:$0xff]
      %v1383 = vld [vmem:[#allocation6 + $0x338] sm:$0xff]
      %v1384 = vld [vmem:[#allocation6 + $0x340] sm:$0xff]
      %v1385 = vld [vmem:[#allocation6 + $0x348] sm:$0xff]
      %v1386 = vld [vmem:[#allocation6 + $0x350] sm:$0xff]
      %v1387 = vld [vmem:[#allocation6 + $0x358] sm:$0xff]
      %v1388 = vld [vmem:[#allocation6 + $0x360] sm:$0xff]
      %v1389 = vld [vmem:[#allocation6 + $0x368] sm:$0xff]
      %v1390 = vld [vmem:[#allocation6 + $0x370] sm:$0xff]
      %v1391 = vld [vmem:[#allocation6 + $0x378] sm:$0xff]
      %v1392 = vld [vmem:[#allocation6 + $0x380] sm:$0xff]
      %v1393 = vld [vmem:[#allocation6 + $0x388] sm:$0xff]
      %v1394 = vld [vmem:[#allocation6 + $0x390] sm:$0xff]
      %v1395 = vld [vmem:[#allocation6 + $0x398] sm:$0xff]
      %v1396 = vld [vmem:[#allocation6 + $0x3a0] sm:$0xff]
      %v1397 = vld [vmem:[#allocation6 + $0x3a8] sm:$0xff]
      %v1398 = vld [vmem:[#allocation6 + $0x3b0] sm:$0xff]
      %v1399 = vld [vmem:[#allocation6 + $0x3b8] sm:$0xff]
      %v1400 = vld [vmem:[#allocation6 + $0x3c0] sm:$0xff]
      %v1401 = vld [vmem:[#allocation6 + $0x3c8] sm:$0xff]
      %v1402 = vld [vmem:[#allocation6 + $0x3d0] sm:$0xff]
      %v1403 = vld [vmem:[#allocation6 + $0x3d8] sm:$0xff]
      %v1404 = vld [vmem:[#allocation6 + $0x3e0] sm:$0xff]
      %v1405 = vld [vmem:[#allocation6 + $0x3e8] sm:$0xff]
      %v1406 = vld [vmem:[#allocation6 + $0x3f0] sm:$0xff]
      %v1407 = vld [vmem:[#allocation6 + $0x3f8] sm:$0xff]
      %v1408 = vld [vmem:[#allocation8] sm:$0xff]
      %v1409 = vld [vmem:[#allocation8 + $0x8] sm:$0xff]
      %v1410 = vld [vmem:[#allocation8 + $0x10] sm:$0xff]
      %v1411 = vld [vmem:[#allocation8 + $0x18] sm:$0xff]
      %v1412 = vld [vmem:[#allocation8 + $0x20] sm:$0xff]
      %v1413 = vld [vmem:[#allocation8 + $0x28] sm:$0xff]
      %v1414 = vld [vmem:[#allocation8 + $0x30] sm:$0xff]
      %v1415 = vld [vmem:[#allocation8 + $0x38] sm:$0xff]
      %v1416 = vld [vmem:[#allocation8 + $0x40] sm:$0xff]
      %v1417 = vld [vmem:[#allocation8 + $0x48] sm:$0xff]
      %v1418 = vld [vmem:[#allocation8 + $0x50] sm:$0xff]
      %v1419 = vld [vmem:[#allocation8 + $0x58] sm:$0xff]
      %v1420 = vld [vmem:[#allocation8 + $0x60] sm:$0xff]
      %v1421 = vld [vmem:[#allocation8 + $0x68] sm:$0xff]
      %v1422 = vld [vmem:[#allocation8 + $0x70] sm:$0xff]
      %v1423 = vld [vmem:[#allocation8 + $0x78] sm:$0xff]
      %v1424 = vld [vmem:[#allocation8 + $0x80] sm:$0xff]
      %v1425 = vld [vmem:[#allocation8 + $0x88] sm:$0xff]
      %v1426 = vld [vmem:[#allocation8 + $0x90] sm:$0xff]
      %v1427 = vld [vmem:[#allocation8 + $0x98] sm:$0xff]
      %v1428 = vld [vmem:[#allocation8 + $0xa0] sm:$0xff]
      %v1429 = vld [vmem:[#allocation8 + $0xa8] sm:$0xff]
      %v1430 = vld [vmem:[#allocation8 + $0xb0] sm:$0xff]
      %v1431 = vld [vmem:[#allocation8 + $0xb8] sm:$0xff]
      %v1432 = vld [vmem:[#allocation8 + $0xc0] sm:$0xff]
      %v1433 = vld [vmem:[#allocation8 + $0xc8] sm:$0xff]
      %v1434 = vld [vmem:[#allocation8 + $0xd0] sm:$0xff]
      %v1435 = vld [vmem:[#allocation8 + $0xd8] sm:$0xff]
      %v1436 = vld [vmem:[#allocation8 + $0xe0] sm:$0xff]
      %v1437 = vld [vmem:[#allocation8 + $0xe8] sm:$0xff]
      %v1438 = vld [vmem:[#allocation8 + $0xf0] sm:$0xff]
      %v1439 = vld [vmem:[#allocation8 + $0xf8] sm:$0xff]
      %v1440 = vld [vmem:[#allocation8 + $0x100] sm:$0xff]
      %v1441 = vld [vmem:[#allocation8 + $0x108] sm:$0xff]
      %v1442 = vld [vmem:[#allocation8 + $0x110] sm:$0xff]
      %v1443 = vld [vmem:[#allocation8 + $0x118] sm:$0xff]
      %v1444 = vld [vmem:[#allocation8 + $0x120] sm:$0xff]
      %v1445 = vld [vmem:[#allocation8 + $0x128] sm:$0xff]
      %v1446 = vld [vmem:[#allocation8 + $0x130] sm:$0xff]
      %v1447 = vld [vmem:[#allocation8 + $0x138] sm:$0xff]
      %v1448 = vld [vmem:[#allocation8 + $0x140] sm:$0xff]
      %v1449 = vld [vmem:[#allocation8 + $0x148] sm:$0xff]
      %v1450 = vld [vmem:[#allocation8 + $0x150] sm:$0xff]
      %v1451 = vld [vmem:[#allocation8 + $0x158] sm:$0xff]
      %v1452 = vld [vmem:[#allocation8 + $0x160] sm:$0xff]
      %v1453 = vld [vmem:[#allocation8 + $0x168] sm:$0xff]
      %v1454 = vld [vmem:[#allocation8 + $0x170] sm:$0xff]
      %v1455 = vld [vmem:[#allocation8 + $0x178] sm:$0xff]
      %v1456 = vld [vmem:[#allocation8 + $0x180] sm:$0xff]
      %v1457 = vld [vmem:[#allocation8 + $0x188] sm:$0xff]
      %v1458 = vld [vmem:[#allocation8 + $0x190] sm:$0xff]
      %v1459 = vld [vmem:[#allocation8 + $0x198] sm:$0xff]
      %v1460 = vld [vmem:[#allocation8 + $0x1a0] sm:$0xff]
      %v1461 = vld [vmem:[#allocation8 + $0x1a8] sm:$0xff]
      %v1462 = vld [vmem:[#allocation8 + $0x1b0] sm:$0xff]
      %v1463 = vld [vmem:[#allocation8 + $0x1b8] sm:$0xff]
      %v1464 = vld [vmem:[#allocation8 + $0x1c0] sm:$0xff]
      %v1465 = vld [vmem:[#allocation8 + $0x1c8] sm:$0xff]
      %v1466 = vld [vmem:[#allocation8 + $0x1d0] sm:$0xff]
      %v1467 = vld [vmem:[#allocation8 + $0x1d8] sm:$0xff]
      %v1468 = vld [vmem:[#allocation8 + $0x1e0] sm:$0xff]
      %v1469 = vld [vmem:[#allocation8 + $0x1e8] sm:$0xff]
      %v1470 = vld [vmem:[#allocation8 + $0x1f0] sm:$0xff]
      %v1471 = vld [vmem:[#allocation8 + $0x1f8] sm:$0xff]
      %v1472 = vld [vmem:[#allocation8 + $0x200] sm:$0xff]
      %v1473 = vld [vmem:[#allocation8 + $0x208] sm:$0xff]
      %v1474 = vld [vmem:[#allocation8 + $0x210] sm:$0xff]
      %v1475 = vld [vmem:[#allocation8 + $0x218] sm:$0xff]
      %v1476 = vld [vmem:[#allocation8 + $0x220] sm:$0xff]
      %v1477 = vld [vmem:[#allocation8 + $0x228] sm:$0xff]
      %v1478 = vld [vmem:[#allocation8 + $0x230] sm:$0xff]
      %v1479 = vld [vmem:[#allocation8 + $0x238] sm:$0xff]
      %v1480 = vld [vmem:[#allocation8 + $0x240] sm:$0xff]
      %v1481 = vld [vmem:[#allocation8 + $0x248] sm:$0xff]
      %v1482 = vld [vmem:[#allocation8 + $0x250] sm:$0xff]
      %v1483 = vld [vmem:[#allocation8 + $0x258] sm:$0xff]
      %v1484 = vld [vmem:[#allocation8 + $0x260] sm:$0xff]
      %v1485 = vld [vmem:[#allocation8 + $0x268] sm:$0xff]
      %v1486 = vld [vmem:[#allocation8 + $0x270] sm:$0xff]
      %v1487 = vld [vmem:[#allocation8 + $0x278] sm:$0xff]
      %v1488 = vld [vmem:[#allocation8 + $0x280] sm:$0xff]
      %v1489 = vld [vmem:[#allocation8 + $0x288] sm:$0xff]
      %v1490 = vld [vmem:[#allocation8 + $0x290] sm:$0xff]
      %v1491 = vld [vmem:[#allocation8 + $0x298] sm:$0xff]
      %v1492 = vld [vmem:[#allocation8 + $0x2a0] sm:$0xff]
      %v1493 = vld [vmem:[#allocation8 + $0x2a8] sm:$0xff]
      %v1494 = vld [vmem:[#allocation8 + $0x2b0] sm:$0xff]
      %v1495 = vld [vmem:[#allocation8 + $0x2b8] sm:$0xff]
      %v1496 = vld [vmem:[#allocation8 + $0x2c0] sm:$0xff]
      %v1497 = vld [vmem:[#allocation8 + $0x2c8] sm:$0xff]
      %v1498 = vld [vmem:[#allocation8 + $0x2d0] sm:$0xff]
      %v1499 = vld [vmem:[#allocation8 + $0x2d8] sm:$0xff]
      %v1500 = vld [vmem:[#allocation8 + $0x2e0] sm:$0xff]
      %v1501 = vld [vmem:[#allocation8 + $0x2e8] sm:$0xff]
      %v1502 = vld [vmem:[#allocation8 + $0x2f0] sm:$0xff]
      %v1503 = vld [vmem:[#allocation8 + $0x2f8] sm:$0xff]
      %v1504 = vld [vmem:[#allocation8 + $0x300] sm:$0xff]
      %v1505 = vld [vmem:[#allocation8 + $0x308] sm:$0xff]
      %v1506 = vld [vmem:[#allocation8 + $0x310] sm:$0xff]
      %v1507 = vld [vmem:[#allocation8 + $0x318] sm:$0xff]
      %v1508 = vld [vmem:[#allocation8 + $0x320] sm:$0xff]
      %v1509 = vld [vmem:[#allocation8 + $0x328] sm:$0xff]
      %v1510 = vld [vmem:[#allocation8 + $0x330] sm:$0xff]
      %v1511 = vld [vmem:[#allocation8 + $0x338] sm:$0xff]
      %v1512 = vld [vmem:[#allocation8 + $0x340] sm:$0xff]
      %v1513 = vld [vmem:[#allocation8 + $0x348] sm:$0xff]
      %v1514 = vld [vmem:[#allocation8 + $0x350] sm:$0xff]
      %v1515 = vld [vmem:[#allocation8 + $0x358] sm:$0xff]
      %v1516 = vld [vmem:[#allocation8 + $0x360] sm:$0xff]
      %v1517 = vld [vmem:[#allocation8 + $0x368] sm:$0xff]
      %v1518 = vld [vmem:[#allocation8 + $0x370] sm:$0xff]
      %v1519 = vld [vmem:[#allocation8 + $0x378] sm:$0xff]
      %v1520 = vld [vmem:[#allocation8 + $0x380] sm:$0xff]
      %v1521 = vld [vmem:[#allocation8 + $0x388] sm:$0xff]
      %v1522 = vld [vmem:[#allocation8 + $0x390] sm:$0xff]
      %v1523 = vld [vmem:[#allocation8 + $0x398] sm:$0xff]
      %v1524 = vld [vmem:[#allocation8 + $0x3a0] sm:$0xff]
      %v1525 = vld [vmem:[#allocation8 + $0x3a8] sm:$0xff]
      %v1526 = vld [vmem:[#allocation8 + $0x3b0] sm:$0xff]
      %v1527 = vld [vmem:[#allocation8 + $0x3b8] sm:$0xff]
      %v1528 = vld [vmem:[#allocation8 + $0x3c0] sm:$0xff]
      %v1529 = vld [vmem:[#allocation8 + $0x3c8] sm:$0xff]
      %v1530 = vld [vmem:[#allocation8 + $0x3d0] sm:$0xff]
      %v1531 = vld [vmem:[#allocation8 + $0x3d8] sm:$0xff]
      %v1532 = vld [vmem:[#allocation8 + $0x3e0] sm:$0xff]
      %v1533 = vld [vmem:[#allocation8 + $0x3e8] sm:$0xff]
      %v1534 = vld [vmem:[#allocation8 + $0x3f0] sm:$0xff]
      %v1535 = vld [vmem:[#allocation8 + $0x3f8] sm:$0xff]
      %1536 = vmatpush.msra.mxu0 %v1423
      %1537 = vmatpush.msra.mxu0 %v1422
      %1538 = vmatpush.msra.mxu0 %v1421
      %1539 = vmatpush.msra.mxu0 %v1420
      %1540 = vmatpush.msra.mxu0 %v1419
      %1541 = vmatpush.msra.mxu0 %v1418
      %1542 = vmatpush.msra.mxu0 %v1417
      %1543 = vmatpush.msra.mxu0 %v1416
      %1544 = vmatpush.msra.mxu0 %v1415
      %1545 = vmatpush.msra.mxu0 %v1414
      %1546 = vmatpush.msra.mxu0 %v1413
      %1547 = vmatpush.msra.mxu0 %v1412
      %1548 = vmatpush.msra.mxu0 %v1411
      %1549 = vmatpush.msra.mxu0 %v1410
      %1550 = vmatpush.msra.mxu0 %v1409
      %1551 = vmatpush.msra.mxu0 %v1408
      %1552 = vmatmul.f32.gmra.mxu0 %v1138
      %v1553 = vpop.f32.mrf.mxu0
      %v1554 = vadd.f32 0.0, %v1553
      %1555 = vdwg.mxu0
      %1556 = vmatpush.msra.mxu0 %v1439
      %1557 = vmatpush.msra.mxu0 %v1438
      %1558 = vmatpush.msra.mxu0 %v1437
      %1559 = vmatpush.msra.mxu0 %v1436
      %1560 = vmatpush.msra.mxu0 %v1435
      %1561 = vmatpush.msra.mxu0 %v1434
      %1562 = vmatpush.msra.mxu0 %v1433
      %1563 = vmatpush.msra.mxu0 %v1432
      %1564 = vmatpush.msra.mxu0 %v1431
      %1565 = vmatpush.msra.mxu0 %v1430
      %1566 = vmatpush.msra.mxu0 %v1429
      %1567 = vmatpush.msra.mxu0 %v1428
      %1568 = vmatpush.msra.mxu0 %v1427
      %1569 = vmatpush.msra.mxu0 %v1426
      %1570 = vmatpush.msra.mxu0 %v1425
      %1571 = vmatpush.msra.mxu0 %v1424
      %1572 = vmatmul.f32.gmra.mxu0 %v1158
      %v1573 = vpop.f32.mrf.mxu0
      %v1574 = vadd.f32 %v1554, %v1573
      %1575 = vdwg.mxu0
      %1576 = vmatpush.msra.mxu0 %v1455
      %1577 = vmatpush.msra.mxu0 %v1454
      %1578 = vmatpush.msra.mxu0 %v1453
      %1579 = vmatpush.msra.mxu0 %v1452
      %1580 = vmatpush.msra.mxu0 %v1451
      %1581 = vmatpush.msra.mxu0 %v1450
      %1582 = vmatpush.msra.mxu0 %v1449
      %1583 = vmatpush.msra.mxu0 %v1448
      %1584 = vmatpush.msra.mxu0 %v1447
      %1585 = vmatpush.msra.mxu0 %v1446
      %1586 = vmatpush.msra.mxu0 %v1445
      %1587 = vmatpush.msra.mxu0 %v1444
      %1588 = vmatpush.msra.mxu0 %v1443
      %1589 = vmatpush.msra.mxu0 %v1442
      %1590 = vmatpush.msra.mxu0 %v1441
      %1591 = vmatpush.msra.mxu0 %v1440
      %1592 = vmatmul.f32.gmra.mxu0 %v1178
      %v1593 = vpop.f32.mrf.mxu0
      %v1594 = vadd.f32 %v1574, %v1593
      %1595 = vdwg.mxu0
      %1596 = vmatpush.msra.mxu0 %v1471
      %1597 = vmatpush.msra.mxu0 %v1470
      %1598 = vmatpush.msra.mxu0 %v1469
      %1599 = vmatpush.msra.mxu0 %v1468
      %1600 = vmatpush.msra.mxu0 %v1467
      %1601 = vmatpush.msra.mxu0 %v1466
      %1602 = vmatpush.msra.mxu0 %v1465
      %1603 = vmatpush.msra.mxu0 %v1464
      %1604 = vmatpush.msra.mxu0 %v1463
      %1605 = vmatpush.msra.mxu0 %v1462
      %1606 = vmatpush.msra.mxu0 %v1461
      %1607 = vmatpush.msra.mxu0 %v1460
      %1608 = vmatpush.msra.mxu0 %v1459
      %1609 = vmatpush.msra.mxu0 %v1458
      %1610 = vmatpush.msra.mxu0 %v1457
      %1611 = vmatpush.msra.mxu0 %v1456
      %1612 = vmatmul.f32.gmra.mxu0 %v1198
      %v1613 = vpop.f32.mrf.mxu0
      %v1614 = vadd.f32 %v1594, %v1613
      %1615 = vdwg.mxu0
      %1616 = vmatpush.msra.mxu0 %v1487
      %1617 = vmatpush.msra.mxu0 %v1486
      %1618 = vmatpush.msra.mxu0 %v1485
      %1619 = vmatpush.msra.mxu0 %v1484
      %1620 = vmatpush.msra.mxu0 %v1483
      %1621 = vmatpush.msra.mxu0 %v1482
      %1622 = vmatpush.msra.mxu0 %v1481
      %1623 = vmatpush.msra.mxu0 %v1480
      %1624 = vmatpush.msra.mxu0 %v1479
      %1625 = vmatpush.msra.mxu0 %v1478
      %1626 = vmatpush.msra.mxu0 %v1477
      %1627 = vmatpush.msra.mxu0 %v1476
      %1628 = vmatpush.msra.mxu0 %v1475
      %1629 = vmatpush.msra.mxu0 %v1474
      %1630 = vmatpush.msra.mxu0 %v1473
      %1631 = vmatpush.msra.mxu0 %v1472
      %1632 = vmatmul.f32.gmra.mxu0 %v1218
      %v1633 = vpop.f32.mrf.mxu0
      %v1634 = vadd.f32 %v1614, %v1633
      %1635 = vdwg.mxu0
      %1636 = vmatpush.msra.mxu0 %v1503
      %1637 = vmatpush.msra.mxu0 %v1502
      %1638 = vmatpush.msra.mxu0 %v1501
      %1639 = vmatpush.msra.mxu0 %v1500
      %1640 = vmatpush.msra.mxu0 %v1499
      %1641 = vmatpush.msra.mxu0 %v1498
      %1642 = vmatpush.msra.mxu0 %v1497
      %1643 = vmatpush.msra.mxu0 %v1496
      %1644 = vmatpush.msra.mxu0 %v1495
      %1645 = vmatpush.msra.mxu0 %v1494
      %1646 = vmatpush.msra.mxu0 %v1493
      %1647 = vmatpush.msra.mxu0 %v1492
      %1648 = vmatpush.msra.mxu0 %v1491
      %1649 = vmatpush.msra.mxu0 %v1490
      %1650 = vmatpush.msra.mxu0 %v1489
      %1651 = vmatpush.msra.mxu0 %v1488
      %1652 = vmatmul.f32.gmra.mxu0 %v1238
      %v1653 = vpop.f32.mrf.mxu0
      %v1654 = vadd.f32 %v1634, %v1653
      %1655 = vdwg.mxu0
      %1656 = vmatpush.msra.mxu0 %v1519
      %1657 = vmatpush.msra.mxu0 %v1518
      %1658 = vmatpush.msra.mxu0 %v1517
      %1659 = vmatpush.msra.mxu0 %v1516
      %1660 = vmatpush.msra.mxu0 %v1515
      %1661 = vmatpush.msra.mxu0 %v1514
      %1662 = vmatpush.msra.mxu0 %v1513
      %1663 = vmatpush.msra.mxu0 %v1512
      %1664 = vmatpush.msra.mxu0 %v1511
      %1665 = vmatpush.msra.mxu0 %v1510
      %1666 = vmatpush.msra.mxu0 %v1509
      %1667 = vmatpush.msra.mxu0 %v1508
      %1668 = vmatpush.msra.mxu0 %v1507
      %1669 = vmatpush.msra.mxu0 %v1506
      %1670 = vmatpush.msra.mxu0 %v1505
      %1671 = vmatpush.msra.mxu0 %v1504
      %1672 = vmatmul.f32.gmra.mxu0 %v1258
      %v1673 = vpop.f32.mrf.mxu0
      %v1674 = vadd.f32 %v1654, %v1673
      %1675 = vdwg.mxu0
      %1676 = vmatpush.msra.mxu0 %v1535
      %1677 = vmatpush.msra.mxu0 %v1534
      %1678 = vmatpush.msra.mxu0 %v1533
      %1679 = vmatpush.msra.mxu0 %v1532
      %1680 = vmatpush.msra.mxu0 %v1531
      %1681 = vmatpush.msra.mxu0 %v1530
      %1682 = vmatpush.msra.mxu0 %v1529
      %1683 = vmatpush.msra.mxu0 %v1528
      %1684 = vmatpush.msra.mxu0 %v1527
      %1685 = vmatpush.msra.mxu0 %v1526
      %1686 = vmatpush.msra.mxu0 %v1525
      %1687 = vmatpush.msra.mxu0 %v1524
      %1688 = vmatpush.msra.mxu0 %v1523
      %1689 = vmatpush.msra.mxu0 %v1522
      %1690 = vmatpush.msra.mxu0 %v1521
      %1691 = vmatpush.msra.mxu0 %v1520
      %1692 = vmatmul.f32.gmra.mxu0 %v1278
      %v1693 = vpop.f32.mrf.mxu0
      %v1694 = vadd.f32 %v1674, %v1693
      %1695 = vdwg.mxu0
      %1696 = vmatpush.msra.mxu0 %v1295
      %1697 = vmatpush.msra.mxu0 %v1294
      %1698 = vmatpush.msra.mxu0 %v1293
      %1699 = vmatpush.msra.mxu0 %v1292
      %1700 = vmatpush.msra.mxu0 %v1291
      %1701 = vmatpush.msra.mxu0 %v1290
      %1702 = vmatpush.msra.mxu0 %v1289
      %1703 = vmatpush.msra.mxu0 %v1288
      %1704 = vmatpush.msra.mxu0 %v1287
      %1705 = vmatpush.msra.mxu0 %v1286
      %1706 = vmatpush.msra.mxu0 %v1285
      %1707 = vmatpush.msra.mxu0 %v1284
      %1708 = vmatpush.msra.mxu0 %v1283
      %1709 = vmatpush.msra.mxu0 %v1282
      %1710 = vmatpush.msra.mxu0 %v1281
      %1711 = vmatpush.msra.mxu0 %v1280
      %1712 = vmatmul.f32.gmra.mxu0 %v923
      %v1713 = vpop.f32.mrf.mxu0
      %v1714 = vadd.f32 %v1694, %v1713
      %1715 = vdwg.mxu0
      %1716 = vmatpush.msra.mxu0 %v1311
      %1717 = vmatpush.msra.mxu0 %v1310
      %1718 = vmatpush.msra.mxu0 %v1309
      %1719 = vmatpush.msra.mxu0 %v1308
      %1720 = vmatpush.msra.mxu0 %v1307
      %1721 = vmatpush.msra.mxu0 %v1306
      %1722 = vmatpush.msra.mxu0 %v1305
      %1723 = vmatpush.msra.mxu0 %v1304
      %1724 = vmatpush.msra.mxu0 %v1303
      %1725 = vmatpush.msra.mxu0 %v1302
      %1726 = vmatpush.msra.mxu0 %v1301
      %1727 = vmatpush.msra.mxu0 %v1300
      %1728 = vmatpush.msra.mxu0 %v1299
      %1729 = vmatpush.msra.mxu0 %v1298
      %1730 = vmatpush.msra.mxu0 %v1297
      %1731 = vmatpush.msra.mxu0 %v1296
      %1732 = vmatmul.f32.gmra.mxu0 %v943
      %v1733 = vpop.f32.mrf.mxu0
      %v1734 = vadd.f32 %v1714, %v1733
      %1735 = vdwg.mxu0
      %1736 = vmatpush.msra.mxu0 %v1327
      %1737 = vmatpush.msra.mxu0 %v1326
      %1738 = vmatpush.msra.mxu0 %v1325
      %1739 = vmatpush.msra.mxu0 %v1324
      %1740 = vmatpush.msra.mxu0 %v1323
      %1741 = vmatpush.msra.mxu0 %v1322
      %1742 = vmatpush.msra.mxu0 %v1321
      %1743 = vmatpush.msra.mxu0 %v1320
      %1744 = vmatpush.msra.mxu0 %v1319
      %1745 = vmatpush.msra.mxu0 %v1318
      %1746 = vmatpush.msra.mxu0 %v1317
      %1747 = vmatpush.msra.mxu0 %v1316
      %1748 = vmatpush.msra.mxu0 %v1315
      %1749 = vmatpush.msra.mxu0 %v1314
      %1750 = vmatpush.msra.mxu0 %v1313
      %1751 = vmatpush.msra.mxu0 %v1312
      %1752 = vmatmul.f32.gmra.mxu0 %v963
      %v1753 = vpop.f32.mrf.mxu0
      %v1754 = vadd.f32 %v1734, %v1753
      %1755 = vdwg.mxu0
      %1756 = vmatpush.msra.mxu0 %v1343
      %1757 = vmatpush.msra.mxu0 %v1342
      %1758 = vmatpush.msra.mxu0 %v1341
      %1759 = vmatpush.msra.mxu0 %v1340
      %1760 = vmatpush.msra.mxu0 %v1339
      %1761 = vmatpush.msra.mxu0 %v1338
      %1762 = vmatpush.msra.mxu0 %v1337
      %1763 = vmatpush.msra.mxu0 %v1336
      %1764 = vmatpush.msra.mxu0 %v1335
      %1765 = vmatpush.msra.mxu0 %v1334
      %1766 = vmatpush.msra.mxu0 %v1333
      %1767 = vmatpush.msra.mxu0 %v1332
      %1768 = vmatpush.msra.mxu0 %v1331
      %1769 = vmatpush.msra.mxu0 %v1330
      %1770 = vmatpush.msra.mxu0 %v1329
      %1771 = vmatpush.msra.mxu0 %v1328
      %1772 = vmatmul.f32.gmra.mxu0 %v983
      %v1773 = vpop.f32.mrf.mxu0
      %v1774 = vadd.f32 %v1754, %v1773
      %1775 = vdwg.mxu0
      %1776 = vmatpush.msra.mxu0 %v1359
      %1777 = vmatpush.msra.mxu0 %v1358
      %1778 = vmatpush.msra.mxu0 %v1357
      %1779 = vmatpush.msra.mxu0 %v1356
      %1780 = vmatpush.msra.mxu0 %v1355
      %1781 = vmatpush.msra.mxu0 %v1354
      %1782 = vmatpush.msra.mxu0 %v1353
      %1783 = vmatpush.msra.mxu0 %v1352
      %1784 = vmatpush.msra.mxu0 %v1351
      %1785 = vmatpush.msra.mxu0 %v1350
      %1786 = vmatpush.msra.mxu0 %v1349
      %1787 = vmatpush.msra.mxu0 %v1348
      %1788 = vmatpush.msra.mxu0 %v1347
      %1789 = vmatpush.msra.mxu0 %v1346
      %1790 = vmatpush.msra.mxu0 %v1345
      %1791 = vmatpush.msra.mxu0 %v1344
      %1792 = vmatmul.f32.gmra.mxu0 %v1003
      %v1793 = vpop.f32.mrf.mxu0
      %v1794 = vadd.f32 %v1774, %v1793
      %1795 = vdwg.mxu0
      %1796 = vmatpush.msra.mxu0 %v1375
      %1797 = vmatpush.msra.mxu0 %v1374
      %1798 = vmatpush.msra.mxu0 %v1373
      %1799 = vmatpush.msra.mxu0 %v1372
      %1800 = vmatpush.msra.mxu0 %v1371
      %1801 = vmatpush.msra.mxu0 %v1370
      %1802 = vmatpush.msra.mxu0 %v1369
      %1803 = vmatpush.msra.mxu0 %v1368
      %1804 = vmatpush.msra.mxu0 %v1367
      %1805 = vmatpush.msra.mxu0 %v1366
      %1806 = vmatpush.msra.mxu0 %v1365
      %1807 = vmatpush.msra.mxu0 %v1364
      %1808 = vmatpush.msra.mxu0 %v1363
      %1809 = vmatpush.msra.mxu0 %v1362
      %1810 = vmatpush.msra.mxu0 %v1361
      %1811 = vmatpush.msra.mxu0 %v1360
      %1812 = vmatmul.f32.gmra.mxu0 %v1023
      %v1813 = vpop.f32.mrf.mxu0
      %v1814 = vadd.f32 %v1794, %v1813
      %1815 = vdwg.mxu0
      %1816 = vmatpush.msra.mxu0 %v1391
      %1817 = vmatpush.msra.mxu0 %v1390
      %1818 = vmatpush.msra.mxu0 %v1389
      %1819 = vmatpush.msra.mxu0 %v1388
      %1820 = vmatpush.msra.mxu0 %v1387
      %1821 = vmatpush.msra.mxu0 %v1386
      %1822 = vmatpush.msra.mxu0 %v1385
      %1823 = vmatpush.msra.mxu0 %v1384
      %1824 = vmatpush.msra.mxu0 %v1383
      %1825 = vmatpush.msra.mxu0 %v1382
      %1826 = vmatpush.msra.mxu0 %v1381
      %1827 = vmatpush.msra.mxu0 %v1380
      %1828 = vmatpush.msra.mxu0 %v1379
      %1829 = vmatpush.msra.mxu0 %v1378
      %1830 = vmatpush.msra.mxu0 %v1377
      %1831 = vmatpush.msra.mxu0 %v1376
      %1832 = vmatmul.f32.gmra.mxu0 %v1043
      %v1833 = vpop.f32.mrf.mxu0
      %v1834 = vadd.f32 %v1814, %v1833
      %1835 = vdwg.mxu0
      %1836 = vmatpush.msra.mxu0 %v1407
      %1837 = vmatpush.msra.mxu0 %v1406
      %1838 = vmatpush.msra.mxu0 %v1405
      %1839 = vmatpush.msra.mxu0 %v1404
      %1840 = vmatpush.msra.mxu0 %v1403
      %1841 = vmatpush.msra.mxu0 %v1402
      %1842 = vmatpush.msra.mxu0 %v1401
      %1843 = vmatpush.msra.mxu0 %v1400
      %1844 = vmatpush.msra.mxu0 %v1399
      %1845 = vmatpush.msra.mxu0 %v1398
      %1846 = vmatpush.msra.mxu0 %v1397
      %1847 = vmatpush.msra.mxu0 %v1396
      %1848 = vmatpush.msra.mxu0 %v1395
      %1849 = vmatpush.msra.mxu0 %v1394
      %1850 = vmatpush.msra.mxu0 %v1393
      %1851 = vmatpush.msra.mxu0 %v1392
      %1852 = vmatmul.f32.gmra.mxu0 %v1063
      %v1853 = vpop.f32.mrf.mxu0
      %v1854 = vadd.f32 %v1834, %v1853
      %1855 = vdwg.mxu0
      %v1856 = vld [vmem:[%s10] sm:$0x1]
      %v1858 = vperm.slane %v1856, 0
      %v1860 = vadd.f32 %v1854, %v1858
      %1861 = vst [vmem:[#allocation9] sm:$0x3] %v1860
    $region65: #{tpu_custom_call.1} parent=1 // pred_fallthru
      _
    // Predicated region
    $region66: #{tpu_custom_call.1} parent=1 // pred_check
      _
    $region67: #{tpu_custom_call.1} parent=1 // pred_check_branch
      %1863 = sbr.rel (0) target = $region69
    $region68: #{tpu_custom_call.1} parent=1 // pred_region
      %1865 = vsyncadd [#allocation5], 0
      %s1867 = sshll.u32 [#allocation9], 4
      %s1868 = int_to_ptr.vmem [resolvable:$true] %s1867
      %s1869 = sshll.u32 %s11, 4
      %s1870 = int_to_ptr.hbm [resolvable:$true] %s1869
      %1872 = dma.vmem_to_hbm [thread:$0]  %s1868, 32, %s1870, [#allocation5]
    $region69: #{tpu_custom_call.1} parent=1 // pred_fallthru
      _
    // Predicated region
    $region70: #{tpu_custom_call.1} parent=1 // pred_check
      _
    $region71: #{tpu_custom_call.1} parent=1 // pred_check_branch
      %1874 = sbr.rel (0) target = $region73
    $region72: #{tpu_custom_call.1} parent=1 // pred_region
      %1876 = dma.done [#allocation5], 32
    $region73: #{tpu_custom_call.1} parent=1 // pred_fallthru
      _
    %1877 = vsyncpa [#allocation4], 1
    %1878 = vsyncpa [#allocation7], 1
    %1879 = vsyncpa [#allocation5], 1

// kernel: tpu_custom_call.1
$region0: #{tpu_custom_call.1}
  #allocation0 [shape = 'u32[]', space=smem, size = 0x4, offset = 0x4, fixed_abs, tag = 'smem constant byte address 0x4 - core index']
  #allocation1 [shape = 'u32[72,128]{1,0:T(1,128)}', space=vmem, size = 0x9000, scoped, tag = 'internal scratch']
  #allocation2 [shape = 'f32[2,128]{1,0:T(2,128)}', space=vmem, size = 0x400, scoped, tag = 'scratch operand']
  %s0 = inlined_call_operand.vmem [shape: bf16[2,256,27], index: 0, kind: input, shape index: {}]
  %s1 = inlined_call_operand.vmem [shape: f32[2,32], index: 1, kind: input, shape index: {}]
  %s2 = inlined_call_operand.vmem [shape: bf16[27,128], index: 2, kind: input, shape index: {}]
  %s3 = inlined_call_operand.vmem [shape: f32[1,128], index: 3, kind: input, shape index: {}]
  %s4 = inlined_call_operand.hbm [shape: f32[128,1024], index: 4, kind: input, shape index: {}]
  %s5 = inlined_call_operand.vmem [shape: f32[1,1024], index: 5, kind: input, shape index: {}]
  %s6 = inlined_call_operand.vmem [shape: f32[32,1024], index: 6, kind: input, shape index: {}]
  %s7 = inlined_call_operand.vmem [shape: f32[1,1024], index: 7, kind: input, shape index: {}]
  %s8 = inlined_call_operand.hbm [shape: f32[1024,128], index: 8, kind: input, shape index: {}]
  %s9 = inlined_call_operand.hbm [shape: f32[1024,128], index: 9, kind: input, shape index: {}]
  %s10 = inlined_call_operand.vmem [shape: f32[1,128], index: 10, kind: input, shape index: {}]
  %s11 = inlined_call_operand.hbm [shape: f32[2,128], index: 11, kind: output, shape index: {}]
  %s12 = sld [smem:[#allocation0]]
  $region74: #{tpu_custom_call.1} parent=0
    _
  %s14 = ssub.s32 1, %s12
  %s15 = scalar_select 0, %s14, %s12
  $region1: #{tpu_custom_call.1} parent=0
    #allocation3 [shape = 'u8[524288]{0}', space=vmem, size = 0x80000, scoped, tag = 'input window, operand 4, single buffered']
    #allocation4 [shape = 's32[1]{0}', space=sflag, size = 0x4, scoped, tag = 'scoped memory for tpu_custom_call.1']
    #allocation5 [shape = 's32[1]{0}', space=sflag, size = 0x4, scoped, tag = 'scoped memory for tpu_custom_call.1']
    #allocation6 [shape = 'u8[524288]{0}', space=vmem, size = 0x80000, scoped, tag = 'input window, operand 8, single buffered']
    #allocation7 [shape = 's32[1]{0}', space=sflag, size = 0x4, scoped, tag = 'scoped memory for tpu_custom_call.1']
    #allocation8 [shape = 'u8[524288]{0}', space=vmem, size = 0x80000, scoped, tag = 'input window, operand 9, single buffered']
    #allocation9 [shape = 'u8[1024]{0}', space=vmem, size = 0x400, scoped, tag = 'output window, operand 0, single buffered']
    %16 = vsyncpa [#allocation4], 0
    %17 = vsyncpa [#allocation7], 0
    %18 = vsyncpa [#allocation5], 0
    // Predicated region
    $region2: #{tpu_custom_call.1} parent=1 // pred_check
      _
    $region3: #{tpu_custom_call.1} parent=1 // pred_check_branch
      %20 = sbr.rel (0) target = $region5
    $region4: #{tpu_custom_call.1} parent=1 // pred_region
      _
    $region5: #{tpu_custom_call.1} parent=1 // pred_fallthru
      _
    // Predicated region
    $region6: #{tpu_custom_call.1} parent=1 // pred_check
      _
    $region7: #{tpu_custom_call.1} parent=1 // pred_check_branch
      %22 = sbr.rel (0) target = $region9
    $region8: #{tpu_custom_call.1} parent=1 // pred_region
      _
    $region9: #{tpu_custom_call.1} parent=1 // pred_fallthru
      _
    // Predicated region
    $region10: #{tpu_custom_call.1} parent=1 // pred_check
      _
    $region11: #{tpu_custom_call.1} parent=1 // pred_check_branch
      %24 = sbr.rel (0) target = $region13
    $region12: #{tpu_custom_call.1} parent=1 // pred_region
      _
    $region13: #{tpu_custom_call.1} parent=1 // pred_fallthru
      _
    // Predicated region
    $region14: #{tpu_custom_call.1} parent=1 // pred_check
      _
    $region15: #{tpu_custom_call.1} parent=1 // pred_check_branch
      %26 = sbr.rel (0) target = $region17
    $region16: #{tpu_custom_call.1} parent=1 // pred_region
      _
    $region17: #{tpu_custom_call.1} parent=1 // pred_fallthru
      _
    // Predicated region
    $region18: #{tpu_custom_call.1} parent=1 // pred_check
      _
    $region19: #{tpu_custom_call.1} parent=1 // pred_check_branch
      %28 = sbr.rel (0) target = $region21
    $region20: #{tpu_custom_call.1} parent=1 // pred_region
      %30 = vsyncadd [#allocation4], 0
      %s31 = sshll.u32 %s4, 4
      %s32 = int_to_ptr.hbm [resolvable:$true] %s31
      %s33 = sshll.u32 [#allocation3], 4
      %s34 = int_to_ptr.vmem [resolvable:$true] %s33
      %39 = dma.hbm_to_vmem [thread:$0]  %s32, 16384, %s34, [#allocation4], 1024, 1024, 64
    $region21: #{tpu_custom_call.1} parent=1 // pred_fallthru
      _
    // Predicated region
    $region22: #{tpu_custom_call.1} parent=1 // pred_check
      _
    $region23: #{tpu_custom_call.1} parent=1 // pred_check_branch
      %41 = sbr.rel (0) target = $region25
    $region24: #{tpu_custom_call.1} parent=1 // pred_region
      _
    $region25: #{tpu_custom_call.1} parent=1 // pred_fallthru
      _
    // Predicated region
    $region26: #{tpu_custom_call.1} parent=1 // pred_check
      _
    $region27: #{tpu_custom_call.1} parent=1 // pred_check_branch
      %43 = sbr.rel (0) target = $region29
    $region28: #{tpu_custom_call.1} parent=1 // pred_region
      _
    $region29: #{tpu_custom_call.1} parent=1 // pred_fallthru
      _
    // Predicated region
    $region30: #{tpu_custom_call.1} parent=1 // pred_check
      _
    $region31: #{tpu_custom_call.1} parent=1 // pred_check_branch
      %45 = sbr.rel (0) target = $region33
    $region32: #{tpu_custom_call.1} parent=1 // pred_region
      _
    $region33: #{tpu_custom_call.1} parent=1 // pred_fallthru
      _
    // Predicated region
    $region34: #{tpu_custom_call.1} parent=1 // pred_check
      _
    $region35: #{tpu_custom_call.1} parent=1 // pred_check_branch
      %47 = sbr.rel (0) target = $region37
    $region36: #{tpu_custom_call.1} parent=1 // pred_region
      %49 = vsyncadd [#allocation7], 0
      %s50 = sshll.u32 %s8, 4
      %s51 = int_to_ptr.hbm [resolvable:$true] %s50
      %s52 = sshll.u32 [#allocation6], 4
      %s53 = int_to_ptr.vmem [resolvable:$true] %s52
      %58 = dma.hbm_to_vmem [thread:$0]  %s51, 16384, %s53, [#allocation7], 128, 128, 8
    $region37: #{tpu_custom_call.1} parent=1 // pred_fallthru
      _
    // Predicated region
    $region38: #{tpu_custom_call.1} parent=1 // pred_check
      _
    $region39: #{tpu_custom_call.1} parent=1 // pred_check_branch
      %60 = sbr.rel (0) target = $region41
    $region40: #{tpu_custom_call.1} parent=1 // pred_region
      %62 = vsyncadd [#allocation7], 0
      %s63 = sshll.u32 %s9, 4
      %s64 = int_to_ptr.hbm [resolvable:$true] %s63
      %s65 = sshll.u32 [#allocation8], 4
      %s66 = int_to_ptr.vmem [resolvable:$true] %s65
      %71 = dma.hbm_to_vmem [thread:$0]  %s64, 16384, %s66, [#allocation7], 128, 128, 8
    $region41: #{tpu_custom_call.1} parent=1 // pred_fallthru
      _
    // Predicated region
    $region42: #{tpu_custom_call.1} parent=1 // pred_check
      _
    $region43: #{tpu_custom_call.1} parent=1 // pred_check_branch
      %73 = sbr.rel (0) target = $region45
    $region44: #{tpu_custom_call.1} parent=1 // pred_region
      _
    $region45: #{tpu_custom_call.1} parent=1 // pred_fallthru
      _
    // Predicated region
    $region46: #{tpu_custom_call.1} parent=1 // pred_check
      _
    $region47: #{tpu_custom_call.1} parent=1 // pred_check_branch
      %75 = sbr.rel (0) target = $region49
    $region48: #{tpu_custom_call.1} parent=1 // pred_region
      %77 = dma.done [#allocation4], 16384
    $region49: #{tpu_custom_call.1} parent=1 // pred_fallthru
      _
    // Predicated region
    $region50: #{tpu_custom_call.1} parent=1 // pred_check
      _
    $region51: #{tpu_custom_call.1} parent=1 // pred_check_branch
      %79 = sbr.rel (0) target = $region53
    $region52: #{tpu_custom_call.1} parent=1 // pred_region
      %81 = dma.done [#allocation7], 16384
    $region53: #{tpu_custom_call.1} parent=1 // pred_fallthru
      _
    // Predicated region
    $region54: #{tpu_custom_call.1} parent=1 // pred_check
      _
    $region55: #{tpu_custom_call.1} parent=1 // pred_check_branch
      %83 = sbr.rel (0) target = $region57
    $region56: #{tpu_custom_call.1} parent=1 // pred_region
      %85 = dma.done [#allocation7], 16384
    $region57: #{tpu_custom_call.1} parent=1 // pred_fallthru
      _
    %p87 = scmp.eq.s32.totalorder 0, 0
    // Predicated region
    $region58: #{tpu_custom_call.1} parent=1 // pred_check
      %p88 = pneg %p87
    $region59: #{tpu_custom_call.1} parent=1 // pred_check_branch
      %90 = sbr.rel (%p88) target = $region61
    $region60: #{tpu_custom_call.1} parent=1 // pred_region
      %91 = vst [vmem:[#allocation2] sm:$0x3] 0.0
    $region61: #{tpu_custom_call.1} parent=1 // pred_fallthru
      _
    %v92 = vld [vmem:[%s0] sm:$0xf]
    %v93 = vld [vmem:[%s0 + $0x4] sm:$0xf]
    %v94 = vld [vmem:[%s0 + $0x8] sm:$0xf]
    %v95 = vld [vmem:[%s0 + $0xc] sm:$0xf]
    %v96 = vld [vmem:[%s0 + $0x10] sm:$0xf]
    %v97 = vld [vmem:[%s0 + $0x14] sm:$0xf]
    %v98 = vld [vmem:[%s0 + $0x18] sm:$0xf]
    %v99 = vld [vmem:[%s0 + $0x1c] sm:$0xf]
    %v100 = vld [vmem:[%s0 + $0x20] sm:$0xf]
    %v101 = vld [vmem:[%s0 + $0x24] sm:$0xf]
    %v102 = vld [vmem:[%s0 + $0x28] sm:$0xf]
    %v103 = vld [vmem:[%s0 + $0x2c] sm:$0xf]
    %v104 = vld [vmem:[%s0 + $0x30] sm:$0xf]
    %v105 = vld [vmem:[%s0 + $0x34] sm:$0xf]
    %v106 = vld [vmem:[%s0 + $0x38] sm:$0xf]
    %v107 = vld [vmem:[%s0 + $0x3c] sm:$0xf]
    %v108 = vld [vmem:[%s0 + $0x40] sm:$0xf]
    %v109 = vld [vmem:[%s0 + $0x44] sm:$0xf]
    %v110 = vld [vmem:[%s0 + $0x48] sm:$0xf]
    %v111 = vld [vmem:[%s0 + $0x4c] sm:$0xf]
    %v112 = vld [vmem:[%s0 + $0x50] sm:$0xf]
    %v113 = vld [vmem:[%s0 + $0x54] sm:$0xf]
    %v114 = vld [vmem:[%s0 + $0x58] sm:$0xf]
    %v115 = vld [vmem:[%s0 + $0x5c] sm:$0xf]
    %v116 = vld [vmem:[%s0 + $0x60] sm:$0xf]
    %v117 = vld [vmem:[%s0 + $0x64] sm:$0xf]
    %v118 = vld [vmem:[%s0 + $0x68] sm:$0xf]
    %v119 = vld [vmem:[%s0 + $0x6c] sm:$0xf]
    %v120 = vld [vmem:[%s0 + $0x70] sm:$0xf]
    %v121 = vld [vmem:[%s0 + $0x74] sm:$0xf]
    %v122 = vld [vmem:[%s0 + $0x78] sm:$0xf]
    %v123 = vld [vmem:[%s0 + $0x7c] sm:$0xf]
    %v124 = vld [vmem:[%s0 + $0x80] sm:$0xf]
    %v125 = vld [vmem:[%s0 + $0x84] sm:$0xf]
    %v126 = vld [vmem:[%s0 + $0x88] sm:$0xf]
    %v127 = vld [vmem:[%s0 + $0x8c] sm:$0xf]
    %v128 = vld [vmem:[%s0 + $0x90] sm:$0xf]
    %v129 = vld [vmem:[%s0 + $0x94] sm:$0xf]
    %v130 = vld [vmem:[%s0 + $0x98] sm:$0xf]
    %v131 = vld [vmem:[%s0 + $0x9c] sm:$0xf]
    %v132 = vld [vmem:[%s0 + $0xa0] sm:$0xf]
    %v133 = vld [vmem:[%s0 + $0xa4] sm:$0xf]
    %v134 = vld [vmem:[%s0 + $0xa8] sm:$0xf]
    %v135 = vld [vmem:[%s0 + $0xac] sm:$0xf]
    %v136 = vld [vmem:[%s0 + $0xb0] sm:$0xf]
    %v137 = vld [vmem:[%s0 + $0xb4] sm:$0xf]
    %v138 = vld [vmem:[%s0 + $0xb8] sm:$0xf]
    %v139 = vld [vmem:[%s0 + $0xbc] sm:$0xf]
    %v140 = vld [vmem:[%s0 + $0xc0] sm:$0xf]
    %v141 = vld [vmem:[%s0 + $0xc4] sm:$0xf]
    %v142 = vld [vmem:[%s0 + $0xc8] sm:$0xf]
    %v143 = vld [vmem:[%s0 + $0xcc] sm:$0xf]
    %v144 = vld [vmem:[%s0 + $0xd0] sm:$0xf]
    %v145 = vld [vmem:[%s0 + $0xd4] sm:$0xf]
    %v146 = vld [vmem:[%s0 + $0xd8] sm:$0xf]
    %v147 = vld [vmem:[%s0 + $0xdc] sm:$0xf]
    %v148 = vld [vmem:[%s0 + $0xe0] sm:$0xf]
    %v149 = vld [vmem:[%s0 + $0xe4] sm:$0xf]
    %v150 = vld [vmem:[%s0 + $0xe8] sm:$0xf]
    %v151 = vld [vmem:[%s0 + $0xec] sm:$0xf]
    %v152 = vld [vmem:[%s0 + $0xf0] sm:$0xf]
    %v153 = vld [vmem:[%s0 + $0xf4] sm:$0xf]
    %v154 = vld [vmem:[%s0 + $0xf8] sm:$0xf]
    %v155 = vld [vmem:[%s0 + $0xfc] sm:$0xf]
    %v156 = vld [vmem:[%s2] sm:$0xf]
    %v157 = vld [vmem:[%s2 + $0x4] sm:$0xf]
    %v158 = vld [vmem:[%s2 + $0x8] sm:$0xf]
    %v159 = vld [vmem:[%s2 + $0xc] sm:$0x3]
    %v160 = vld [vmem:[%s3] sm:$0x1]
    %v162 = vperm.slane %v160, 0
    %v228 = vunpack.c.l.b16 %v92
    %v229 = vunpack.c.l.b16 %v93
    %v230 = vunpack.c.l.b16 %v94
    %v231 = vunpack.c.l.b16 %v95
    %v232 = vunpack.c.l.b16 %v96
    %v233 = vunpack.c.l.b16 %v97
    %v234 = vunpack.c.l.b16 %v98
    %v235 = vunpack.c.l.b16 %v99
    %v236 = vunpack.c.l.b16 %v100
    %v237 = vunpack.c.l.b16 %v101
    %v238 = vunpack.c.l.b16 %v102
    %v239 = vunpack.c.l.b16 %v103
    %v240 = vunpack.c.l.b16 %v104
    %v241 = vunpack.c.l.b16 %v105
    %v242 = vunpack.c.l.b16 %v106
    %v243 = vunpack.c.l.b16 %v107
    %v244 = vunpack.c.l.b16 %v108
    %v245 = vunpack.c.l.b16 %v109
    %v246 = vunpack.c.l.b16 %v110
    %v247 = vunpack.c.l.b16 %v111
    %v248 = vunpack.c.l.b16 %v112
    %v249 = vunpack.c.l.b16 %v113
    %v250 = vunpack.c.l.b16 %v114
    %v251 = vunpack.c.l.b16 %v115
    %v252 = vunpack.c.l.b16 %v116
    %v253 = vunpack.c.l.b16 %v117
    %v254 = vunpack.c.l.b16 %v118
    %v255 = vunpack.c.l.b16 %v119
    %v256 = vunpack.c.l.b16 %v120
    %v257 = vunpack.c.l.b16 %v121
    %v258 = vunpack.c.l.b16 %v122
    %v259 = vunpack.c.l.b16 %v123
    %v260 = vunpack.c.l.b16 %v124
    %v261 = vunpack.c.l.b16 %v125
    %v262 = vunpack.c.l.b16 %v126
    %v263 = vunpack.c.l.b16 %v127
    %v264 = vunpack.c.l.b16 %v128
    %v265 = vunpack.c.l.b16 %v129
    %v266 = vunpack.c.l.b16 %v130
    %v267 = vunpack.c.l.b16 %v131
    %v268 = vunpack.c.l.b16 %v132
    %v269 = vunpack.c.l.b16 %v133
    %v270 = vunpack.c.l.b16 %v134
    %v271 = vunpack.c.l.b16 %v135
    %v272 = vunpack.c.l.b16 %v136
    %v273 = vunpack.c.l.b16 %v137
    %v274 = vunpack.c.l.b16 %v138
    %v275 = vunpack.c.l.b16 %v139
    %v276 = vunpack.c.l.b16 %v140
    %v277 = vunpack.c.l.b16 %v141
    %v278 = vunpack.c.l.b16 %v142
    %v279 = vunpack.c.l.b16 %v143
    %v280 = vunpack.c.l.b16 %v144
    %v281 = vunpack.c.l.b16 %v145
    %v282 = vunpack.c.l.b16 %v146
    %v283 = vunpack.c.l.b16 %v147
    %v284 = vunpack.c.l.b16 %v148
    %v285 = vunpack.c.l.b16 %v149
    %v286 = vunpack.c.l.b16 %v150
    %v287 = vunpack.c.l.b16 %v151
    %v288 = vunpack.c.l.b16 %v152
    %v289 = vunpack.c.l.b16 %v153
    %v290 = vunpack.c.l.b16 %v154
    %v291 = vunpack.c.l.b16 %v155
    %v292 = vpack.c.b16 %v229, %v228
    %v293 = vpack.c.b16 %v231, %v230
    %v294 = vpack.c.b16 %v233, %v232
    %v295 = vpack.c.b16 %v235, %v234
    %v296 = vpack.c.b16 %v237, %v236
    %v297 = vpack.c.b16 %v239, %v238
    %v298 = vpack.c.b16 %v241, %v240
    %v299 = vpack.c.b16 %v243, %v242
    %v300 = vpack.c.b16 %v245, %v244
    %v301 = vpack.c.b16 %v247, %v246
    %v302 = vpack.c.b16 %v249, %v248
    %v303 = vpack.c.b16 %v251, %v250
    %v304 = vpack.c.b16 %v253, %v252
    %v305 = vpack.c.b16 %v255, %v254
    %v306 = vpack.c.b16 %v257, %v256
    %v307 = vpack.c.b16 %v259, %v258
    %v308 = vpack.c.b16 %v261, %v260
    %v309 = vpack.c.b16 %v263, %v262
    %v310 = vpack.c.b16 %v265, %v264
    %v311 = vpack.c.b16 %v267, %v266
    %v312 = vpack.c.b16 %v269, %v268
    %v313 = vpack.c.b16 %v271, %v270
    %v314 = vpack.c.b16 %v273, %v272
    %v315 = vpack.c.b16 %v275, %v274
    %v316 = vpack.c.b16 %v277, %v276
    %v317 = vpack.c.b16 %v279, %v278
    %v318 = vpack.c.b16 %v281, %v280
    %v319 = vpack.c.b16 %v283, %v282
    %v320 = vpack.c.b16 %v285, %v284
    %v321 = vpack.c.b16 %v287, %v286
    %v322 = vpack.c.b16 %v289, %v288
    %v323 = vpack.c.b16 %v291, %v290
    %v328 = vunpack.c.l.b16 %v156
    %v329 = vunpack.c.l.b16 %v157
    %v330 = vunpack.c.l.b16 %v158
    %v331 = vunpack.c.l.b16 %v159
    %v332 = vpack.c.b16 %v329, %v328
    %v333 = vpack.c.b16 %v331, %v330
    %vm335 = vcmask 220160
    %v337 = vsel %vm335, %v292, 0
    %v340 = vsel %vm335, %v293, 0
    %v343 = vsel %vm335, %v294, 0
    %v346 = vsel %vm335, %v295, 0
    %v349 = vsel %vm335, %v296, 0
    %v352 = vsel %vm335, %v297, 0
    %v355 = vsel %vm335, %v298, 0
    %v358 = vsel %vm335, %v299, 0
    %v361 = vsel %vm335, %v300, 0
    %v364 = vsel %vm335, %v301, 0
    %v367 = vsel %vm335, %v302, 0
    %v370 = vsel %vm335, %v303, 0
    %v373 = vsel %vm335, %v304, 0
    %v376 = vsel %vm335, %v305, 0
    %v379 = vsel %vm335, %v306, 0
    %v382 = vsel %vm335, %v307, 0
    %v385 = vsel %vm335, %v308, 0
    %v388 = vsel %vm335, %v309, 0
    %v391 = vsel %vm335, %v310, 0
    %v394 = vsel %vm335, %v311, 0
    %v397 = vsel %vm335, %v312, 0
    %v400 = vsel %vm335, %v313, 0
    %v403 = vsel %vm335, %v314, 0
    %v406 = vsel %vm335, %v315, 0
    %v409 = vsel %vm335, %v316, 0
    %v412 = vsel %vm335, %v317, 0
    %v415 = vsel %vm335, %v318, 0
    %v418 = vsel %vm335, %v319, 0
    %v421 = vsel %vm335, %v320, 0
    %v424 = vsel %vm335, %v321, 0
    %v427 = vsel %vm335, %v322, 0
    %v430 = vsel %vm335, %v323, 0
    %vm432 = vcmask 1044480
    %vm433 = vcmask 1045504
    %v434 = vsel %vm432, 4294967295, 65535
    %v435 = vsel %vm433, %v434, 0
    %v437 = vand.u32 %v333, %v435
    %439 = vmatpush.bf16.msra.mxu0 0
    %440 = vmatpush.bf16.msra.mxu0 0
    %441 = vmatpush.bf16.msra.mxu0 0
    %442 = vmatpush.bf16.msra.mxu0 0
    %443 = vmatpush.bf16.msra.mxu0 0
    %444 = vmatpush.bf16.msra.mxu0 0
    %445 = vmatpush.bf16.msra.mxu0 %v437
    %446 = vmatpush.bf16.msra.mxu0 %v332
    %447 = vmatmul.bf16.gmra.mxu0 %v337
    %v448 = vpop.f32.mrf.mxu0
    %v449 = vadd.f32 %v162, %v448
    %v450 = vpop.f32.mrf.mxu0
    %v451 = vadd.f32 %v162, %v450
    %452 = vmatmul.bf16.gmra.mxu0 %v340
    %v453 = vpop.f32.mrf.mxu0
    %v454 = vadd.f32 %v162, %v453
    %v455 = vpop.f32.mrf.mxu0
    %v456 = vadd.f32 %v162, %v455
    %457 = vmatmul.bf16.gmra.mxu0 %v343
    %v458 = vpop.f32.mrf.mxu0
    %v459 = vadd.f32 %v162, %v458
    %v460 = vpop.f32.mrf.mxu0
    %v461 = vadd.f32 %v162, %v460
    %462 = vmatmul.bf16.gmra.mxu0 %v346
    %v463 = vpop.f32.mrf.mxu0
    %v464 = vadd.f32 %v162, %v463
    %v465 = vpop.f32.mrf.mxu0
    %v466 = vadd.f32 %v162, %v465
    %467 = vmatmul.bf16.gmra.mxu0 %v349
    %v468 = vpop.f32.mrf.mxu0
    %v469 = vadd.f32 %v162, %v468
    %v470 = vpop.f32.mrf.mxu0
    %v471 = vadd.f32 %v162, %v470
    %472 = vmatmul.bf16.gmra.mxu0 %v352
    %v473 = vpop.f32.mrf.mxu0
    %v474 = vadd.f32 %v162, %v473
    %v475 = vpop.f32.mrf.mxu0
    %v476 = vadd.f32 %v162, %v475
    %477 = vmatmul.bf16.gmra.mxu0 %v355
    %v478 = vpop.f32.mrf.mxu0
    %v479 = vadd.f32 %v162, %v478
    %v480 = vpop.f32.mrf.mxu0
    %v481 = vadd.f32 %v162, %v480
    %482 = vmatmul.bf16.gmra.mxu0 %v358
    %v483 = vpop.f32.mrf.mxu0
    %v484 = vadd.f32 %v162, %v483
    %v485 = vpop.f32.mrf.mxu0
    %v486 = vadd.f32 %v162, %v485
    %487 = vmatmul.bf16.gmra.mxu0 %v361
    %v488 = vpop.f32.mrf.mxu0
    %v489 = vadd.f32 %v162, %v488
    %v490 = vpop.f32.mrf.mxu0
    %v491 = vadd.f32 %v162, %v490
    %492 = vmatmul.bf16.gmra.mxu0 %v364
    %v493 = vpop.f32.mrf.mxu0
    %v494 = vadd.f32 %v162, %v493
    %v495 = vpop.f32.mrf.mxu0
    %v496 = vadd.f32 %v162, %v495
    %497 = vmatmul.bf16.gmra.mxu0 %v367
    %v498 = vpop.f32.mrf.mxu0
    %v499 = vadd.f32 %v162, %v498
    %v500 = vpop.f32.mrf.mxu0
    %v501 = vadd.f32 %v162, %v500
    %502 = vmatmul.bf16.gmra.mxu0 %v370
    %v503 = vpop.f32.mrf.mxu0
    %v504 = vadd.f32 %v162, %v503
    %v505 = vpop.f32.mrf.mxu0
    %v506 = vadd.f32 %v162, %v505
    %507 = vmatmul.bf16.gmra.mxu0 %v373
    %v508 = vpop.f32.mrf.mxu0
    %v509 = vadd.f32 %v162, %v508
    %v510 = vpop.f32.mrf.mxu0
    %v511 = vadd.f32 %v162, %v510
    %512 = vmatmul.bf16.gmra.mxu0 %v376
    %v513 = vpop.f32.mrf.mxu0
    %v514 = vadd.f32 %v162, %v513
    %v515 = vpop.f32.mrf.mxu0
    %v516 = vadd.f32 %v162, %v515
    %517 = vmatmul.bf16.gmra.mxu0 %v379
    %v518 = vpop.f32.mrf.mxu0
    %v519 = vadd.f32 %v162, %v518
    %v520 = vpop.f32.mrf.mxu0
    %v521 = vadd.f32 %v162, %v520
    %522 = vmatmul.bf16.gmra.mxu0 %v382
    %v523 = vpop.f32.mrf.mxu0
    %v524 = vadd.f32 %v162, %v523
    %v525 = vpop.f32.mrf.mxu0
    %v526 = vadd.f32 %v162, %v525
    %527 = vmatmul.bf16.gmra.mxu0 %v385
    %v528 = vpop.f32.mrf.mxu0
    %v529 = vadd.f32 %v162, %v528
    %v530 = vpop.f32.mrf.mxu0
    %v531 = vadd.f32 %v162, %v530
    %532 = vmatmul.bf16.gmra.mxu0 %v388
    %v533 = vpop.f32.mrf.mxu0
    %v534 = vadd.f32 %v162, %v533
    %v535 = vpop.f32.mrf.mxu0
    %v536 = vadd.f32 %v162, %v535
    %537 = vmatmul.bf16.gmra.mxu0 %v391
    %v538 = vpop.f32.mrf.mxu0
    %v539 = vadd.f32 %v162, %v538
    %v540 = vpop.f32.mrf.mxu0
    %v541 = vadd.f32 %v162, %v540
    %542 = vmatmul.bf16.gmra.mxu0 %v394
    %v543 = vpop.f32.mrf.mxu0
    %v544 = vadd.f32 %v162, %v543
    %v545 = vpop.f32.mrf.mxu0
    %v546 = vadd.f32 %v162, %v545
    %547 = vmatmul.bf16.gmra.mxu0 %v397
    %v548 = vpop.f32.mrf.mxu0
    %v549 = vadd.f32 %v162, %v548
    %v550 = vpop.f32.mrf.mxu0
    %v551 = vadd.f32 %v162, %v550
    %552 = vmatmul.bf16.gmra.mxu0 %v400
    %v553 = vpop.f32.mrf.mxu0
    %v554 = vadd.f32 %v162, %v553
    %v555 = vpop.f32.mrf.mxu0
    %v556 = vadd.f32 %v162, %v555
    %557 = vmatmul.bf16.gmra.mxu0 %v403
    %v558 = vpop.f32.mrf.mxu0
    %v559 = vadd.f32 %v162, %v558
    %v560 = vpop.f32.mrf.mxu0
    %v561 = vadd.f32 %v162, %v560
    %562 = vmatmul.bf16.gmra.mxu0 %v406
    %v563 = vpop.f32.mrf.mxu0
    %v564 = vadd.f32 %v162, %v563
    %v565 = vpop.f32.mrf.mxu0
    %v566 = vadd.f32 %v162, %v565
    %567 = vmatmul.bf16.gmra.mxu0 %v409
    %v568 = vpop.f32.mrf.mxu0
    %v569 = vadd.f32 %v162, %v568
    %v570 = vpop.f32.mrf.mxu0
    %v571 = vadd.f32 %v162, %v570
    %572 = vmatmul.bf16.gmra.mxu0 %v412
    %v573 = vpop.f32.mrf.mxu0
    %v574 = vadd.f32 %v162, %v573
    %v575 = vpop.f32.mrf.mxu0
    %v576 = vadd.f32 %v162, %v575
    %577 = vmatmul.bf16.gmra.mxu0 %v415
    %v578 = vpop.f32.mrf.mxu0
    %v579 = vadd.f32 %v162, %v578
    %v580 = vpop.f32.mrf.mxu0
    %v581 = vadd.f32 %v162, %v580
    %582 = vmatmul.bf16.gmra.mxu0 %v418
    %v583 = vpop.f32.mrf.mxu0
    %v584 = vadd.f32 %v162, %v583
    %v585 = vpop.f32.mrf.mxu0
    %v586 = vadd.f32 %v162, %v585
    %587 = vmatmul.bf16.gmra.mxu0 %v421
    %v588 = vpop.f32.mrf.mxu0
    %v589 = vadd.f32 %v162, %v588
    %v590 = vpop.f32.mrf.mxu0
    %v591 = vadd.f32 %v162, %v590
    %592 = vmatmul.bf16.gmra.mxu0 %v424
    %v593 = vpop.f32.mrf.mxu0
    %v594 = vadd.f32 %v162, %v593
    %v595 = vpop.f32.mrf.mxu0
    %v596 = vadd.f32 %v162, %v595
    %597 = vmatmul.bf16.gmra.mxu0 %v427
    %v598 = vpop.f32.mrf.mxu0
    %v599 = vadd.f32 %v162, %v598
    %v600 = vpop.f32.mrf.mxu0
    %v601 = vadd.f32 %v162, %v600
    %602 = vmatmul.bf16.gmra.mxu0 %v430
    %v603 = vpop.f32.mrf.mxu0
    %v604 = vadd.f32 %v162, %v603
    %v605 = vpop.f32.mrf.mxu0
    %v606 = vadd.f32 %v162, %v605
    %607 = vdwg.mxu0
    %v608 = vmax.f32 %v449, 0.0
    %v609 = vmax.f32 %v451, 0.0
    %v610 = vmax.f32 %v454, 0.0
    %v611 = vmax.f32 %v456, 0.0
    %v612 = vmax.f32 %v459, 0.0
    %v613 = vmax.f32 %v461, 0.0
    %v614 = vmax.f32 %v464, 0.0
    %v615 = vmax.f32 %v466, 0.0
    %v616 = vmax.f32 %v469, 0.0
    %v617 = vmax.f32 %v471, 0.0
    %v618 = vmax.f32 %v474, 0.0
    %v619 = vmax.f32 %v476, 0.0
    %v620 = vmax.f32 %v479, 0.0
    %v621 = vmax.f32 %v481, 0.0
    %v622 = vmax.f32 %v484, 0.0
    %v623 = vmax.f32 %v486, 0.0
    %v624 = vmax.f32 %v489, 0.0
    %v625 = vmax.f32 %v491, 0.0
    %v626 = vmax.f32 %v494, 0.0
    %v627 = vmax.f32 %v496, 0.0
    %v628 = vmax.f32 %v499, 0.0
    %v629 = vmax.f32 %v501, 0.0
    %v630 = vmax.f32 %v504, 0.0
    %v631 = vmax.f32 %v506, 0.0
    %v632 = vmax.f32 %v509, 0.0
    %v633 = vmax.f32 %v511, 0.0
    %v634 = vmax.f32 %v514, 0.0
    %v635 = vmax.f32 %v516, 0.0
    %v636 = vmax.f32 %v519, 0.0
    %v637 = vmax.f32 %v521, 0.0
    %v638 = vmax.f32 %v524, 0.0
    %v639 = vmax.f32 %v526, 0.0
    %v640 = vmax.f32 %v529, 0.0
    %v641 = vmax.f32 %v531, 0.0
    %v642 = vmax.f32 %v534, 0.0
    %v643 = vmax.f32 %v536, 0.0
    %v644 = vmax.f32 %v539, 0.0
    %v645 = vmax.f32 %v541, 0.0
    %v646 = vmax.f32 %v544, 0.0
    %v647 = vmax.f32 %v546, 0.0
    %v648 = vmax.f32 %v549, 0.0
    %v649 = vmax.f32 %v551, 0.0
    %v650 = vmax.f32 %v554, 0.0
    %v651 = vmax.f32 %v556, 0.0
    %v652 = vmax.f32 %v559, 0.0
    %v653 = vmax.f32 %v561, 0.0
    %v654 = vmax.f32 %v564, 0.0
    %v655 = vmax.f32 %v566, 0.0
    %v656 = vmax.f32 %v569, 0.0
    %v657 = vmax.f32 %v571, 0.0
    %v658 = vmax.f32 %v574, 0.0
    %v659 = vmax.f32 %v576, 0.0
    %v660 = vmax.f32 %v579, 0.0
    %v661 = vmax.f32 %v581, 0.0
    %v662 = vmax.f32 %v584, 0.0
    %v663 = vmax.f32 %v586, 0.0
    %v664 = vmax.f32 %v589, 0.0
    %v665 = vmax.f32 %v591, 0.0
    %v666 = vmax.f32 %v594, 0.0
    %v667 = vmax.f32 %v596, 0.0
    %v668 = vmax.f32 %v599, 0.0
    %v669 = vmax.f32 %v601, 0.0
    %v670 = vmax.f32 %v604, 0.0
    %v671 = vmax.f32 %v606, 0.0
    %v672 = vld [vmem:[#allocation2] sm:$0x3]
    %v673 = vadd.f32 %v608, %v609
    %v674 = vadd.f32 %v673, %v610
    %v675 = vadd.f32 %v674, %v611
    %v676 = vadd.f32 %v675, %v612
    %v677 = vadd.f32 %v676, %v613
    %v678 = vadd.f32 %v677, %v614
    %v679 = vadd.f32 %v678, %v615
    %v680 = vadd.f32 %v679, %v616
    %v681 = vadd.f32 %v680, %v617
    %v682 = vadd.f32 %v681, %v618
    %v683 = vadd.f32 %v682, %v619
    %v684 = vadd.f32 %v683, %v620
    %v685 = vadd.f32 %v684, %v621
    %v686 = vadd.f32 %v685, %v622
    %v687 = vadd.f32 %v686, %v623
    %v688 = vadd.f32 %v687, %v624
    %v689 = vadd.f32 %v688, %v625
    %v690 = vadd.f32 %v689, %v626
    %v691 = vadd.f32 %v690, %v627
    %v692 = vadd.f32 %v691, %v628
    %v693 = vadd.f32 %v692, %v629
    %v694 = vadd.f32 %v693, %v630
    %v695 = vadd.f32 %v694, %v631
    %v696 = vadd.f32 %v695, %v632
    %v697 = vadd.f32 %v696, %v633
    %v698 = vadd.f32 %v697, %v634
    %v699 = vadd.f32 %v698, %v635
    %v700 = vadd.f32 %v699, %v636
    %v701 = vadd.f32 %v700, %v637
    %v702 = vadd.f32 %v701, %v638
    %v703 = vadd.f32 %v702, %v639
    %v704 = vrot.slane %v703, 4
    %v705 = vadd.f32 %v703, %v704
    %v706 = vrot.slane %v705, 2
    %v707 = vadd.f32 %v705, %v706
    %v708 = vrot.slane %v707, 1
    %v709 = vadd.f32 %v707, %v708
    %v710 = vadd.f32 %v640, %v641
    %v711 = vadd.f32 %v710, %v642
    %v712 = vadd.f32 %v711, %v643
    %v713 = vadd.f32 %v712, %v644
    %v714 = vadd.f32 %v713, %v645
    %v715 = vadd.f32 %v714, %v646
    %v716 = vadd.f32 %v715, %v647
    %v717 = vadd.f32 %v716, %v648
    %v718 = vadd.f32 %v717, %v649
    %v719 = vadd.f32 %v718, %v650
    %v720 = vadd.f32 %v719, %v651
    %v721 = vadd.f32 %v720, %v652
    %v722 = vadd.f32 %v721, %v653
    %v723 = vadd.f32 %v722, %v654
    %v724 = vadd.f32 %v723, %v655
    %v725 = vadd.f32 %v724, %v656
    %v726 = vadd.f32 %v725, %v657
    %v727 = vadd.f32 %v726, %v658
    %v728 = vadd.f32 %v727, %v659
    %v729 = vadd.f32 %v728, %v660
    %v730 = vadd.f32 %v729, %v661
    %v731 = vadd.f32 %v730, %v662
    %v732 = vadd.f32 %v731, %v663
    %v733 = vadd.f32 %v732, %v664
    %v734 = vadd.f32 %v733, %v665
    %v735 = vadd.f32 %v734, %v666
    %v736 = vadd.f32 %v735, %v667
    %v737 = vadd.f32 %v736, %v668
    %v738 = vadd.f32 %v737, %v669
    %v739 = vadd.f32 %v738, %v670
    %v740 = vadd.f32 %v739, %v671
    %v741 = vrot.slane %v740, 4
    %v742 = vadd.f32 %v740, %v741
    %v743 = vrot.slane %v742, 2
    %v744 = vadd.f32 %v742, %v743
    %v745 = vrot.slane %v744, 1
    %v746 = vadd.f32 %v744, %v745
    %vm749 = vcmask 1041409
    %v750 = vsel %vm749, %v746, %v709
    %v752 = vadd.f32 %v672, %v750
    %753 = vst [vmem:[#allocation2] sm:$0x3] %v752
    // Predicated region
    $region62: #{tpu_custom_call.1} parent=1 // pred_check
      %p754 = pneg %p87
    $region63: #{tpu_custom_call.1} parent=1 // pred_check_branch
      %756 = sbr.rel (%p754) target = $region65
    $region64: #{tpu_custom_call.1} parent=1 // pred_region
      %v757 = vld [vmem:[#allocation2] sm:$0x3]
      %v758 = vmul.f32 %v757, 0.00390625
      %v759 = vld [vmem:[#allocation3] sm:$0xff]
      %v760 = vld [vmem:[#allocation3 + $0x8] sm:$0xff]
      %v761 = vld [vmem:[#allocation3 + $0x10] sm:$0xff]
      %v762 = vld [vmem:[#allocation3 + $0x18] sm:$0xff]
      %v763 = vld [vmem:[#allocation3 + $0x20] sm:$0xff]
      %v764 = vld [vmem:[#allocation3 + $0x28] sm:$0xff]
      %v765 = vld [vmem:[#allocation3 + $0x30] sm:$0xff]
      %v766 = vld [vmem:[#allocation3 + $0x38] sm:$0xff]
      %v767 = vld [vmem:[#allocation3 + $0x40] sm:$0xff]
      %v768 = vld [vmem:[#allocation3 + $0x48] sm:$0xff]
      %v769 = vld [vmem:[#allocation3 + $0x50] sm:$0xff]
      %v770 = vld [vmem:[#allocation3 + $0x58] sm:$0xff]
      %v771 = vld [vmem:[#allocation3 + $0x60] sm:$0xff]
      %v772 = vld [vmem:[#allocation3 + $0x68] sm:$0xff]
      %v773 = vld [vmem:[#allocation3 + $0x70] sm:$0xff]
      %v774 = vld [vmem:[#allocation3 + $0x78] sm:$0xff]
      %v775 = vld [vmem:[#allocation3 + $0x80] sm:$0xff]
      %v776 = vld [vmem:[#allocation3 + $0x88] sm:$0xff]
      %v777 = vld [vmem:[#allocation3 + $0x90] sm:$0xff]
      %v778 = vld [vmem:[#allocation3 + $0x98] sm:$0xff]
      %v779 = vld [vmem:[#allocation3 + $0xa0] sm:$0xff]
      %v780 = vld [vmem:[#allocation3 + $0xa8] sm:$0xff]
      %v781 = vld [vmem:[#allocation3 + $0xb0] sm:$0xff]
      %v782 = vld [vmem:[#allocation3 + $0xb8] sm:$0xff]
      %v783 = vld [vmem:[#allocation3 + $0xc0] sm:$0xff]
      %v784 = vld [vmem:[#allocation3 + $0xc8] sm:$0xff]
      %v785 = vld [vmem:[#allocation3 + $0xd0] sm:$0xff]
      %v786 = vld [vmem:[#allocation3 + $0xd8] sm:$0xff]
      %v787 = vld [vmem:[#allocation3 + $0xe0] sm:$0xff]
      %v788 = vld [vmem:[#allocation3 + $0xe8] sm:$0xff]
      %v789 = vld [vmem:[#allocation3 + $0xf0] sm:$0xff]
      %v790 = vld [vmem:[#allocation3 + $0xf8] sm:$0xff]
      %v791 = vld [vmem:[#allocation3 + $0x100] sm:$0xff]
      %v792 = vld [vmem:[#allocation3 + $0x108] sm:$0xff]
      %v793 = vld [vmem:[#allocation3 + $0x110] sm:$0xff]
      %v794 = vld [vmem:[#allocation3 + $0x118] sm:$0xff]
      %v795 = vld [vmem:[#allocation3 + $0x120] sm:$0xff]
      %v796 = vld [vmem:[#allocation3 + $0x128] sm:$0xff]
      %v797 = vld [vmem:[#allocation3 + $0x130] sm:$0xff]
      %v798 = vld [vmem:[#allocation3 + $0x138] sm:$0xff]
      %v799 = vld [vmem:[#allocation3 + $0x140] sm:$0xff]
      %v800 = vld [vmem:[#allocation3 + $0x148] sm:$0xff]
      %v801 = vld [vmem:[#allocation3 + $0x150] sm:$0xff]
      %v802 = vld [vmem:[#allocation3 + $0x158] sm:$0xff]
      %v803 = vld [vmem:[#allocation3 + $0x160] sm:$0xff]
      %v804 = vld [vmem:[#allocation3 + $0x168] sm:$0xff]
      %v805 = vld [vmem:[#allocation3 + $0x170] sm:$0xff]
      %v806 = vld [vmem:[#allocation3 + $0x178] sm:$0xff]
      %v807 = vld [vmem:[#allocation3 + $0x180] sm:$0xff]
      %v808 = vld [vmem:[#allocation3 + $0x188] sm:$0xff]
      %v809 = vld [vmem:[#allocation3 + $0x190] sm:$0xff]
      %v810 = vld [vmem:[#allocation3 + $0x198] sm:$0xff]
      %v811 = vld [vmem:[#allocation3 + $0x1a0] sm:$0xff]
      %v812 = vld [vmem:[#allocation3 + $0x1a8] sm:$0xff]
      %v813 = vld [vmem:[#allocation3 + $0x1b0] sm:$0xff]
      %v814 = vld [vmem:[#allocation3 + $0x1b8] sm:$0xff]
      %v815 = vld [vmem:[#allocation3 + $0x1c0] sm:$0xff]
      %v816 = vld [vmem:[#allocation3 + $0x1c8] sm:$0xff]
      %v817 = vld [vmem:[#allocation3 + $0x1d0] sm:$0xff]
      %v818 = vld [vmem:[#allocation3 + $0x1d8] sm:$0xff]
      %v819 = vld [vmem:[#allocation3 + $0x1e0] sm:$0xff]
      %v820 = vld [vmem:[#allocation3 + $0x1e8] sm:$0xff]
      %v821 = vld [vmem:[#allocation3 + $0x1f0] sm:$0xff]
      %v822 = vld [vmem:[#allocation3 + $0x1f8] sm:$0xff]
      %v823 = vld [vmem:[#allocation3 + $0x200] sm:$0xff]
      %v824 = vld [vmem:[#allocation3 + $0x208] sm:$0xff]
      %v825 = vld [vmem:[#allocation3 + $0x210] sm:$0xff]
      %v826 = vld [vmem:[#allocation3 + $0x218] sm:$0xff]
      %v827 = vld [vmem:[#allocation3 + $0x220] sm:$0xff]
      %v828 = vld [vmem:[#allocation3 + $0x228] sm:$0xff]
      %v829 = vld [vmem:[#allocation3 + $0x230] sm:$0xff]
      %v830 = vld [vmem:[#allocation3 + $0x238] sm:$0xff]
      %v831 = vld [vmem:[#allocation3 + $0x240] sm:$0xff]
      %v832 = vld [vmem:[#allocation3 + $0x248] sm:$0xff]
      %v833 = vld [vmem:[#allocation3 + $0x250] sm:$0xff]
      %v834 = vld [vmem:[#allocation3 + $0x258] sm:$0xff]
      %v835 = vld [vmem:[#allocation3 + $0x260] sm:$0xff]
      %v836 = vld [vmem:[#allocation3 + $0x268] sm:$0xff]
      %v837 = vld [vmem:[#allocation3 + $0x270] sm:$0xff]
      %v838 = vld [vmem:[#allocation3 + $0x278] sm:$0xff]
      %v839 = vld [vmem:[#allocation3 + $0x280] sm:$0xff]
      %v840 = vld [vmem:[#allocation3 + $0x288] sm:$0xff]
      %v841 = vld [vmem:[#allocation3 + $0x290] sm:$0xff]
      %v842 = vld [vmem:[#allocation3 + $0x298] sm:$0xff]
      %v843 = vld [vmem:[#allocation3 + $0x2a0] sm:$0xff]
      %v844 = vld [vmem:[#allocation3 + $0x2a8] sm:$0xff]
      %v845 = vld [vmem:[#allocation3 + $0x2b0] sm:$0xff]
      %v846 = vld [vmem:[#allocation3 + $0x2b8] sm:$0xff]
      %v847 = vld [vmem:[#allocation3 + $0x2c0] sm:$0xff]
      %v848 = vld [vmem:[#allocation3 + $0x2c8] sm:$0xff]
      %v849 = vld [vmem:[#allocation3 + $0x2d0] sm:$0xff]
      %v850 = vld [vmem:[#allocation3 + $0x2d8] sm:$0xff]
      %v851 = vld [vmem:[#allocation3 + $0x2e0] sm:$0xff]
      %v852 = vld [vmem:[#allocation3 + $0x2e8] sm:$0xff]
      %v853 = vld [vmem:[#allocation3 + $0x2f0] sm:$0xff]
      %v854 = vld [vmem:[#allocation3 + $0x2f8] sm:$0xff]
      %v855 = vld [vmem:[#allocation3 + $0x300] sm:$0xff]
      %v856 = vld [vmem:[#allocation3 + $0x308] sm:$0xff]
      %v857 = vld [vmem:[#allocation3 + $0x310] sm:$0xff]
      %v858 = vld [vmem:[#allocation3 + $0x318] sm:$0xff]
      %v859 = vld [vmem:[#allocation3 + $0x320] sm:$0xff]
      %v860 = vld [vmem:[#allocation3 + $0x328] sm:$0xff]
      %v861 = vld [vmem:[#allocation3 + $0x330] sm:$0xff]
      %v862 = vld [vmem:[#allocation3 + $0x338] sm:$0xff]
      %v863 = vld [vmem:[#allocation3 + $0x340] sm:$0xff]
      %v864 = vld [vmem:[#allocation3 + $0x348] sm:$0xff]
      %v865 = vld [vmem:[#allocation3 + $0x350] sm:$0xff]
      %v866 = vld [vmem:[#allocation3 + $0x358] sm:$0xff]
      %v867 = vld [vmem:[#allocation3 + $0x360] sm:$0xff]
      %v868 = vld [vmem:[#allocation3 + $0x368] sm:$0xff]
      %v869 = vld [vmem:[#allocation3 + $0x370] sm:$0xff]
      %v870 = vld [vmem:[#allocation3 + $0x378] sm:$0xff]
      %v871 = vld [vmem:[#allocation3 + $0x380] sm:$0xff]
      %v872 = vld [vmem:[#allocation3 + $0x388] sm:$0xff]
      %v873 = vld [vmem:[#allocation3 + $0x390] sm:$0xff]
      %v874 = vld [vmem:[#allocation3 + $0x398] sm:$0xff]
      %v875 = vld [vmem:[#allocation3 + $0x3a0] sm:$0xff]
      %v876 = vld [vmem:[#allocation3 + $0x3a8] sm:$0xff]
      %v877 = vld [vmem:[#allocation3 + $0x3b0] sm:$0xff]
      %v878 = vld [vmem:[#allocation3 + $0x3b8] sm:$0xff]
      %v879 = vld [vmem:[#allocation3 + $0x3c0] sm:$0xff]
      %v880 = vld [vmem:[#allocation3 + $0x3c8] sm:$0xff]
      %v881 = vld [vmem:[#allocation3 + $0x3d0] sm:$0xff]
      %v882 = vld [vmem:[#allocation3 + $0x3d8] sm:$0xff]
      %v883 = vld [vmem:[#allocation3 + $0x3e0] sm:$0xff]
      %v884 = vld [vmem:[#allocation3 + $0x3e8] sm:$0xff]
      %v885 = vld [vmem:[#allocation3 + $0x3f0] sm:$0xff]
      %v886 = vld [vmem:[#allocation3 + $0x3f8] sm:$0xff]
      %v887 = vld [vmem:[%s5] sm:$0xff]
      %v889 = vperm.slane %v887, 0
      %v890 = vperm.slane %v887, 1
      %v891 = vperm.slane %v887, 2
      %v892 = vperm.slane %v887, 3
      %v893 = vperm.slane %v887, 4
      %v894 = vperm.slane %v887, 5
      %v895 = vperm.slane %v887, 6
      %v896 = vperm.slane %v887, 7
      %905 = vmatpush.msra.mxu0 %v879
      %906 = vmatpush.msra.mxu0 %v871
      %907 = vmatpush.msra.mxu0 %v863
      %908 = vmatpush.msra.mxu0 %v855
      %909 = vmatpush.msra.mxu0 %v847
      %910 = vmatpush.msra.mxu0 %v839
      %911 = vmatpush.msra.mxu0 %v831
      %912 = vmatpush.msra.mxu0 %v823
      %913 = vmatpush.msra.mxu0 %v815
      %914 = vmatpush.msra.mxu0 %v807
      %915 = vmatpush.msra.mxu0 %v799
      %916 = vmatpush.msra.mxu0 %v791
      %917 = vmatpush.msra.mxu0 %v783
      %918 = vmatpush.msra.mxu0 %v775
      %919 = vmatpush.msra.mxu0 %v767
      %920 = vmatpush.msra.mxu0 %v759
      %921 = vmatmul.f32.gmra.mxu0 %v758
      %v922 = vpop.f32.mrf.mxu0
      %v923 = vadd.f32 %v889, %v922
      %924 = vdwg.mxu0
      %925 = vmatpush.msra.mxu0 %v880
      %926 = vmatpush.msra.mxu0 %v872
      %927 = vmatpush.msra.mxu0 %v864
      %928 = vmatpush.msra.mxu0 %v856
      %929 = vmatpush.msra.mxu0 %v848
      %930 = vmatpush.msra.mxu0 %v840
      %931 = vmatpush.msra.mxu0 %v832
      %932 = vmatpush.msra.mxu0 %v824
      %933 = vmatpush.msra.mxu0 %v816
      %934 = vmatpush.msra.mxu0 %v808
      %935 = vmatpush.msra.mxu0 %v800
      %936 = vmatpush.msra.mxu0 %v792
      %937 = vmatpush.msra.mxu0 %v784
      %938 = vmatpush.msra.mxu0 %v776
      %939 = vmatpush.msra.mxu0 %v768
      %940 = vmatpush.msra.mxu0 %v760
      %941 = vmatmul.f32.gmra.mxu0 %v758
      %v942 = vpop.f32.mrf.mxu0
      %v943 = vadd.f32 %v890, %v942
      %944 = vdwg.mxu0
      %945 = vmatpush.msra.mxu0 %v881
      %946 = vmatpush.msra.mxu0 %v873
      %947 = vmatpush.msra.mxu0 %v865
      %948 = vmatpush.msra.mxu0 %v857
      %949 = vmatpush.msra.mxu0 %v849
      %950 = vmatpush.msra.mxu0 %v841
      %951 = vmatpush.msra.mxu0 %v833
      %952 = vmatpush.msra.mxu0 %v825
      %953 = vmatpush.msra.mxu0 %v817
      %954 = vmatpush.msra.mxu0 %v809
      %955 = vmatpush.msra.mxu0 %v801
      %956 = vmatpush.msra.mxu0 %v793
      %957 = vmatpush.msra.mxu0 %v785
      %958 = vmatpush.msra.mxu0 %v777
      %959 = vmatpush.msra.mxu0 %v769
      %960 = vmatpush.msra.mxu0 %v761
      %961 = vmatmul.f32.gmra.mxu0 %v758
      %v962 = vpop.f32.mrf.mxu0
      %v963 = vadd.f32 %v891, %v962
      %964 = vdwg.mxu0
      %965 = vmatpush.msra.mxu0 %v882
      %966 = vmatpush.msra.mxu0 %v874
      %967 = vmatpush.msra.mxu0 %v866
      %968 = vmatpush.msra.mxu0 %v858
      %969 = vmatpush.msra.mxu0 %v850
      %970 = vmatpush.msra.mxu0 %v842
      %971 = vmatpush.msra.mxu0 %v834
      %972 = vmatpush.msra.mxu0 %v826
      %973 = vmatpush.msra.mxu0 %v818
      %974 = vmatpush.msra.mxu0 %v810
      %975 = vmatpush.msra.mxu0 %v802
      %976 = vmatpush.msra.mxu0 %v794
      %977 = vmatpush.msra.mxu0 %v786
      %978 = vmatpush.msra.mxu0 %v778
      %979 = vmatpush.msra.mxu0 %v770
      %980 = vmatpush.msra.mxu0 %v762
      %981 = vmatmul.f32.gmra.mxu0 %v758
      %v982 = vpop.f32.mrf.mxu0
      %v983 = vadd.f32 %v892, %v982
      %984 = vdwg.mxu0
      %985 = vmatpush.msra.mxu0 %v883
      %986 = vmatpush.msra.mxu0 %v875
      %987 = vmatpush.msra.mxu0 %v867
      %988 = vmatpush.msra.mxu0 %v859
      %989 = vmatpush.msra.mxu0 %v851
      %990 = vmatpush.msra.mxu0 %v843
      %991 = vmatpush.msra.mxu0 %v835
      %992 = vmatpush.msra.mxu0 %v827
      %993 = vmatpush.msra.mxu0 %v819
      %994 = vmatpush.msra.mxu0 %v811
      %995 = vmatpush.msra.mxu0 %v803
      %996 = vmatpush.msra.mxu0 %v795
      %997 = vmatpush.msra.mxu0 %v787
      %998 = vmatpush.msra.mxu0 %v779
      %999 = vmatpush.msra.mxu0 %v771
      %1000 = vmatpush.msra.mxu0 %v763
      %1001 = vmatmul.f32.gmra.mxu0 %v758
      %v1002 = vpop.f32.mrf.mxu0
      %v1003 = vadd.f32 %v893, %v1002
      %1004 = vdwg.mxu0
      %1005 = vmatpush.msra.mxu0 %v884
      %1006 = vmatpush.msra.mxu0 %v876
      %1007 = vmatpush.msra.mxu0 %v868
      %1008 = vmatpush.msra.mxu0 %v860
      %1009 = vmatpush.msra.mxu0 %v852
      %1010 = vmatpush.msra.mxu0 %v844
      %1011 = vmatpush.msra.mxu0 %v836
      %1012 = vmatpush.msra.mxu0 %v828
      %1013 = vmatpush.msra.mxu0 %v820
      %1014 = vmatpush.msra.mxu0 %v812
      %1015 = vmatpush.msra.mxu0 %v804
      %1016 = vmatpush.msra.mxu0 %v796
      %1017 = vmatpush.msra.mxu0 %v788
      %1018 = vmatpush.msra.mxu0 %v780
      %1019 = vmatpush.msra.mxu0 %v772
      %1020 = vmatpush.msra.mxu0 %v764
      %1021 = vmatmul.f32.gmra.mxu0 %v758
      %v1022 = vpop.f32.mrf.mxu0
      %v1023 = vadd.f32 %v894, %v1022
      %1024 = vdwg.mxu0
      %1025 = vmatpush.msra.mxu0 %v885
      %1026 = vmatpush.msra.mxu0 %v877
      %1027 = vmatpush.msra.mxu0 %v869
      %1028 = vmatpush.msra.mxu0 %v861
      %1029 = vmatpush.msra.mxu0 %v853
      %1030 = vmatpush.msra.mxu0 %v845
      %1031 = vmatpush.msra.mxu0 %v837
      %1032 = vmatpush.msra.mxu0 %v829
      %1033 = vmatpush.msra.mxu0 %v821
      %1034 = vmatpush.msra.mxu0 %v813
      %1035 = vmatpush.msra.mxu0 %v805
      %1036 = vmatpush.msra.mxu0 %v797
      %1037 = vmatpush.msra.mxu0 %v789
      %1038 = vmatpush.msra.mxu0 %v781
      %1039 = vmatpush.msra.mxu0 %v773
      %1040 = vmatpush.msra.mxu0 %v765
      %1041 = vmatmul.f32.gmra.mxu0 %v758
      %v1042 = vpop.f32.mrf.mxu0
      %v1043 = vadd.f32 %v895, %v1042
      %1044 = vdwg.mxu0
      %1045 = vmatpush.msra.mxu0 %v886
      %1046 = vmatpush.msra.mxu0 %v878
      %1047 = vmatpush.msra.mxu0 %v870
      %1048 = vmatpush.msra.mxu0 %v862
      %1049 = vmatpush.msra.mxu0 %v854
      %1050 = vmatpush.msra.mxu0 %v846
      %1051 = vmatpush.msra.mxu0 %v838
      %1052 = vmatpush.msra.mxu0 %v830
      %1053 = vmatpush.msra.mxu0 %v822
      %1054 = vmatpush.msra.mxu0 %v814
      %1055 = vmatpush.msra.mxu0 %v806
      %1056 = vmatpush.msra.mxu0 %v798
      %1057 = vmatpush.msra.mxu0 %v790
      %1058 = vmatpush.msra.mxu0 %v782
      %1059 = vmatpush.msra.mxu0 %v774
      %1060 = vmatpush.msra.mxu0 %v766
      %1061 = vmatmul.f32.gmra.mxu0 %v758
      %v1062 = vpop.f32.mrf.mxu0
      %v1063 = vadd.f32 %v896, %v1062
      %1064 = vdwg.mxu0
      %v1065 = vld [vmem:[%s1] sm:$0x3]
      %v1066 = vld [vmem:[%s6] sm:$0xff]
      %v1067 = vld [vmem:[%s6 + $0x8] sm:$0xff]
      %v1068 = vld [vmem:[%s6 + $0x10] sm:$0xff]
      %v1069 = vld [vmem:[%s6 + $0x18] sm:$0xff]
      %v1070 = vld [vmem:[%s6 + $0x20] sm:$0xff]
      %v1071 = vld [vmem:[%s6 + $0x28] sm:$0xff]
      %v1072 = vld [vmem:[%s6 + $0x30] sm:$0xff]
      %v1073 = vld [vmem:[%s6 + $0x38] sm:$0xff]
      %v1074 = vld [vmem:[%s6 + $0x40] sm:$0xff]
      %v1075 = vld [vmem:[%s6 + $0x48] sm:$0xff]
      %v1076 = vld [vmem:[%s6 + $0x50] sm:$0xff]
      %v1077 = vld [vmem:[%s6 + $0x58] sm:$0xff]
      %v1078 = vld [vmem:[%s6 + $0x60] sm:$0xff]
      %v1079 = vld [vmem:[%s6 + $0x68] sm:$0xff]
      %v1080 = vld [vmem:[%s6 + $0x70] sm:$0xff]
      %v1081 = vld [vmem:[%s6 + $0x78] sm:$0xff]
      %v1082 = vld [vmem:[%s6 + $0x80] sm:$0xff]
      %v1083 = vld [vmem:[%s6 + $0x88] sm:$0xff]
      %v1084 = vld [vmem:[%s6 + $0x90] sm:$0xff]
      %v1085 = vld [vmem:[%s6 + $0x98] sm:$0xff]
      %v1086 = vld [vmem:[%s6 + $0xa0] sm:$0xff]
      %v1087 = vld [vmem:[%s6 + $0xa8] sm:$0xff]
      %v1088 = vld [vmem:[%s6 + $0xb0] sm:$0xff]
      %v1089 = vld [vmem:[%s6 + $0xb8] sm:$0xff]
      %v1090 = vld [vmem:[%s6 + $0xc0] sm:$0xff]
      %v1091 = vld [vmem:[%s6 + $0xc8] sm:$0xff]
      %v1092 = vld [vmem:[%s6 + $0xd0] sm:$0xff]
      %v1093 = vld [vmem:[%s6 + $0xd8] sm:$0xff]
      %v1094 = vld [vmem:[%s6 + $0xe0] sm:$0xff]
      %v1095 = vld [vmem:[%s6 + $0xe8] sm:$0xff]
      %v1096 = vld [vmem:[%s6 + $0xf0] sm:$0xff]
      %v1097 = vld [vmem:[%s6 + $0xf8] sm:$0xff]
      %v1098 = vld [vmem:[%s7] sm:$0xff]
      %v1100 = vperm.slane %v1098, 0
      %v1101 = vperm.slane %v1098, 1
      %v1102 = vperm.slane %v1098, 2
      %v1103 = vperm.slane %v1098, 3
      %v1104 = vperm.slane %v1098, 4
      %v1105 = vperm.slane %v1098, 5
      %v1106 = vperm.slane %v1098, 6
      %v1107 = vperm.slane %v1098, 7
      %vm1116 = vcmask 261120
      %v1118 = vsel %vm1116, %v1065, 0
      %1120 = vmatpush.msra.mxu0 0.0
      %1121 = vmatpush.msra.mxu0 0.0
      %1122 = vmatpush.msra.mxu0 0.0
      %1123 = vmatpush.msra.mxu0 0.0
      %1124 = vmatpush.msra.mxu0 0.0
      %1125 = vmatpush.msra.mxu0 0.0
      %1126 = vmatpush.msra.mxu0 0.0
      %1127 = vmatpush.msra.mxu0 0.0
      %1128 = vmatpush.msra.mxu0 0.0
      %1129 = vmatpush.msra.mxu0 0.0
      %1130 = vmatpush.msra.mxu0 0.0
      %1131 = vmatpush.msra.mxu0 0.0
      %1132 = vmatpush.msra.mxu0 %v1090
      %1133 = vmatpush.msra.mxu0 %v1082
      %1134 = vmatpush.msra.mxu0 %v1074
      %1135 = vmatpush.msra.mxu0 %v1066
      %1136 = vmatmul.f32.gmra.mxu0 %v1118
      %v1137 = vpop.f32.mrf.mxu0
      %v1138 = vadd.f32 %v1100, %v1137
      %1139 = vdwg.mxu0
      %1140 = vmatpush.msra.mxu0 0.0
      %1141 = vmatpush.msra.mxu0 0.0
      %1142 = vmatpush.msra.mxu0 0.0
      %1143 = vmatpush.msra.mxu0 0.0
      %1144 = vmatpush.msra.mxu0 0.0
      %1145 = vmatpush.msra.mxu0 0.0
      %1146 = vmatpush.msra.mxu0 0.0
      %1147 = vmatpush.msra.mxu0 0.0
      %1148 = vmatpush.msra.mxu0 0.0
      %1149 = vmatpush.msra.mxu0 0.0
      %1150 = vmatpush.msra.mxu0 0.0
      %1151 = vmatpush.msra.mxu0 0.0
      %1152 = vmatpush.msra.mxu0 %v1091
      %1153 = vmatpush.msra.mxu0 %v1083
      %1154 = vmatpush.msra.mxu0 %v1075
      %1155 = vmatpush.msra.mxu0 %v1067
      %1156 = vmatmul.f32.gmra.mxu0 %v1118
      %v1157 = vpop.f32.mrf.mxu0
      %v1158 = vadd.f32 %v1101, %v1157
      %1159 = vdwg.mxu0
      %1160 = vmatpush.msra.mxu0 0.0
      %1161 = vmatpush.msra.mxu0 0.0
      %1162 = vmatpush.msra.mxu0 0.0
      %1163 = vmatpush.msra.mxu0 0.0
      %1164 = vmatpush.msra.mxu0 0.0
      %1165 = vmatpush.msra.mxu0 0.0
      %1166 = vmatpush.msra.mxu0 0.0
      %1167 = vmatpush.msra.mxu0 0.0
      %1168 = vmatpush.msra.mxu0 0.0
      %1169 = vmatpush.msra.mxu0 0.0
      %1170 = vmatpush.msra.mxu0 0.0
      %1171 = vmatpush.msra.mxu0 0.0
      %1172 = vmatpush.msra.mxu0 %v1092
      %1173 = vmatpush.msra.mxu0 %v1084
      %1174 = vmatpush.msra.mxu0 %v1076
      %1175 = vmatpush.msra.mxu0 %v1068
      %1176 = vmatmul.f32.gmra.mxu0 %v1118
      %v1177 = vpop.f32.mrf.mxu0
      %v1178 = vadd.f32 %v1102, %v1177
      %1179 = vdwg.mxu0
      %1180 = vmatpush.msra.mxu0 0.0
      %1181 = vmatpush.msra.mxu0 0.0
      %1182 = vmatpush.msra.mxu0 0.0
      %1183 = vmatpush.msra.mxu0 0.0
      %1184 = vmatpush.msra.mxu0 0.0
      %1185 = vmatpush.msra.mxu0 0.0
      %1186 = vmatpush.msra.mxu0 0.0
      %1187 = vmatpush.msra.mxu0 0.0
      %1188 = vmatpush.msra.mxu0 0.0
      %1189 = vmatpush.msra.mxu0 0.0
      %1190 = vmatpush.msra.mxu0 0.0
      %1191 = vmatpush.msra.mxu0 0.0
      %1192 = vmatpush.msra.mxu0 %v1093
      %1193 = vmatpush.msra.mxu0 %v1085
      %1194 = vmatpush.msra.mxu0 %v1077
      %1195 = vmatpush.msra.mxu0 %v1069
      %1196 = vmatmul.f32.gmra.mxu0 %v1118
      %v1197 = vpop.f32.mrf.mxu0
      %v1198 = vadd.f32 %v1103, %v1197
      %1199 = vdwg.mxu0
      %1200 = vmatpush.msra.mxu0 0.0
      %1201 = vmatpush.msra.mxu0 0.0
      %1202 = vmatpush.msra.mxu0 0.0
      %1203 = vmatpush.msra.mxu0 0.0
      %1204 = vmatpush.msra.mxu0 0.0
      %1205 = vmatpush.msra.mxu0 0.0
      %1206 = vmatpush.msra.mxu0 0.0
      %1207 = vmatpush.msra.mxu0 0.0
      %1208 = vmatpush.msra.mxu0 0.0
      %1209 = vmatpush.msra.mxu0 0.0
      %1210 = vmatpush.msra.mxu0 0.0
      %1211 = vmatpush.msra.mxu0 0.0
      %1212 = vmatpush.msra.mxu0 %v1094
      %1213 = vmatpush.msra.mxu0 %v1086
      %1214 = vmatpush.msra.mxu0 %v1078
      %1215 = vmatpush.msra.mxu0 %v1070
      %1216 = vmatmul.f32.gmra.mxu0 %v1118
      %v1217 = vpop.f32.mrf.mxu0
      %v1218 = vadd.f32 %v1104, %v1217
      %1219 = vdwg.mxu0
      %1220 = vmatpush.msra.mxu0 0.0
      %1221 = vmatpush.msra.mxu0 0.0
      %1222 = vmatpush.msra.mxu0 0.0
      %1223 = vmatpush.msra.mxu0 0.0
      %1224 = vmatpush.msra.mxu0 0.0
      %1225 = vmatpush.msra.mxu0 0.0
      %1226 = vmatpush.msra.mxu0 0.0
      %1227 = vmatpush.msra.mxu0 0.0
      %1228 = vmatpush.msra.mxu0 0.0
      %1229 = vmatpush.msra.mxu0 0.0
      %1230 = vmatpush.msra.mxu0 0.0
      %1231 = vmatpush.msra.mxu0 0.0
      %1232 = vmatpush.msra.mxu0 %v1095
      %1233 = vmatpush.msra.mxu0 %v1087
      %1234 = vmatpush.msra.mxu0 %v1079
      %1235 = vmatpush.msra.mxu0 %v1071
      %1236 = vmatmul.f32.gmra.mxu0 %v1118
      %v1237 = vpop.f32.mrf.mxu0
      %v1238 = vadd.f32 %v1105, %v1237
      %1239 = vdwg.mxu0
      %1240 = vmatpush.msra.mxu0 0.0
      %1241 = vmatpush.msra.mxu0 0.0
      %1242 = vmatpush.msra.mxu0 0.0
      %1243 = vmatpush.msra.mxu0 0.0
      %1244 = vmatpush.msra.mxu0 0.0
      %1245 = vmatpush.msra.mxu0 0.0
      %1246 = vmatpush.msra.mxu0 0.0
      %1247 = vmatpush.msra.mxu0 0.0
      %1248 = vmatpush.msra.mxu0 0.0
      %1249 = vmatpush.msra.mxu0 0.0
      %1250 = vmatpush.msra.mxu0 0.0
      %1251 = vmatpush.msra.mxu0 0.0
      %1252 = vmatpush.msra.mxu0 %v1096
      %1253 = vmatpush.msra.mxu0 %v1088
      %1254 = vmatpush.msra.mxu0 %v1080
      %1255 = vmatpush.msra.mxu0 %v1072
      %1256 = vmatmul.f32.gmra.mxu0 %v1118
      %v1257 = vpop.f32.mrf.mxu0
      %v1258 = vadd.f32 %v1106, %v1257
      %1259 = vdwg.mxu0
      %1260 = vmatpush.msra.mxu0 0.0
      %1261 = vmatpush.msra.mxu0 0.0
      %1262 = vmatpush.msra.mxu0 0.0
      %1263 = vmatpush.msra.mxu0 0.0
      %1264 = vmatpush.msra.mxu0 0.0
      %1265 = vmatpush.msra.mxu0 0.0
      %1266 = vmatpush.msra.mxu0 0.0
      %1267 = vmatpush.msra.mxu0 0.0
      %1268 = vmatpush.msra.mxu0 0.0
      %1269 = vmatpush.msra.mxu0 0.0
      %1270 = vmatpush.msra.mxu0 0.0
      %1271 = vmatpush.msra.mxu0 0.0
      %1272 = vmatpush.msra.mxu0 %v1097
      %1273 = vmatpush.msra.mxu0 %v1089
      %1274 = vmatpush.msra.mxu0 %v1081
      %1275 = vmatpush.msra.mxu0 %v1073
      %1276 = vmatmul.f32.gmra.mxu0 %v1118
      %v1277 = vpop.f32.mrf.mxu0
      %v1278 = vadd.f32 %v1107, %v1277
      %1279 = vdwg.mxu0
      %v1280 = vld [vmem:[#allocation6] sm:$0xff]
      %v1281 = vld [vmem:[#allocation6 + $0x8] sm:$0xff]
      %v1282 = vld [vmem:[#allocation6 + $0x10] sm:$0xff]
      %v1283 = vld [vmem:[#allocation6 + $0x18] sm:$0xff]
      %v1284 = vld [vmem:[#allocation6 + $0x20] sm:$0xff]
      %v1285 = vld [vmem:[#allocation6 + $0x28] sm:$0xff]
      %v1286 = vld [vmem:[#allocation6 + $0x30] sm:$0xff]
      %v1287 = vld [vmem:[#allocation6 + $0x38] sm:$0xff]
      %v1288 = vld [vmem:[#allocation6 + $0x40] sm:$0xff]
      %v1289 = vld [vmem:[#allocation6 + $0x48] sm:$0xff]
      %v1290 = vld [vmem:[#allocation6 + $0x50] sm:$0xff]
      %v1291 = vld [vmem:[#allocation6 + $0x58] sm:$0xff]
      %v1292 = vld [vmem:[#allocation6 + $0x60] sm:$0xff]
      %v1293 = vld [vmem:[#allocation6 + $0x68] sm:$0xff]
      %v1294 = vld [vmem:[#allocation6 + $0x70] sm:$0xff]
      %v1295 = vld [vmem:[#allocation6 + $0x78] sm:$0xff]
      %v1296 = vld [vmem:[#allocation6 + $0x80] sm:$0xff]
      %v1297 = vld [vmem:[#allocation6 + $0x88] sm:$0xff]
      %v1298 = vld [vmem:[#allocation6 + $0x90] sm:$0xff]
      %v1299 = vld [vmem:[#allocation6 + $0x98] sm:$0xff]
      %v1300 = vld [vmem:[#allocation6 + $0xa0] sm:$0xff]
      %v1301 = vld [vmem:[#allocation6 + $0xa8] sm:$0xff]
      %v1302 = vld [vmem:[#allocation6 + $0xb0] sm:$0xff]
      %v1303 = vld [vmem:[#allocation6 + $0xb8] sm:$0xff]
      %v1304 = vld [vmem:[#allocation6 + $0xc0] sm:$0xff]
      %v1305 = vld [vmem:[#allocation6 + $0xc8] sm:$0xff]
      %v1306 = vld [vmem:[#allocation6 + $0xd0] sm:$0xff]
      %v1307 = vld [vmem:[#allocation6 + $0xd8] sm:$0xff]
      %v1308 = vld [vmem:[#allocation6 + $0xe0] sm:$0xff]
      %v1309 = vld [vmem:[#allocation6 + $0xe8] sm:$0xff]
      %v1310 = vld [vmem:[#allocation6 + $0xf0] sm:$0xff]
      %v1311 = vld [vmem:[#allocation6 + $0xf8] sm:$0xff]
      %v1312 = vld [vmem:[#allocation6 + $0x100] sm:$0xff]
      %v1313 = vld [vmem:[#allocation6 + $0x108] sm:$0xff]
      %v1314 = vld [vmem:[#allocation6 + $0x110] sm:$0xff]
      %v1315 = vld [vmem:[#allocation6 + $0x118] sm:$0xff]
      %v1316 = vld [vmem:[#allocation6 + $0x120] sm:$0xff]
      %v1317 = vld [vmem:[#allocation6 + $0x128] sm:$0xff]
      %v1318 = vld [vmem:[#allocation6 + $0x130] sm:$0xff]
      %v1319 = vld [vmem:[#allocation6 + $0x138] sm:$0xff]
      %v1320 = vld [vmem:[#allocation6 + $0x140] sm:$0xff]
      %v1321 = vld [vmem:[#allocation6 + $0x148] sm:$0xff]
      %v1322 = vld [vmem:[#allocation6 + $0x150] sm:$0xff]
      %v1323 = vld [vmem:[#allocation6 + $0x158] sm:$0xff]
      %v1324 = vld [vmem:[#allocation6 + $0x160] sm:$0xff]
      %v1325 = vld [vmem:[#allocation6 + $0x168] sm:$0xff]
      %v1326 = vld [vmem:[#allocation6 + $0x170] sm:$0xff]
      %v1327 = vld [vmem:[#allocation6 + $0x178] sm:$0xff]
      %v1328 = vld [vmem:[#allocation6 + $0x180] sm:$0xff]
      %v1329 = vld [vmem:[#allocation6 + $0x188] sm:$0xff]
      %v1330 = vld [vmem:[#allocation6 + $0x190] sm:$0xff]
      %v1331 = vld [vmem:[#allocation6 + $0x198] sm:$0xff]
      %v1332 = vld [vmem:[#allocation6 + $0x1a0] sm:$0xff]
      %v1333 = vld [vmem:[#allocation6 + $0x1a8] sm:$0xff]
      %v1334 = vld [vmem:[#allocation6 + $0x1b0] sm:$0xff]
      %v1335 = vld [vmem:[#allocation6 + $0x1b8] sm:$0xff]
      %v1336 = vld [vmem:[#allocation6 + $0x1c0] sm:$0xff]
      %v1337 = vld [vmem:[#allocation6 + $0x1c8] sm:$0xff]
      %v1338 = vld [vmem:[#allocation6 + $0x1d0] sm:$0xff]
      %v1339 = vld [vmem:[#allocation6 + $0x1d8] sm:$0xff]
      %v1340 = vld [vmem:[#allocation6 + $0x1e0] sm:$0xff]
      %v1341 = vld [vmem:[#allocation6 + $0x1e8] sm:$0xff]
      %v1342 = vld [vmem:[#allocation6 + $0x1f0] sm:$0xff]
      %v1343 = vld [vmem:[#allocation6 + $0x1f8] sm:$0xff]
      %v1344 = vld [vmem:[#allocation6 + $0x200] sm:$0xff]
      %v1345 = vld [vmem:[#allocation6 + $0x208] sm:$0xff]
      %v1346 = vld [vmem:[#allocation6 + $0x210] sm:$0xff]
      %v1347 = vld [vmem:[#allocation6 + $0x218] sm:$0xff]
      %v1348 = vld [vmem:[#allocation6 + $0x220] sm:$0xff]
      %v1349 = vld [vmem:[#allocation6 + $0x228] sm:$0xff]
      %v1350 = vld [vmem:[#allocation6 + $0x230] sm:$0xff]
      %v1351 = vld [vmem:[#allocation6 + $0x238] sm:$0xff]
      %v1352 = vld [vmem:[#allocation6 + $0x240] sm:$0xff]
      %v1353 = vld [vmem:[#allocation6 + $0x248] sm:$0xff]
      %v1354 = vld [vmem:[#allocation6 + $0x250] sm:$0xff]
      %v1355 = vld [vmem:[#allocation6 + $0x258] sm:$0xff]
      %v1356 = vld [vmem:[#allocation6 + $0x260] sm:$0xff]
      %v1357 = vld [vmem:[#allocation6 + $0x268] sm:$0xff]
      %v1358 = vld [vmem:[#allocation6 + $0x270] sm:$0xff]
      %v1359 = vld [vmem:[#allocation6 + $0x278] sm:$0xff]
      %v1360 = vld [vmem:[#allocation6 + $0x280] sm:$0xff]
      %v1361 = vld [vmem:[#allocation6 + $0x288] sm:$0xff]
      %v1362 = vld [vmem:[#allocation6 + $0x290] sm:$0xff]
      %v1363 = vld [vmem:[#allocation6 + $0x298] sm:$0xff]
      %v1364 = vld [vmem:[#allocation6 + $0x2a0] sm:$0xff]
      %v1365 = vld [vmem:[#allocation6 + $0x2a8] sm:$0xff]
      %v1366 = vld [vmem:[#allocation6 + $0x2b0] sm:$0xff]
      %v1367 = vld [vmem:[#allocation6 + $0x2b8] sm:$0xff]
      %v1368 = vld [vmem:[#allocation6 + $0x2c0] sm:$0xff]
      %v1369 = vld [vmem:[#allocation6 + $0x2c8] sm:$0xff]
      %v1370 = vld [vmem:[#allocation6 + $0x2d0] sm:$0xff]
      %v1371 = vld [vmem:[#allocation6 + $0x2d8] sm:$0xff]
      %v1372 = vld [vmem:[#allocation6 + $0x2e0] sm:$0xff]
      %v1373 = vld [vmem:[#allocation6 + $0x2e8] sm:$0xff]
      %v1374 = vld [vmem:[#allocation6 + $0x2f0] sm:$0xff]
      %v1375 = vld [vmem:[#allocation6 + $0x2f8] sm:$0xff]
      %v1376 = vld [vmem:[#allocation6 + $0x300] sm:$0xff]
      %v1377 = vld [vmem:[#allocation6 + $0x308] sm:$0xff]
      %v1378 = vld [vmem:[#allocation6 + $0x310] sm:$0xff]
      %v1379 = vld [vmem:[#allocation6 + $0x318] sm:$0xff]
      %v1380 = vld [vmem:[#allocation6 + $0x320] sm:$0xff]
      %v1381 = vld [vmem:[#allocation6 + $0x328] sm:$0xff]
      %v1382 = vld [vmem:[#allocation6 + $0x330] sm:$0xff]
      %v1383 = vld [vmem:[#allocation6 + $0x338] sm:$0xff]
      %v1384 = vld [vmem:[#allocation6 + $0x340] sm:$0xff]
      %v1385 = vld [vmem:[#allocation6 + $0x348] sm:$0xff]
      %v1386 = vld [vmem:[#allocation6 + $0x350] sm:$0xff]
      %v1387 = vld [vmem:[#allocation6 + $0x358] sm:$0xff]
      %v1388 = vld [vmem:[#allocation6 + $0x360] sm:$0xff]
      %v1389 = vld [vmem:[#allocation6 + $0x368] sm:$0xff]
      %v1390 = vld [vmem:[#allocation6 + $0x370] sm:$0xff]
      %v1391 = vld [vmem:[#allocation6 + $0x378] sm:$0xff]
      %v1392 = vld [vmem:[#allocation6 + $0x380] sm:$0xff]
      %v1393 = vld [vmem:[#allocation6 + $0x388] sm:$0xff]
      %v1394 = vld [vmem:[#allocation6 + $0x390] sm:$0xff]
      %v1395 = vld [vmem:[#allocation6 + $0x398] sm:$0xff]
      %v1396 = vld [vmem:[#allocation6 + $0x3a0] sm:$0xff]
      %v1397 = vld [vmem:[#allocation6 + $0x3a8] sm:$0xff]
      %v1398 = vld [vmem:[#allocation6 + $0x3b0] sm:$0xff]
      %v1399 = vld [vmem:[#allocation6 + $0x3b8] sm:$0xff]
      %v1400 = vld [vmem:[#allocation6 + $0x3c0] sm:$0xff]
      %v1401 = vld [vmem:[#allocation6 + $0x3c8] sm:$0xff]
      %v1402 = vld [vmem:[#allocation6 + $0x3d0] sm:$0xff]
      %v1403 = vld [vmem:[#allocation6 + $0x3d8] sm:$0xff]
      %v1404 = vld [vmem:[#allocation6 + $0x3e0] sm:$0xff]
      %v1405 = vld [vmem:[#allocation6 + $0x3e8] sm:$0xff]
      %v1406 = vld [vmem:[#allocation6 + $0x3f0] sm:$0xff]
      %v1407 = vld [vmem:[#allocation6 + $0x3f8] sm:$0xff]
      %v1408 = vld [vmem:[#allocation8] sm:$0xff]
      %v1409 = vld [vmem:[#allocation8 + $0x8] sm:$0xff]
      %v1410 = vld [vmem:[#allocation8 + $0x10] sm:$0xff]
      %v1411 = vld [vmem:[#allocation8 + $0x18] sm:$0xff]
      %v1412 = vld [vmem:[#allocation8 + $0x20] sm:$0xff]
      %v1413 = vld [vmem:[#allocation8 + $0x28] sm:$0xff]
      %v1414 = vld [vmem:[#allocation8 + $0x30] sm:$0xff]
      %v1415 = vld [vmem:[#allocation8 + $0x38] sm:$0xff]
      %v1416 = vld [vmem:[#allocation8 + $0x40] sm:$0xff]
      %v1417 = vld [vmem:[#allocation8 + $0x48] sm:$0xff]
      %v1418 = vld [vmem:[#allocation8 + $0x50] sm:$0xff]
      %v1419 = vld [vmem:[#allocation8 + $0x58] sm:$0xff]
      %v1420 = vld [vmem:[#allocation8 + $0x60] sm:$0xff]
      %v1421 = vld [vmem:[#allocation8 + $0x68] sm:$0xff]
      %v1422 = vld [vmem:[#allocation8 + $0x70] sm:$0xff]
      %v1423 = vld [vmem:[#allocation8 + $0x78] sm:$0xff]
      %v1424 = vld [vmem:[#allocation8 + $0x80] sm:$0xff]
      %v1425 = vld [vmem:[#allocation8 + $0x88] sm:$0xff]
      %v1426 = vld [vmem:[#allocation8 + $0x90] sm:$0xff]
      %v1427 = vld [vmem:[#allocation8 + $0x98] sm:$0xff]
      %v1428 = vld [vmem:[#allocation8 + $0xa0] sm:$0xff]
      %v1429 = vld [vmem:[#allocation8 + $0xa8] sm:$0xff]
      %v1430 = vld [vmem:[#allocation8 + $0xb0] sm:$0xff]
      %v1431 = vld [vmem:[#allocation8 + $0xb8] sm:$0xff]
      %v1432 = vld [vmem:[#allocation8 + $0xc0] sm:$0xff]
      %v1433 = vld [vmem:[#allocation8 + $0xc8] sm:$0xff]
      %v1434 = vld [vmem:[#allocation8 + $0xd0] sm:$0xff]
      %v1435 = vld [vmem:[#allocation8 + $0xd8] sm:$0xff]
      %v1436 = vld [vmem:[#allocation8 + $0xe0] sm:$0xff]
      %v1437 = vld [vmem:[#allocation8 + $0xe8] sm:$0xff]
      %v1438 = vld [vmem:[#allocation8 + $0xf0] sm:$0xff]
      %v1439 = vld [vmem:[#allocation8 + $0xf8] sm:$0xff]
      %v1440 = vld [vmem:[#allocation8 + $0x100] sm:$0xff]
      %v1441 = vld [vmem:[#allocation8 + $0x108] sm:$0xff]
      %v1442 = vld [vmem:[#allocation8 + $0x110] sm:$0xff]
      %v1443 = vld [vmem:[#allocation8 + $0x118] sm:$0xff]
      %v1444 = vld [vmem:[#allocation8 + $0x120] sm:$0xff]
      %v1445 = vld [vmem:[#allocation8 + $0x128] sm:$0xff]
      %v1446 = vld [vmem:[#allocation8 + $0x130] sm:$0xff]
      %v1447 = vld [vmem:[#allocation8 + $0x138] sm:$0xff]
      %v1448 = vld [vmem:[#allocation8 + $0x140] sm:$0xff]
      %v1449 = vld [vmem:[#allocation8 + $0x148] sm:$0xff]
      %v1450 = vld [vmem:[#allocation8 + $0x150] sm:$0xff]
      %v1451 = vld [vmem:[#allocation8 + $0x158] sm:$0xff]
      %v1452 = vld [vmem:[#allocation8 + $0x160] sm:$0xff]
      %v1453 = vld [vmem:[#allocation8 + $0x168] sm:$0xff]
      %v1454 = vld [vmem:[#allocation8 + $0x170] sm:$0xff]
      %v1455 = vld [vmem:[#allocation8 + $0x178] sm:$0xff]
      %v1456 = vld [vmem:[#allocation8 + $0x180] sm:$0xff]
      %v1457 = vld [vmem:[#allocation8 + $0x188] sm:$0xff]
      %v1458 = vld [vmem:[#allocation8 + $0x190] sm:$0xff]
      %v1459 = vld [vmem:[#allocation8 + $0x198] sm:$0xff]
      %v1460 = vld [vmem:[#allocation8 + $0x1a0] sm:$0xff]
      %v1461 = vld [vmem:[#allocation8 + $0x1a8] sm:$0xff]
      %v1462 = vld [vmem:[#allocation8 + $0x1b0] sm:$0xff]
      %v1463 = vld [vmem:[#allocation8 + $0x1b8] sm:$0xff]
      %v1464 = vld [vmem:[#allocation8 + $0x1c0] sm:$0xff]
      %v1465 = vld [vmem:[#allocation8 + $0x1c8] sm:$0xff]
      %v1466 = vld [vmem:[#allocation8 + $0x1d0] sm:$0xff]
      %v1467 = vld [vmem:[#allocation8 + $0x1d8] sm:$0xff]
      %v1468 = vld [vmem:[#allocation8 + $0x1e0] sm:$0xff]
      %v1469 = vld [vmem:[#allocation8 + $0x1e8] sm:$0xff]
      %v1470 = vld [vmem:[#allocation8 + $0x1f0] sm:$0xff]
      %v1471 = vld [vmem:[#allocation8 + $0x1f8] sm:$0xff]
      %v1472 = vld [vmem:[#allocation8 + $0x200] sm:$0xff]
      %v1473 = vld [vmem:[#allocation8 + $0x208] sm:$0xff]
      %v1474 = vld [vmem:[#allocation8 + $0x210] sm:$0xff]
      %v1475 = vld [vmem:[#allocation8 + $0x218] sm:$0xff]
      %v1476 = vld [vmem:[#allocation8 + $0x220] sm:$0xff]
      %v1477 = vld [vmem:[#allocation8 + $0x228] sm:$0xff]
      %v1478 = vld [vmem:[#allocation8 + $0x230] sm:$0xff]
      %v1479 = vld [vmem:[#allocation8 + $0x238] sm:$0xff]
      %v1480 = vld [vmem:[#allocation8 + $0x240] sm:$0xff]
      %v1481 = vld [vmem:[#allocation8 + $0x248] sm:$0xff]
      %v1482 = vld [vmem:[#allocation8 + $0x250] sm:$0xff]
      %v1483 = vld [vmem:[#allocation8 + $0x258] sm:$0xff]
      %v1484 = vld [vmem:[#allocation8 + $0x260] sm:$0xff]
      %v1485 = vld [vmem:[#allocation8 + $0x268] sm:$0xff]
      %v1486 = vld [vmem:[#allocation8 + $0x270] sm:$0xff]
      %v1487 = vld [vmem:[#allocation8 + $0x278] sm:$0xff]
      %v1488 = vld [vmem:[#allocation8 + $0x280] sm:$0xff]
      %v1489 = vld [vmem:[#allocation8 + $0x288] sm:$0xff]
      %v1490 = vld [vmem:[#allocation8 + $0x290] sm:$0xff]
      %v1491 = vld [vmem:[#allocation8 + $0x298] sm:$0xff]
      %v1492 = vld [vmem:[#allocation8 + $0x2a0] sm:$0xff]
      %v1493 = vld [vmem:[#allocation8 + $0x2a8] sm:$0xff]
      %v1494 = vld [vmem:[#allocation8 + $0x2b0] sm:$0xff]
      %v1495 = vld [vmem:[#allocation8 + $0x2b8] sm:$0xff]
      %v1496 = vld [vmem:[#allocation8 + $0x2c0] sm:$0xff]
      %v1497 = vld [vmem:[#allocation8 + $0x2c8] sm:$0xff]
      %v1498 = vld [vmem:[#allocation8 + $0x2d0] sm:$0xff]
      %v1499 = vld [vmem:[#allocation8 + $0x2d8] sm:$0xff]
      %v1500 = vld [vmem:[#allocation8 + $0x2e0] sm:$0xff]
      %v1501 = vld [vmem:[#allocation8 + $0x2e8] sm:$0xff]
      %v1502 = vld [vmem:[#allocation8 + $0x2f0] sm:$0xff]
      %v1503 = vld [vmem:[#allocation8 + $0x2f8] sm:$0xff]
      %v1504 = vld [vmem:[#allocation8 + $0x300] sm:$0xff]
      %v1505 = vld [vmem:[#allocation8 + $0x308] sm:$0xff]
      %v1506 = vld [vmem:[#allocation8 + $0x310] sm:$0xff]
      %v1507 = vld [vmem:[#allocation8 + $0x318] sm:$0xff]
      %v1508 = vld [vmem:[#allocation8 + $0x320] sm:$0xff]
      %v1509 = vld [vmem:[#allocation8 + $0x328] sm:$0xff]
      %v1510 = vld [vmem:[#allocation8 + $0x330] sm:$0xff]
      %v1511 = vld [vmem:[#allocation8 + $0x338] sm:$0xff]
      %v1512 = vld [vmem:[#allocation8 + $0x340] sm:$0xff]
      %v1513 = vld [vmem:[#allocation8 + $0x348] sm:$0xff]
      %v1514 = vld [vmem:[#allocation8 + $0x350] sm:$0xff]
      %v1515 = vld [vmem:[#allocation8 + $0x358] sm:$0xff]
      %v1516 = vld [vmem:[#allocation8 + $0x360] sm:$0xff]
      %v1517 = vld [vmem:[#allocation8 + $0x368] sm:$0xff]
      %v1518 = vld [vmem:[#allocation8 + $0x370] sm:$0xff]
      %v1519 = vld [vmem:[#allocation8 + $0x378] sm:$0xff]
      %v1520 = vld [vmem:[#allocation8 + $0x380] sm:$0xff]
      %v1521 = vld [vmem:[#allocation8 + $0x388] sm:$0xff]
      %v1522 = vld [vmem:[#allocation8 + $0x390] sm:$0xff]
      %v1523 = vld [vmem:[#allocation8 + $0x398] sm:$0xff]
      %v1524 = vld [vmem:[#allocation8 + $0x3a0] sm:$0xff]
      %v1525 = vld [vmem:[#allocation8 + $0x3a8] sm:$0xff]
      %v1526 = vld [vmem:[#allocation8 + $0x3b0] sm:$0xff]
      %v1527 = vld [vmem:[#allocation8 + $0x3b8] sm:$0xff]
      %v1528 = vld [vmem:[#allocation8 + $0x3c0] sm:$0xff]
      %v1529 = vld [vmem:[#allocation8 + $0x3c8] sm:$0xff]
      %v1530 = vld [vmem:[#allocation8 + $0x3d0] sm:$0xff]
      %v1531 = vld [vmem:[#allocation8 + $0x3d8] sm:$0xff]
      %v1532 = vld [vmem:[#allocation8 + $0x3e0] sm:$0xff]
      %v1533 = vld [vmem:[#allocation8 + $0x3e8] sm:$0xff]
      %v1534 = vld [vmem:[#allocation8 + $0x3f0] sm:$0xff]
      %v1535 = vld [vmem:[#allocation8 + $0x3f8] sm:$0xff]
      %1536 = vmatpush.msra.mxu0 %v1423
      %1537 = vmatpush.msra.mxu0 %v1422
      %1538 = vmatpush.msra.mxu0 %v1421
      %1539 = vmatpush.msra.mxu0 %v1420
      %1540 = vmatpush.msra.mxu0 %v1419
      %1541 = vmatpush.msra.mxu0 %v1418
      %1542 = vmatpush.msra.mxu0 %v1417
      %1543 = vmatpush.msra.mxu0 %v1416
      %1544 = vmatpush.msra.mxu0 %v1415
      %1545 = vmatpush.msra.mxu0 %v1414
      %1546 = vmatpush.msra.mxu0 %v1413
      %1547 = vmatpush.msra.mxu0 %v1412
      %1548 = vmatpush.msra.mxu0 %v1411
      %1549 = vmatpush.msra.mxu0 %v1410
      %1550 = vmatpush.msra.mxu0 %v1409
      %1551 = vmatpush.msra.mxu0 %v1408
      %1552 = vmatmul.f32.gmra.mxu0 %v1138
      %v1553 = vpop.f32.mrf.mxu0
      %v1554 = vadd.f32 0.0, %v1553
      %1555 = vdwg.mxu0
      %1556 = vmatpush.msra.mxu0 %v1439
      %1557 = vmatpush.msra.mxu0 %v1438
      %1558 = vmatpush.msra.mxu0 %v1437
      %1559 = vmatpush.msra.mxu0 %v1436
      %1560 = vmatpush.msra.mxu0 %v1435
      %1561 = vmatpush.msra.mxu0 %v1434
      %1562 = vmatpush.msra.mxu0 %v1433
      %1563 = vmatpush.msra.mxu0 %v1432
      %1564 = vmatpush.msra.mxu0 %v1431
      %1565 = vmatpush.msra.mxu0 %v1430
      %1566 = vmatpush.msra.mxu0 %v1429
      %1567 = vmatpush.msra.mxu0 %v1428
      %1568 = vmatpush.msra.mxu0 %v1427
      %1569 = vmatpush.msra.mxu0 %v1426
      %1570 = vmatpush.msra.mxu0 %v1425
      %1571 = vmatpush.msra.mxu0 %v1424
      %1572 = vmatmul.f32.gmra.mxu0 %v1158
      %v1573 = vpop.f32.mrf.mxu0
      %v1574 = vadd.f32 %v1554, %v1573
      %1575 = vdwg.mxu0
      %1576 = vmatpush.msra.mxu0 %v1455
      %1577 = vmatpush.msra.mxu0 %v1454
      %1578 = vmatpush.msra.mxu0 %v1453
      %1579 = vmatpush.msra.mxu0 %v1452
      %1580 = vmatpush.msra.mxu0 %v1451
      %1581 = vmatpush.msra.mxu0 %v1450
      %1582 = vmatpush.msra.mxu0 %v1449
      %1583 = vmatpush.msra.mxu0 %v1448
      %1584 = vmatpush.msra.mxu0 %v1447
      %1585 = vmatpush.msra.mxu0 %v1446
      %1586 = vmatpush.msra.mxu0 %v1445
      %1587 = vmatpush.msra.mxu0 %v1444
      %1588 = vmatpush.msra.mxu0 %v1443
      %1589 = vmatpush.msra.mxu0 %v1442
      %1590 = vmatpush.msra.mxu0 %v1441
      %1591 = vmatpush.msra.mxu0 %v1440
      %1592 = vmatmul.f32.gmra.mxu0 %v1178
      %v1593 = vpop.f32.mrf.mxu0
      %v1594 = vadd.f32 %v1574, %v1593
      %1595 = vdwg.mxu0
      %1596 = vmatpush.msra.mxu0 %v1471
      %1597 = vmatpush.msra.mxu0 %v1470
      %1598 = vmatpush.msra.mxu0 %v1469
      %1599 = vmatpush.msra.mxu0 %v1468
      %1600 = vmatpush.msra.mxu0 %v1467
      %1601 = vmatpush.msra.mxu0 %v1466
      %1602 = vmatpush.msra.mxu0 %v1465
      %1603 = vmatpush.msra.mxu0 %v1464
      %1604 = vmatpush.msra.mxu0 %v1463
      %1605 = vmatpush.msra.mxu0 %v1462
      %1606 = vmatpush.msra.mxu0 %v1461
      %1607 = vmatpush.msra.mxu0 %v1460
      %1608 = vmatpush.msra.mxu0 %v1459
      %1609 = vmatpush.msra.mxu0 %v1458
      %1610 = vmatpush.msra.mxu0 %v1457
      %1611 = vmatpush.msra.mxu0 %v1456
      %1612 = vmatmul.f32.gmra.mxu0 %v1198
      %v1613 = vpop.f32.mrf.mxu0
      %v1614 = vadd.f32 %v1594, %v1613
      %1615 = vdwg.mxu0
      %1616 = vmatpush.msra.mxu0 %v1487
      %1617 = vmatpush.msra.mxu0 %v1486
      %1618 = vmatpush.msra.mxu0 %v1485
      %1619 = vmatpush.msra.mxu0 %v1484
      %1620 = vmatpush.msra.mxu0 %v1483
      %1621 = vmatpush.msra.mxu0 %v1482
      %1622 = vmatpush.msra.mxu0 %v1481
      %1623 = vmatpush.msra.mxu0 %v1480
      %1624 = vmatpush.msra.mxu0 %v1479
      %1625 = vmatpush.msra.mxu0 %v1478
      %1626 = vmatpush.msra.mxu0 %v1477
      %1627 = vmatpush.msra.mxu0 %v1476
      %1628 = vmatpush.msra.mxu0 %v1475
      %1629 = vmatpush.msra.mxu0 %v1474
      %1630 = vmatpush.msra.mxu0 %v1473
      %1631 = vmatpush.msra.mxu0 %v1472
      %1632 = vmatmul.f32.gmra.mxu0 %v1218
      %v1633 = vpop.f32.mrf.mxu0
      %v1634 = vadd.f32 %v1614, %v1633
      %1635 = vdwg.mxu0
      %1636 = vmatpush.msra.mxu0 %v1503
      %1637 = vmatpush.msra.mxu0 %v1502
      %1638 = vmatpush.msra.mxu0 %v1501
      %1639 = vmatpush.msra.mxu0 %v1500
      %1640 = vmatpush.msra.mxu0 %v1499
      %1641 = vmatpush.msra.mxu0 %v1498
      %1642 = vmatpush.msra.mxu0 %v1497
      %1643 = vmatpush.msra.mxu0 %v1496
      %1644 = vmatpush.msra.mxu0 %v1495
      %1645 = vmatpush.msra.mxu0 %v1494
      %1646 = vmatpush.msra.mxu0 %v1493
      %1647 = vmatpush.msra.mxu0 %v1492
      %1648 = vmatpush.msra.mxu0 %v1491
      %1649 = vmatpush.msra.mxu0 %v1490
      %1650 = vmatpush.msra.mxu0 %v1489
      %1651 = vmatpush.msra.mxu0 %v1488
      %1652 = vmatmul.f32.gmra.mxu0 %v1238
      %v1653 = vpop.f32.mrf.mxu0
      %v1654 = vadd.f32 %v1634, %v1653
      %1655 = vdwg.mxu0
      %1656 = vmatpush.msra.mxu0 %v1519
      %1657 = vmatpush.msra.mxu0 %v1518
      %1658 = vmatpush.msra.mxu0 %v1517
      %1659 = vmatpush.msra.mxu0 %v1516
      %1660 = vmatpush.msra.mxu0 %v1515
      %1661 = vmatpush.msra.mxu0 %v1514
      %1662 = vmatpush.msra.mxu0 %v1513
      %1663 = vmatpush.msra.mxu0 %v1512
      %1664 = vmatpush.msra.mxu0 %v1511
      %1665 = vmatpush.msra.mxu0 %v1510
      %1666 = vmatpush.msra.mxu0 %v1509
      %1667 = vmatpush.msra.mxu0 %v1508
      %1668 = vmatpush.msra.mxu0 %v1507
      %1669 = vmatpush.msra.mxu0 %v1506
      %1670 = vmatpush.msra.mxu0 %v1505
      %1671 = vmatpush.msra.mxu0 %v1504
      %1672 = vmatmul.f32.gmra.mxu0 %v1258
      %v1673 = vpop.f32.mrf.mxu0
      %v1674 = vadd.f32 %v1654, %v1673
      %1675 = vdwg.mxu0
      %1676 = vmatpush.msra.mxu0 %v1535
      %1677 = vmatpush.msra.mxu0 %v1534
      %1678 = vmatpush.msra.mxu0 %v1533
      %1679 = vmatpush.msra.mxu0 %v1532
      %1680 = vmatpush.msra.mxu0 %v1531
      %1681 = vmatpush.msra.mxu0 %v1530
      %1682 = vmatpush.msra.mxu0 %v1529
      %1683 = vmatpush.msra.mxu0 %v1528
      %1684 = vmatpush.msra.mxu0 %v1527
      %1685 = vmatpush.msra.mxu0 %v1526
      %1686 = vmatpush.msra.mxu0 %v1525
      %1687 = vmatpush.msra.mxu0 %v1524
      %1688 = vmatpush.msra.mxu0 %v1523
      %1689 = vmatpush.msra.mxu0 %v1522
      %1690 = vmatpush.msra.mxu0 %v1521
      %1691 = vmatpush.msra.mxu0 %v1520
      %1692 = vmatmul.f32.gmra.mxu0 %v1278
      %v1693 = vpop.f32.mrf.mxu0
      %v1694 = vadd.f32 %v1674, %v1693
      %1695 = vdwg.mxu0
      %1696 = vmatpush.msra.mxu0 %v1295
      %1697 = vmatpush.msra.mxu0 %v1294
      %1698 = vmatpush.msra.mxu0 %v1293
      %1699 = vmatpush.msra.mxu0 %v1292
      %1700 = vmatpush.msra.mxu0 %v1291
      %1701 = vmatpush.msra.mxu0 %v1290
      %1702 = vmatpush.msra.mxu0 %v1289
      %1703 = vmatpush.msra.mxu0 %v1288
      %1704 = vmatpush.msra.mxu0 %v1287
      %1705 = vmatpush.msra.mxu0 %v1286
      %1706 = vmatpush.msra.mxu0 %v1285
      %1707 = vmatpush.msra.mxu0 %v1284
      %1708 = vmatpush.msra.mxu0 %v1283
      %1709 = vmatpush.msra.mxu0 %v1282
      %1710 = vmatpush.msra.mxu0 %v1281
      %1711 = vmatpush.msra.mxu0 %v1280
      %1712 = vmatmul.f32.gmra.mxu0 %v923
      %v1713 = vpop.f32.mrf.mxu0
      %v1714 = vadd.f32 %v1694, %v1713
      %1715 = vdwg.mxu0
      %1716 = vmatpush.msra.mxu0 %v1311
      %1717 = vmatpush.msra.mxu0 %v1310
      %1718 = vmatpush.msra.mxu0 %v1309
      %1719 = vmatpush.msra.mxu0 %v1308
      %1720 = vmatpush.msra.mxu0 %v1307
      %1721 = vmatpush.msra.mxu0 %v1306
      %1722 = vmatpush.msra.mxu0 %v1305
      %1723 = vmatpush.msra.mxu0 %v1304
      %1724 = vmatpush.msra.mxu0 %v1303
      %1725 = vmatpush.msra.mxu0 %v1302
      %1726 = vmatpush.msra.mxu0 %v1301
      %1727 = vmatpush.msra.mxu0 %v1300
      %1728 = vmatpush.msra.mxu0 %v1299
      %1729 = vmatpush.msra.mxu0 %v1298
      %1730 = vmatpush.msra.mxu0 %v1297
      %1731 = vmatpush.msra.mxu0 %v1296
      %1732 = vmatmul.f32.gmra.mxu0 %v943
      %v1733 = vpop.f32.mrf.mxu0
      %v1734 = vadd.f32 %v1714, %v1733
      %1735 = vdwg.mxu0
      %1736 = vmatpush.msra.mxu0 %v1327
      %1737 = vmatpush.msra.mxu0 %v1326
      %1738 = vmatpush.msra.mxu0 %v1325
      %1739 = vmatpush.msra.mxu0 %v1324
      %1740 = vmatpush.msra.mxu0 %v1323
      %1741 = vmatpush.msra.mxu0 %v1322
      %1742 = vmatpush.msra.mxu0 %v1321
      %1743 = vmatpush.msra.mxu0 %v1320
      %1744 = vmatpush.msra.mxu0 %v1319
      %1745 = vmatpush.msra.mxu0 %v1318
      %1746 = vmatpush.msra.mxu0 %v1317
      %1747 = vmatpush.msra.mxu0 %v1316
      %1748 = vmatpush.msra.mxu0 %v1315
      %1749 = vmatpush.msra.mxu0 %v1314
      %1750 = vmatpush.msra.mxu0 %v1313
      %1751 = vmatpush.msra.mxu0 %v1312
      %1752 = vmatmul.f32.gmra.mxu0 %v963
      %v1753 = vpop.f32.mrf.mxu0
      %v1754 = vadd.f32 %v1734, %v1753
      %1755 = vdwg.mxu0
      %1756 = vmatpush.msra.mxu0 %v1343
      %1757 = vmatpush.msra.mxu0 %v1342
      %1758 = vmatpush.msra.mxu0 %v1341
      %1759 = vmatpush.msra.mxu0 %v1340
      %1760 = vmatpush.msra.mxu0 %v1339
      %1761 = vmatpush.msra.mxu0 %v1338
      %1762 = vmatpush.msra.mxu0 %v1337
      %1763 = vmatpush.msra.mxu0 %v1336
      %1764 = vmatpush.msra.mxu0 %v1335
      %1765 = vmatpush.msra.mxu0 %v1334
      %1766 = vmatpush.msra.mxu0 %v1333
      %1767 = vmatpush.msra.mxu0 %v1332
      %1768 = vmatpush.msra.mxu0 %v1331
      %1769 = vmatpush.msra.mxu0 %v1330
      %1770 = vmatpush.msra.mxu0 %v1329
      %1771 = vmatpush.msra.mxu0 %v1328
      %1772 = vmatmul.f32.gmra.mxu0 %v983
      %v1773 = vpop.f32.mrf.mxu0
      %v1774 = vadd.f32 %v1754, %v1773
      %1775 = vdwg.mxu0
      %1776 = vmatpush.msra.mxu0 %v1359
      %1777 = vmatpush.msra.mxu0 %v1358
      %1778 = vmatpush.msra.mxu0 %v1357
      %1779 = vmatpush.msra.mxu0 %v1356
      %1780 = vmatpush.msra.mxu0 %v1355
      %1781 = vmatpush.msra.mxu0 %v1354
      %1782 = vmatpush.msra.mxu0 %v1353
      %1783 = vmatpush.msra.mxu0 %v1352
      %1784 = vmatpush.msra.mxu0 %v1351
      %1785 = vmatpush.msra.mxu0 %v1350
      %1786 = vmatpush.msra.mxu0 %v1349
      %1787 = vmatpush.msra.mxu0 %v1348
      %1788 = vmatpush.msra.mxu0 %v1347
      %1789 = vmatpush.msra.mxu0 %v1346
      %1790 = vmatpush.msra.mxu0 %v1345
      %1791 = vmatpush.msra.mxu0 %v1344
      %1792 = vmatmul.f32.gmra.mxu0 %v1003
      %v1793 = vpop.f32.mrf.mxu0
      %v1794 = vadd.f32 %v1774, %v1793
      %1795 = vdwg.mxu0
      %1796 = vmatpush.msra.mxu0 %v1375
      %1797 = vmatpush.msra.mxu0 %v1374
      %1798 = vmatpush.msra.mxu0 %v1373
      %1799 = vmatpush.msra.mxu0 %v1372
      %1800 = vmatpush.msra.mxu0 %v1371
      %1801 = vmatpush.msra.mxu0 %v1370
      %1802 = vmatpush.msra.mxu0 %v1369
      %1803 = vmatpush.msra.mxu0 %v1368
      %1804 = vmatpush.msra.mxu0 %v1367
      %1805 = vmatpush.msra.mxu0 %v1366
      %1806 = vmatpush.msra.mxu0 %v1365
      %1807 = vmatpush.msra.mxu0 %v1364
      %1808 = vmatpush.msra.mxu0 %v1363
      %1809 = vmatpush.msra.mxu0 %v1362
      %1810 = vmatpush.msra.mxu0 %v1361
      %1811 = vmatpush.msra.mxu0 %v1360
      %1812 = vmatmul.f32.gmra.mxu0 %v1023
      %v1813 = vpop.f32.mrf.mxu0
      %v1814 = vadd.f32 %v1794, %v1813
      %1815 = vdwg.mxu0
      %1816 = vmatpush.msra.mxu0 %v1391
      %1817 = vmatpush.msra.mxu0 %v1390
      %1818 = vmatpush.msra.mxu0 %v1389
      %1819 = vmatpush.msra.mxu0 %v1388
      %1820 = vmatpush.msra.mxu0 %v1387
      %1821 = vmatpush.msra.mxu0 %v1386
      %1822 = vmatpush.msra.mxu0 %v1385
      %1823 = vmatpush.msra.mxu0 %v1384
      %1824 = vmatpush.msra.mxu0 %v1383
      %1825 = vmatpush.msra.mxu0 %v1382
      %1826 = vmatpush.msra.mxu0 %v1381
      %1827 = vmatpush.msra.mxu0 %v1380
      %1828 = vmatpush.msra.mxu0 %v1379
      %1829 = vmatpush.msra.mxu0 %v1378
      %1830 = vmatpush.msra.mxu0 %v1377
      %1831 = vmatpush.msra.mxu0 %v1376
      %1832 = vmatmul.f32.gmra.mxu0 %v1043
      %v1833 = vpop.f32.mrf.mxu0
      %v1834 = vadd.f32 %v1814, %v1833
      %1835 = vdwg.mxu0
      %1836 = vmatpush.msra.mxu0 %v1407
      %1837 = vmatpush.msra.mxu0 %v1406
      %1838 = vmatpush.msra.mxu0 %v1405
      %1839 = vmatpush.msra.mxu0 %v1404
      %1840 = vmatpush.msra.mxu0 %v1403
      %1841 = vmatpush.msra.mxu0 %v1402
      %1842 = vmatpush.msra.mxu0 %v1401
      %1843 = vmatpush.msra.mxu0 %v1400
      %1844 = vmatpush.msra.mxu0 %v1399
      %1845 = vmatpush.msra.mxu0 %v1398
      %1846 = vmatpush.msra.mxu0 %v1397
      %1847 = vmatpush.msra.mxu0 %v1396
      %1848 = vmatpush.msra.mxu0 %v1395
      %1849 = vmatpush.msra.mxu0 %v1394
      %1850 = vmatpush.msra.mxu0 %v1393
      %1851 = vmatpush.msra.mxu0 %v1392
      %1852 = vmatmul.f32.gmra.mxu0 %v1063
      %v1853 = vpop.f32.mrf.mxu0
      %v1854 = vadd.f32 %v1834, %v1853
      %1855 = vdwg.mxu0
      %v1856 = vld [vmem:[%s10] sm:$0x1]
      %v1858 = vperm.slane %v1856, 0
      %v1860 = vadd.f32 %v1854, %v1858
      %1861 = vst [vmem:[#allocation9] sm:$0x3] %v1860
    $region65: #{tpu_custom_call.1} parent=1 // pred_fallthru
      _
    // Predicated region
    $region66: #{tpu_custom_call.1} parent=1 // pred_check
      _
    $region67: #{tpu_custom_call.1} parent=1 // pred_check_branch
      %1863 = sbr.rel (0) target = $region69
    $region68: #{tpu_custom_call.1} parent=1 // pred_region
      %1865 = vsyncadd [#allocation5], 0
      %s1867 = sshll.u32 [#allocation9], 4
      %s1868 = int_to_ptr.vmem [resolvable:$true] %s1867
      %s1869 = sshll.u32 %s11, 4
      %s1870 = int_to_ptr.hbm [resolvable:$true] %s1869
      %1872 = dma.vmem_to_hbm [thread:$0]  %s1868, 32, %s1870, [#allocation5]
    $region69: #{tpu_custom_call.1} parent=1 // pred_fallthru
      _
    // Predicated region
    $region70: #{tpu_custom_call.1} parent=1 // pred_check
      _
    $region71: #{tpu_custom_call.1} parent=1 // pred_check_branch
      %1874 = sbr.rel (0) target = $region73
    $region72: #{tpu_custom_call.1} parent=1 // pred_region
      %1876 = dma.done [#allocation5], 32
    $region73: #{tpu_custom_call.1} parent=1 // pred_fallthru
      _
    %1877 = vsyncpa [#allocation4], 1
    %1878 = vsyncpa [#allocation7], 1
    %1879 = vsyncpa [#allocation5], 1

</llo_original>
